<compile_context>
chip_gen: v7x
topology: tpu7x:2x2x1
jax: 0.10.0
libtpu: 0.0.40
codegen_flags: <defaults>
</compile_context>

<pallas_src>
import numpy as np
import jax
import jax.numpy as jnp
from jax.scipy.special import logsumexp
from jax.experimental import pallas as pl
from jax.experimental.pallas import tpu as pltpu

# ---------------- config (small synthetic shapes) ----------------
B = 2            # batch
L = 8            # sequence length (text and image share L so the KL broadcast
                 # quirk matches the reference exactly)
H = 32           # config1.hidden_size
NH = 8           # heads in image_text_cross
DK = H           # d_k = hidden_size
DV = H           # d_v = hidden_size
C = 5            # text_num_labels
CPAD = 128       # class dim padded to one full lane tile (lane-dense stores)
ALPHA, BETA, GAMMA = 0.5, 0.3, 0.1   # beta is unused by the reference forward
LN_EPS = 1e-5
TEMPERATURE = float(np.power(DK, 0.5))
NEG_INF = -1e30


# ==================== fused head kernel ====================

def dtca_head_kernel(text_ref, img_ref, labels_ref,
                     wx_ref, wkv_ref, wfc_ref, ln_g_ref, ln_b_ref,
                     c0w_ref, c0b_ref, c1b_ref,
                     cross_ref, logits_ref, stats_ref):
    """One grid step = one batch element. Computes:
       - 8-head cross attention (q=text, k=v=image) + out-proj + residual + LN
       - classifier0 -> padded cross_logits
       - classifier1 -> padded text_token_logits (weight fused into Q matmul)
       - per-token cross-entropy terms (ignore_index=-100)
       - per-token KL rows (double-softmax quirk of the reference)
    """
    x = text_ref[0]      # [L, H]  queries / residual / classifier1 input
    y = img_ref[0]       # [L, H]  keys & values / KL image branch

    # ---- fused x-side matmul: Q projection || classifier1 weight ----
    xp = jnp.dot(x, wx_ref[...], preferred_element_type=jnp.float32)    # [L, NH*DK + CPAD]
    q = xp[:, :NH * DK]                                                  # [L, NH*DK]
    tl = xp[:, NH * DK:] + c1b_ref[...]                                  # [L, CPAD]

    # ---- fused y-side matmul: K || V ----
    kv = jnp.dot(y, wkv_ref[...], preferred_element_type=jnp.float32)   # [L, 2*NH*DK]
    k = kv[:, :NH * DK]
    v = kv[:, NH * DK:]
    wfc = wfc_ref[...]                                                   # [NH*DV, H]

    # ---- per-head attention, fully unrolled inside one kernel body ----
    proj = jnp.zeros((L, H), jnp.float32)
    for h in range(NH):
        qh = q[:, h * DK:(h + 1) * DK]
        kh = k[:, h * DK:(h + 1) * DK]
        vh = v[:, h * DV:(h + 1) * DV]
        s = jax.lax.dot_general(qh, kh, (((1,), (1,)), ((), ())),
                                preferred_element_type=jnp.float32)      # [L, L]
        s = s / TEMPERATURE
        s = s - jnp.max(s, axis=-1, keepdims=True)
        e = jnp.exp(s)
        p = e * pl.reciprocal(jnp.sum(e, axis=-1, keepdims=True), approx=True)
        oh = jnp.dot(p, vh, preferred_element_type=jnp.float32)          # [L, DV]
        # rows h*DV:(h+1)*DV of fc  ==  fc(concat_h(o_h)) contribution
        proj = proj + jnp.dot(oh, wfc[h * DV:(h + 1) * DV, :],
                              preferred_element_type=jnp.float32)

    # ---- residual + LayerNorm (attn dropout / proj dropout identity: eval) ----
    z = proj + x
    mean = jnp.mean(z, axis=-1, keepdims=True)
    var = jnp.mean((z - mean) ** 2, axis=-1, keepdims=True)
    zn = (z - mean) * jax.lax.rsqrt(var + LN_EPS)
    ln_out = zn * ln_g_ref[...] + ln_b_ref[...]                          # [L, H]

    # ---- classifier0 fused epilogue -> lane-dense padded cross logits ----
    cross_ref[0] = (jnp.dot(ln_out, c0w_ref[...],
                            preferred_element_type=jnp.float32) + c0b_ref[...])

    # ---- classifier1 logits (dropout identity at eval) ----
    logits_ref[0] = tl                                                   # [L, CPAD]

    # ---- per-token cross entropy (ignore_index = -100), pad lanes masked ----
    lane = jax.lax.broadcasted_iota(jnp.int32, (L, CPAD), 1)
    labels = labels_ref[0]                                               # [L, CPAD] int32
    tl_m = jnp.where(lane < C, tl, NEG_INF)
    m = jnp.max(tl_m, axis=-1, keepdims=True)
    lse = jnp.log(jnp.sum(jnp.exp(tl_m - m), axis=-1, keepdims=True)) + m
    picked = jnp.sum(jnp.where(lane == labels, tl, 0.0), axis=-1, keepdims=True)
    valid = (labels[:, :1] != -100).astype(jnp.float32)                  # [L, 1]
    ce = (lse - picked) * valid                                          # [L, 1]

    # ---- KL rows (softmax applied twice, matching the reference exactly) ----
    def _softmax(a):
        mm = jnp.max(a, axis=-1, keepdims=True)
        ee = jnp.exp(a - mm)
        return ee / jnp.sum(ee, axis=-1, keepdims=True)

    def _log_softmax(a):
        mm = jnp.max(a, axis=-1, keepdims=True)
        ss = a - mm
        return ss - jnp.log(jnp.sum(jnp.exp(ss), axis=-1, keepdims=True))

    tp = _softmax(x)             # softmax(text_hidden)  (first softmax)
    ip = _softmax(y)             # softmax(image_hidden)
    p_log = _log_softmax(tp)     # log_softmax applied AGAIN inside kl_divergence_loss
    qp = _softmax(ip)            # softmax applied AGAIN
    kl_row = jnp.sum(qp * (jnp.log(qp) - p_log), axis=-1, keepdims=True)  # [L, 1]

    # ---- pack per-row reductions into one lane-dense stats tile ----
    stats_ref[0] = (jnp.where(lane == 0, ce, 0.0)
                    + jnp.where(lane == 1, valid, 0.0)
                    + jnp.where(lane == 2, kl_row, 0.0))


def dtca_head_pallas(text_h, img_h, labels_bcast, params):
    act_spec = pl.BlockSpec((1, L, H), lambda b: (b, 0, 0))
    lab_spec = pl.BlockSpec((1, L, CPAD), lambda b: (b, 0, 0))
    out_spec = pl.BlockSpec((1, L, CPAD), lambda b: (b, 0, 0))

    def full(shape):
        return pl.BlockSpec(shape, lambda b, _s=shape: (0,) * len(_s))

    return pl.pallas_call(
        dtca_head_kernel,
        out_shape=(
            jax.ShapeDtypeStruct((B, L, CPAD), jnp.float32),   # cross logits (padded)
            jax.ShapeDtypeStruct((B, L, CPAD), jnp.float32),   # text logits (padded)
            jax.ShapeDtypeStruct((B, L, CPAD), jnp.float32),   # [ce, valid, kl] stats
        ),
        grid=(B,),
        in_specs=[
            act_spec,                             # text hidden
            act_spec,                             # image hidden
            lab_spec,                             # labels, lane-broadcast int32
            full((H, NH * DK + CPAD)),            # Wq (all heads) || classifier1 W
            full((H, 2 * NH * DK)),               # Wk | Wv (fused)
            full((NH * DV, H)),                   # fc
            full((1, H)), full((1, H)),           # LayerNorm gamma / beta
            full((H, CPAD)), full((1, CPAD)),     # classifier0 W / b (class-padded)
            full((1, CPAD)),                      # classifier1 b (class-padded)
        ],
        out_specs=[out_spec, out_spec, out_spec],
        compiler_params=pltpu.CompilerParams(
            dimension_semantics=("parallel",)),   # v7x megacore splits the batch
    )(text_h, img_h, labels_bcast,
      params["wx"], params["wkv"], params["wfc"],
      params["ln_g"], params["ln_b"],
      params["c0_w"], params["c0_b"], params["c1_b"])


# ==================== CRF log-likelihood (plain JAX, unrolled) ====================

def crf_log_likelihood(emissions, tags, mask, start_t, end_t, trans):
    """torchcrf.CRF(num_tags, batch_first=True)(emissions, tags, mask),
    default reduction='sum'. emissions [B,L,C] f32, tags [B,L] int32, mask [B,L] bool."""
    em = jnp.transpose(emissions, (1, 0, 2)).astype(jnp.float32)   # [L, B, C]
    tg = jnp.transpose(tags, (1, 0))                                # [L, B]
    mk = jnp.transpose(mask, (1, 0)).astype(jnp.float32)            # [L, B]
    bt = em.shape[1]
    arange_b = jnp.arange(bt)

    # numerator: score of the provided tag sequence
    score0 = start_t[tg[0]] + em[0, arange_b, tg[0]]

    def num_step(score, inp):
        em_i, tg_prev, tg_i, mk_i = inp
        score = score + (trans[tg_prev, tg_i] + em_i[arange_b, tg_i]) * mk_i
        return score, None

    score, _ = jax.lax.scan(num_step, score0,
                            (em[1:], tg[:-1], tg[1:], mk[1:]), unroll=True)
    seq_ends = jnp.sum(mk, axis=0).astype(jnp.int32) - 1
    last_tags = tg[seq_ends, arange_b]
    numerator = score + end_t[last_tags]

    # denominator: partition function via forward algorithm
    alpha0 = start_t[None, :] + em[0]

    def den_step(alpha, inp):
        em_i, mk_i = inp
        nxt = logsumexp(alpha[:, :, None] + trans[None, :, :] + em_i[:, None, :], axis=1)
        alpha = jnp.where(mk_i[:, None] > 0, nxt, alpha)
        return alpha, None

    alpha, _ = jax.lax.scan(den_step, alpha0, (em[1:], mk[1:]), unroll=True)
    denominator = logsumexp(alpha + end_t[None, :], axis=1)
    return jnp.sum(numerator - denominator)


# ==================== DTCA head forward (jitted, no host sync) ====================

@jax.jit
def dtca_forward(params, text_last_hidden, image_last_hidden,
                 labels, cross_labels, itm_l):
    labels_bcast = jnp.broadcast_to(
        labels[:, :, None], (B, L, CPAD)).astype(jnp.int32)

    cross_pad, logits_pad, stats = dtca_head_pallas(
        text_last_hidden, image_last_hidden, labels_bcast, params)

    cross_logits = cross_pad[:, :, :C]          # [B, L, C]
    text_token_logits = logits_pad[:, :, :C]    # [B, L, C]

    # --- mask (labels != -100, first position forced on) ---
    mask = (labels != -100)
    mask = mask.at[:, 0].set(True)

    # --- CRF loss ---
    llh = crf_log_likelihood(cross_logits, cross_labels, mask,
                             params["crf_start"], params["crf_end"],
                             params["crf_trans"])
    cross_crf_loss = -llh / 10.0

    # --- KL divergence term (reference broadcast quirk: kl[B] * mask[B,L,1]) ---
    kl_per_batch = stats[:, :, 2].sum(axis=1)                       # [B]
    maskf = mask.astype(jnp.float32)
    weighted = kl_per_batch[None, None, :] * maskf[:, :, None]      # [B, L, B]
    kl_div_loss = weighted.sum() / maskf.sum()

    # --- token-level cross entropy (NaN if every label is -100, like torch) ---
    ce_sum = stats[:, :, 0].sum()
    valid_sum = stats[:, :, 1].sum()
    text_loss = ce_sum / valid_sum

    # --- itm_l gate without host sync ---
    delta_nonzero = jnp.count_nonzero(itm_l)
    loss = jnp.where(delta_nonzero == 0,
                     text_loss,
                     cross_crf_loss + GAMMA * kl_div_loss + ALPHA * text_loss)

    return {"loss": loss, "logits": text_token_logits, "cross_logits": cross_logits}


# ==================== deterministic parameter init ====================

def init_params(key):
    ks = jax.random.split(key, 9)
    std_qk = float(np.sqrt(2.0 / (H + DK)))
    std_v = float(np.sqrt(2.0 / (H + DV)))
    wq = jax.random.normal(ks[0], (H, NH * DK), jnp.float32) * std_qk
    wk = jax.random.normal(ks[1], (H, NH * DK), jnp.float32) * std_qk
    wv = jax.random.normal(ks[2], (H, NH * DV), jnp.float32) * std_v
    wfc = jax.random.normal(ks[3], (NH * DV, H), jnp.float32) * float(
        np.sqrt(2.0 / (NH * DV + H)))
    c0_w = jax.random.normal(ks[4], (H, C), jnp.float32) * 0.05
    c1_w = jax.random.normal(ks[5], (H, C), jnp.float32) * 0.05

    def pad_w(w):   # pad class dim to a full 128-lane tile (zeros)
        return jnp.pad(w, ((0, 0), (0, CPAD - C)))

    return {
        # column block h*DK:(h+1)*DK of wq/wk/wv is head h (matches the
        # PyTorch .view(sz_b, len, n_head, d_k) split).  classifier1's weight
        # is concatenated onto Wq so the kernel does one x-side matmul.
        "wx": jnp.concatenate([wq, pad_w(c1_w)], axis=1),   # [H, NH*DK + CPAD]
        "wkv": jnp.concatenate([wk, wv], axis=1),            # [H, 2*NH*DK]
        "wfc": wfc,                                           # [NH*DV, H]
        "ln_g": jnp.ones((1, H), jnp.float32),
        "ln_b": jnp.zeros((1, H), jnp.float32),
        "c0_w": pad_w(c0_w),
        "c0_b": jnp.zeros((1, CPAD), jnp.float32),
        "c1_b": jnp.zeros((1, CPAD), jnp.float32),
        "crf_start": jax.random.uniform(ks[6], (C,), jnp.float32, -0.1, 0.1),
        "crf_end": jax.random.uniform(ks[7], (C,), jnp.float32, -0.1, 0.1),
        "crf_trans": jax.random.uniform(ks[8], (C, C), jnp.float32, -0.1, 0.1),
    }


if __name__ == "__main__":
    key = jax.random.PRNGKey(0)
    kp, k1, k2, k3, k4 = jax.random.split(key, 5)
    params = init_params(kp)

    # encoder outputs (stand-ins for roberta/vit last_hidden_state)
    text_last_hidden = jax.random.normal(k1, (B, L, H), jnp.float32)
    image_last_hidden = jax.random.normal(k2, (B, L, H), jnp.float32)

    labels = jax.random.randint(k3, (B, L), 0, C).astype(jnp.int32)
    labels = labels.at[:, -2:].set(-100)            # some ignored positions
    cross_labels = jax.random.randint(k4, (B, L), 0, C).astype(jnp.int32)
    itm_l = jnp.array([1, 0], jnp.int32)            # nonzero -> full-loss branch

    out = dtca_forward(params, text_last_hidden, image_last_hidden,
                       labels, cross_labels, itm_l)
    out = jax.tree_util.tree_map(jax.block_until_ready, out)

    assert out["logits"].shape == (B, L, C)
    assert out["cross_logits"].shape == (B, L, C)
    assert bool(jnp.isfinite(out["loss"]))
    print("KERNEL_OK")
</pallas_src>

<mosaic_0001>
module attributes {stable_mosaic.version = 11 : i64} {
  func.func @dtca_head_kernel(%arg0: i32, %arg1: memref<1x8x32xf32, #tpu.memory_space<vmem>>, %arg2: memref<1x8x32xf32, #tpu.memory_space<vmem>>, %arg3: memref<1x8x128xi32, #tpu.memory_space<vmem>>, %arg4: memref<32x384xf32, #tpu.memory_space<vmem>>, %arg5: memref<32x512xf32, #tpu.memory_space<vmem>>, %arg6: memref<256x32xf32, #tpu.memory_space<vmem>>, %arg7: memref<1x32xf32, #tpu.memory_space<vmem>>, %arg8: memref<1x32xf32, #tpu.memory_space<vmem>>, %arg9: memref<32x128xf32, #tpu.memory_space<vmem>>, %arg10: memref<1x128xf32, #tpu.memory_space<vmem>>, %arg11: memref<1x128xf32, #tpu.memory_space<vmem>>, %arg12: memref<1x8x128xf32, #tpu.memory_space<vmem>>, %arg13: memref<1x8x128xf32, #tpu.memory_space<vmem>>, %arg14: memref<1x8x128xf32, #tpu.memory_space<vmem>>) attributes {dimension_semantics = [#tpu.dimension_semantics<parallel>], iteration_bounds = array<i64: 2>, scalar_prefetch = 0 : i64, scratch_operands = 0 : i64, tpu.core_type = #tpu.core_type<tc>, window_params = [{transform_indices = @transform_0, window_bounds = array<i64: 1, 8, 32>}, {transform_indices = @transform_1, window_bounds = array<i64: 1, 8, 32>}, {transform_indices = @transform_2, window_bounds = array<i64: 1, 8, 128>}, {pipeline_mode = #tpu.pipeline_mode<synchronous>, transform_indices = @transform_3, window_bounds = array<i64: 32, 384>}, {pipeline_mode = #tpu.pipeline_mode<synchronous>, transform_indices = @transform_4, window_bounds = array<i64: 32, 512>}, {pipeline_mode = #tpu.pipeline_mode<synchronous>, transform_indices = @transform_5, window_bounds = array<i64: 256, 32>}, {pipeline_mode = #tpu.pipeline_mode<synchronous>, transform_indices = @transform_6, window_bounds = array<i64: 1, 32>}, {pipeline_mode = #tpu.pipeline_mode<synchronous>, transform_indices = @transform_7, window_bounds = array<i64: 1, 32>}, {pipeline_mode = #tpu.pipeline_mode<synchronous>, transform_indices = @transform_8, window_bounds = array<i64: 32, 128>}, {pipeline_mode = #tpu.pipeline_mode<synchronous>, transform_indices = @transform_9, window_bounds = array<i64: 1, 128>}, {pipeline_mode = #tpu.pipeline_mode<synchronous>, transform_indices = @transform_10, window_bounds = array<i64: 1, 128>}, {transform_indices = @transform_11, window_bounds = array<i64: 1, 8, 128>}, {transform_indices = @transform_12, window_bounds = array<i64: 1, 8, 128>}, {transform_indices = @transform_13, window_bounds = array<i64: 1, 8, 128>}]} {
    %c0 = arith.constant 0 : index
    %c0_0 = arith.constant 0 : index
    %c0_1 = arith.constant 0 : index
    %0 = vector.load %arg1[%c0, %c0_0, %c0_1] : memref<1x8x32xf32, #tpu.memory_space<vmem>>, vector<1x8x32xf32>
    %1 = vector.shape_cast %0 : vector<1x8x32xf32> to vector<8x32xf32>
    %c0_2 = arith.constant 0 : index
    %c0_3 = arith.constant 0 : index
    %c0_4 = arith.constant 0 : index
    %2 = vector.load %arg2[%c0_2, %c0_3, %c0_4] : memref<1x8x32xf32, #tpu.memory_space<vmem>>, vector<1x8x32xf32>
    %3 = vector.shape_cast %2 : vector<1x8x32xf32> to vector<8x32xf32>
    %c0_5 = arith.constant 0 : index
    %c0_6 = arith.constant 0 : index
    %4 = vector.load %arg4[%c0_5, %c0_6] : memref<32x384xf32, #tpu.memory_space<vmem>>, vector<32x384xf32>
    %cst = arith.constant dense<0.000000e+00> : vector<8x384xf32>
    %5 = tpu.matmul %1, %4, %cst {dimension_numbers = #tpu.dot_dimension_numbers<[1], [0], [0], [1], [0, 0, 1, 1], [], []>} : vector<8x32xf32>, vector<32x384xf32>, vector<8x384xf32> -> vector<8x384xf32>
    %6 = vector.extract_strided_slice %5 {offsets = [0, 0], sizes = [8, 256], strides = [1, 1]} : vector<8x384xf32> to vector<8x256xf32>
    %7 = vector.extract_strided_slice %5 {offsets = [0, 256], sizes = [8, 128], strides = [1, 1]} : vector<8x384xf32> to vector<8x128xf32>
    %c0_7 = arith.constant 0 : index
    %c0_8 = arith.constant 0 : index
    %8 = vector.load %arg11[%c0_7, %c0_8] : memref<1x128xf32, #tpu.memory_space<vmem>>, vector<1x128xf32>
    %9 = vector.broadcast %8 : vector<1x128xf32> to vector<8x128xf32>
    %10 = arith.addf %7, %9 : vector<8x128xf32>
    %c0_9 = arith.constant 0 : index
    %c0_10 = arith.constant 0 : index
    %11 = vector.load %arg5[%c0_9, %c0_10] : memref<32x512xf32, #tpu.memory_space<vmem>>, vector<32x512xf32>
    %cst_11 = arith.constant dense<0.000000e+00> : vector<8x512xf32>
    %12 = tpu.matmul %3, %11, %cst_11 {dimension_numbers = #tpu.dot_dimension_numbers<[1], [0], [0], [1], [0, 0, 1, 1], [], []>} : vector<8x32xf32>, vector<32x512xf32>, vector<8x512xf32> -> vector<8x512xf32>
    %13 = vector.extract_strided_slice %12 {offsets = [0, 0], sizes = [8, 256], strides = [1, 1]} : vector<8x512xf32> to vector<8x256xf32>
    %14 = vector.extract_strided_slice %12 {offsets = [0, 256], sizes = [8, 256], strides = [1, 1]} : vector<8x512xf32> to vector<8x256xf32>
    %c0_12 = arith.constant 0 : index
    %c0_13 = arith.constant 0 : index
    %15 = vector.load %arg6[%c0_12, %c0_13] : memref<256x32xf32, #tpu.memory_space<vmem>>, vector<256x32xf32>
    %cst_14 = arith.constant 0.000000e+00 : f32
    %16 = vector.broadcast %cst_14 : f32 to vector<8x32xf32>
    %17 = vector.extract_strided_slice %6 {offsets = [0, 0], sizes = [8, 32], strides = [1, 1]} : vector<8x256xf32> to vector<8x32xf32>
    %18 = vector.extract_strided_slice %13 {offsets = [0, 0], sizes = [8, 32], strides = [1, 1]} : vector<8x256xf32> to vector<8x32xf32>
    %19 = vector.extract_strided_slice %14 {offsets = [0, 0], sizes = [8, 32], strides = [1, 1]} : vector<8x256xf32> to vector<8x32xf32>
    %cst_15 = arith.constant dense<0.000000e+00> : vector<8x8xf32>
    %20 = tpu.matmul %17, %18, %cst_15 {dimension_numbers = #tpu.dot_dimension_numbers<[1], [1], [0], [0], [0, 0, 1, 0], [], []>} : vector<8x32xf32>, vector<8x32xf32>, vector<8x8xf32> -> vector<8x8xf32>
    %cst_16 = arith.constant 5.65685415 : f32
    %21 = vector.broadcast %cst_16 : f32 to vector<8x8xf32>
    %22 = arith.divf %20, %21 : vector<8x8xf32>
    %cst_17 = arith.constant dense<0xFF800000> : vector<8xf32>
    %23 = vector.multi_reduction <maximumf>, %22, %cst_17 [1] : vector<8x8xf32> to vector<8xf32>
    %24 = vector.shape_cast %23 : vector<8xf32> to vector<8x1xf32>
    %25 = vector.broadcast %24 : vector<8x1xf32> to vector<8x8xf32>
    %26 = arith.subf %22, %25 : vector<8x8xf32>
    %27 = math.exp %26 : vector<8x8xf32>
    %cst_18 = arith.constant dense<0.000000e+00> : vector<8xf32>
    %28 = vector.multi_reduction <add>, %27, %cst_18 [1] : vector<8x8xf32> to vector<8xf32>
    %29 = vector.shape_cast %28 : vector<8xf32> to vector<8x1xf32>
    %30 = tpu.reciprocal %29 {approx = true} : vector<8x1xf32> -> vector<8x1xf32>
    %31 = vector.broadcast %30 : vector<8x1xf32> to vector<8x8xf32>
    %32 = arith.mulf %27, %31 : vector<8x8xf32>
    %cst_19 = arith.constant dense<0.000000e+00> : vector<8x32xf32>
    %33 = tpu.matmul %32, %19, %cst_19 {dimension_numbers = #tpu.dot_dimension_numbers<[1], [0], [0], [1], [0, 0, 1, 1], [], []>} : vector<8x8xf32>, vector<8x32xf32>, vector<8x32xf32> -> vector<8x32xf32>
    %34 = vector.extract_strided_slice %15 {offsets = [0, 0], sizes = [32, 32], strides = [1, 1]} : vector<256x32xf32> to vector<32x32xf32>
    %cst_20 = arith.constant dense<0.000000e+00> : vector<8x32xf32>
    %35 = tpu.matmul %33, %34, %cst_20 {dimension_numbers = #tpu.dot_dimension_numbers<[1], [0], [0], [1], [0, 0, 1, 1], [], []>} : vector<8x32xf32>, vector<32x32xf32>, vector<8x32xf32> -> vector<8x32xf32>
    %36 = arith.addf %16, %35 : vector<8x32xf32>
    %37 = vector.extract_strided_slice %6 {offsets = [0, 32], sizes = [8, 32], strides = [1, 1]} : vector<8x256xf32> to vector<8x32xf32>
    %38 = vector.extract_strided_slice %13 {offsets = [0, 32], sizes = [8, 32], strides = [1, 1]} : vector<8x256xf32> to vector<8x32xf32>
    %39 = vector.extract_strided_slice %14 {offsets = [0, 32], sizes = [8, 32], strides = [1, 1]} : vector<8x256xf32> to vector<8x32xf32>
    %cst_21 = arith.constant dense<0.000000e+00> : vector<8x8xf32>
    %40 = tpu.matmul %37, %38, %cst_21 {dimension_numbers = #tpu.dot_dimension_numbers<[1], [1], [0], [0], [0, 0, 1, 0], [], []>} : vector<8x32xf32>, vector<8x32xf32>, vector<8x8xf32> -> vector<8x8xf32>
    %cst_22 = arith.constant 5.65685415 : f32
    %41 = vector.broadcast %cst_22 : f32 to vector<8x8xf32>
    %42 = arith.divf %40, %41 : vector<8x8xf32>
    %cst_23 = arith.constant dense<0xFF800000> : vector<8xf32>
    %43 = vector.multi_reduction <maximumf>, %42, %cst_23 [1] : vector<8x8xf32> to vector<8xf32>
    %44 = vector.shape_cast %43 : vector<8xf32> to vector<8x1xf32>
    %45 = vector.broadcast %44 : vector<8x1xf32> to vector<8x8xf32>
    %46 = arith.subf %42, %45 : vector<8x8xf32>
    %47 = math.exp %46 : vector<8x8xf32>
    %cst_24 = arith.constant dense<0.000000e+00> : vector<8xf32>
    %48 = vector.multi_reduction <add>, %47, %cst_24 [1] : vector<8x8xf32> to vector<8xf32>
    %49 = vector.shape_cast %48 : vector<8xf32> to vector<8x1xf32>
    %50 = tpu.reciprocal %49 {approx = true} : vector<8x1xf32> -> vector<8x1xf32>
    %51 = vector.broadcast %50 : vector<8x1xf32> to vector<8x8xf32>
    %52 = arith.mulf %47, %51 : vector<8x8xf32>
    %cst_25 = arith.constant dense<0.000000e+00> : vector<8x32xf32>
    %53 = tpu.matmul %52, %39, %cst_25 {dimension_numbers = #tpu.dot_dimension_numbers<[1], [0], [0], [1], [0, 0, 1, 1], [], []>} : vector<8x8xf32>, vector<8x32xf32>, vector<8x32xf32> -> vector<8x32xf32>
    %54 = vector.extract_strided_slice %15 {offsets = [32, 0], sizes = [32, 32], strides = [1, 1]} : vector<256x32xf32> to vector<32x32xf32>
    %cst_26 = arith.constant dense<0.000000e+00> : vector<8x32xf32>
    %55 = tpu.matmul %53, %54, %cst_26 {dimension_numbers = #tpu.dot_dimension_numbers<[1], [0], [0], [1], [0, 0, 1, 1], [], []>} : vector<8x32xf32>, vector<32x32xf32>, vector<8x32xf32> -> vector<8x32xf32>
    %56 = arith.addf %36, %55 : vector<8x32xf32>
    %57 = vector.extract_strided_slice %6 {offsets = [0, 64], sizes = [8, 32], strides = [1, 1]} : vector<8x256xf32> to vector<8x32xf32>
    %58 = vector.extract_strided_slice %13 {offsets = [0, 64], sizes = [8, 32], strides = [1, 1]} : vector<8x256xf32> to vector<8x32xf32>
    %59 = vector.extract_strided_slice %14 {offsets = [0, 64], sizes = [8, 32], strides = [1, 1]} : vector<8x256xf32> to vector<8x32xf32>
    %cst_27 = arith.constant dense<0.000000e+00> : vector<8x8xf32>
    %60 = tpu.matmul %57, %58, %cst_27 {dimension_numbers = #tpu.dot_dimension_numbers<[1], [1], [0], [0], [0, 0, 1, 0], [], []>} : vector<8x32xf32>, vector<8x32xf32>, vector<8x8xf32> -> vector<8x8xf32>
    %cst_28 = arith.constant 5.65685415 : f32
    %61 = vector.broadcast %cst_28 : f32 to vector<8x8xf32>
    %62 = arith.divf %60, %61 : vector<8x8xf32>
    %cst_29 = arith.constant dense<0xFF800000> : vector<8xf32>
    %63 = vector.multi_reduction <maximumf>, %62, %cst_29 [1] : vector<8x8xf32> to vector<8xf32>
    %64 = vector.shape_cast %63 : vector<8xf32> to vector<8x1xf32>
    %65 = vector.broadcast %64 : vector<8x1xf32> to vector<8x8xf32>
    %66 = arith.subf %62, %65 : vector<8x8xf32>
    %67 = math.exp %66 : vector<8x8xf32>
    %cst_30 = arith.constant dense<0.000000e+00> : vector<8xf32>
    %68 = vector.multi_reduction <add>, %67, %cst_30 [1] : vector<8x8xf32> to vector<8xf32>
    %69 = vector.shape_cast %68 : vector<8xf32> to vector<8x1xf32>
    %70 = tpu.reciprocal %69 {approx = true} : vector<8x1xf32> -> vector<8x1xf32>
    %71 = vector.broadcast %70 : vector<8x1xf32> to vector<8x8xf32>
    %72 = arith.mulf %67, %71 : vector<8x8xf32>
    %cst_31 = arith.constant dense<0.000000e+00> : vector<8x32xf32>
    %73 = tpu.matmul %72, %59, %cst_31 {dimension_numbers = #tpu.dot_dimension_numbers<[1], [0], [0], [1], [0, 0, 1, 1], [], []>} : vector<8x8xf32>, vector<8x32xf32>, vector<8x32xf32> -> vector<8x32xf32>
    %74 = vector.extract_strided_slice %15 {offsets = [64, 0], sizes = [32, 32], strides = [1, 1]} : vector<256x32xf32> to vector<32x32xf32>
    %cst_32 = arith.constant dense<0.000000e+00> : vector<8x32xf32>
    %75 = tpu.matmul %73, %74, %cst_32 {dimension_numbers = #tpu.dot_dimension_numbers<[1], [0], [0], [1], [0, 0, 1, 1], [], []>} : vector<8x32xf32>, vector<32x32xf32>, vector<8x32xf32> -> vector<8x32xf32>
    %76 = arith.addf %56, %75 : vector<8x32xf32>
    %77 = vector.extract_strided_slice %6 {offsets = [0, 96], sizes = [8, 32], strides = [1, 1]} : vector<8x256xf32> to vector<8x32xf32>
    %78 = vector.extract_strided_slice %13 {offsets = [0, 96], sizes = [8, 32], strides = [1, 1]} : vector<8x256xf32> to vector<8x32xf32>
    %79 = vector.extract_strided_slice %14 {offsets = [0, 96], sizes = [8, 32], strides = [1, 1]} : vector<8x256xf32> to vector<8x32xf32>
    %cst_33 = arith.constant dense<0.000000e+00> : vector<8x8xf32>
    %80 = tpu.matmul %77, %78, %cst_33 {dimension_numbers = #tpu.dot_dimension_numbers<[1], [1], [0], [0], [0, 0, 1, 0], [], []>} : vector<8x32xf32>, vector<8x32xf32>, vector<8x8xf32> -> vector<8x8xf32>
    %cst_34 = arith.constant 5.65685415 : f32
    %81 = vector.broadcast %cst_34 : f32 to vector<8x8xf32>
    %82 = arith.divf %80, %81 : vector<8x8xf32>
    %cst_35 = arith.constant dense<0xFF800000> : vector<8xf32>
    %83 = vector.multi_reduction <maximumf>, %82, %cst_35 [1] : vector<8x8xf32> to vector<8xf32>
    %84 = vector.shape_cast %83 : vector<8xf32> to vector<8x1xf32>
    %85 = vector.broadcast %84 : vector<8x1xf32> to vector<8x8xf32>
    %86 = arith.subf %82, %85 : vector<8x8xf32>
    %87 = math.exp %86 : vector<8x8xf32>
    %cst_36 = arith.constant dense<0.000000e+00> : vector<8xf32>
    %88 = vector.multi_reduction <add>, %87, %cst_36 [1] : vector<8x8xf32> to vector<8xf32>
    %89 = vector.shape_cast %88 : vector<8xf32> to vector<8x1xf32>
    %90 = tpu.reciprocal %89 {approx = true} : vector<8x1xf32> -> vector<8x1xf32>
    %91 = vector.broadcast %90 : vector<8x1xf32> to vector<8x8xf32>
    %92 = arith.mulf %87, %91 : vector<8x8xf32>
    %cst_37 = arith.constant dense<0.000000e+00> : vector<8x32xf32>
    %93 = tpu.matmul %92, %79, %cst_37 {dimension_numbers = #tpu.dot_dimension_numbers<[1], [0], [0], [1], [0, 0, 1, 1], [], []>} : vector<8x8xf32>, vector<8x32xf32>, vector<8x32xf32> -> vector<8x32xf32>
    %94 = vector.extract_strided_slice %15 {offsets = [96, 0], sizes = [32, 32], strides = [1, 1]} : vector<256x32xf32> to vector<32x32xf32>
    %cst_38 = arith.constant dense<0.000000e+00> : vector<8x32xf32>
    %95 = tpu.matmul %93, %94, %cst_38 {dimension_numbers = #tpu.dot_dimension_numbers<[1], [0], [0], [1], [0, 0, 1, 1], [], []>} : vector<8x32xf32>, vector<32x32xf32>, vector<8x32xf32> -> vector<8x32xf32>
    %96 = arith.addf %76, %95 : vector<8x32xf32>
    %97 = vector.extract_strided_slice %6 {offsets = [0, 128], sizes = [8, 32], strides = [1, 1]} : vector<8x256xf32> to vector<8x32xf32>
    %98 = vector.extract_strided_slice %13 {offsets = [0, 128], sizes = [8, 32], strides = [1, 1]} : vector<8x256xf32> to vector<8x32xf32>
    %99 = vector.extract_strided_slice %14 {offsets = [0, 128], sizes = [8, 32], strides = [1, 1]} : vector<8x256xf32> to vector<8x32xf32>
    %cst_39 = arith.constant dense<0.000000e+00> : vector<8x8xf32>
    %100 = tpu.matmul %97, %98, %cst_39 {dimension_numbers = #tpu.dot_dimension_numbers<[1], [1], [0], [0], [0, 0, 1, 0], [], []>} : vector<8x32xf32>, vector<8x32xf32>, vector<8x8xf32> -> vector<8x8xf32>
    %cst_40 = arith.constant 5.65685415 : f32
    %101 = vector.broadcast %cst_40 : f32 to vector<8x8xf32>
    %102 = arith.divf %100, %101 : vector<8x8xf32>
    %cst_41 = arith.constant dense<0xFF800000> : vector<8xf32>
    %103 = vector.multi_reduction <maximumf>, %102, %cst_41 [1] : vector<8x8xf32> to vector<8xf32>
    %104 = vector.shape_cast %103 : vector<8xf32> to vector<8x1xf32>
    %105 = vector.broadcast %104 : vector<8x1xf32> to vector<8x8xf32>
    %106 = arith.subf %102, %105 : vector<8x8xf32>
    %107 = math.exp %106 : vector<8x8xf32>
    %cst_42 = arith.constant dense<0.000000e+00> : vector<8xf32>
    %108 = vector.multi_reduction <add>, %107, %cst_42 [1] : vector<8x8xf32> to vector<8xf32>
    %109 = vector.shape_cast %108 : vector<8xf32> to vector<8x1xf32>
    %110 = tpu.reciprocal %109 {approx = true} : vector<8x1xf32> -> vector<8x1xf32>
    %111 = vector.broadcast %110 : vector<8x1xf32> to vector<8x8xf32>
    %112 = arith.mulf %107, %111 : vector<8x8xf32>
    %cst_43 = arith.constant dense<0.000000e+00> : vector<8x32xf32>
    %113 = tpu.matmul %112, %99, %cst_43 {dimension_numbers = #tpu.dot_dimension_numbers<[1], [0], [0], [1], [0, 0, 1, 1], [], []>} : vector<8x8xf32>, vector<8x32xf32>, vector<8x32xf32> -> vector<8x32xf32>
    %114 = vector.extract_strided_slice %15 {offsets = [128, 0], sizes = [32, 32], strides = [1, 1]} : vector<256x32xf32> to vector<32x32xf32>
    %cst_44 = arith.constant dense<0.000000e+00> : vector<8x32xf32>
    %115 = tpu.matmul %113, %114, %cst_44 {dimension_numbers = #tpu.dot_dimension_numbers<[1], [0], [0], [1], [0, 0, 1, 1], [], []>} : vector<8x32xf32>, vector<32x32xf32>, vector<8x32xf32> -> vector<8x32xf32>
    %116 = arith.addf %96, %115 : vector<8x32xf32>
    %117 = vector.extract_strided_slice %6 {offsets = [0, 160], sizes = [8, 32], strides = [1, 1]} : vector<8x256xf32> to vector<8x32xf32>
    %118 = vector.extract_strided_slice %13 {offsets = [0, 160], sizes = [8, 32], strides = [1, 1]} : vector<8x256xf32> to vector<8x32xf32>
    %119 = vector.extract_strided_slice %14 {offsets = [0, 160], sizes = [8, 32], strides = [1, 1]} : vector<8x256xf32> to vector<8x32xf32>
    %cst_45 = arith.constant dense<0.000000e+00> : vector<8x8xf32>
    %120 = tpu.matmul %117, %118, %cst_45 {dimension_numbers = #tpu.dot_dimension_numbers<[1], [1], [0], [0], [0, 0, 1, 0], [], []>} : vector<8x32xf32>, vector<8x32xf32>, vector<8x8xf32> -> vector<8x8xf32>
    %cst_46 = arith.constant 5.65685415 : f32
    %121 = vector.broadcast %cst_46 : f32 to vector<8x8xf32>
    %122 = arith.divf %120, %121 : vector<8x8xf32>
    %cst_47 = arith.constant dense<0xFF800000> : vector<8xf32>
    %123 = vector.multi_reduction <maximumf>, %122, %cst_47 [1] : vector<8x8xf32> to vector<8xf32>
    %124 = vector.shape_cast %123 : vector<8xf32> to vector<8x1xf32>
    %125 = vector.broadcast %124 : vector<8x1xf32> to vector<8x8xf32>
    %126 = arith.subf %122, %125 : vector<8x8xf32>
    %127 = math.exp %126 : vector<8x8xf32>
    %cst_48 = arith.constant dense<0.000000e+00> : vector<8xf32>
    %128 = vector.multi_reduction <add>, %127, %cst_48 [1] : vector<8x8xf32> to vector<8xf32>
    %129 = vector.shape_cast %128 : vector<8xf32> to vector<8x1xf32>
    %130 = tpu.reciprocal %129 {approx = true} : vector<8x1xf32> -> vector<8x1xf32>
    %131 = vector.broadcast %130 : vector<8x1xf32> to vector<8x8xf32>
    %132 = arith.mulf %127, %131 : vector<8x8xf32>
    %cst_49 = arith.constant dense<0.000000e+00> : vector<8x32xf32>
    %133 = tpu.matmul %132, %119, %cst_49 {dimension_numbers = #tpu.dot_dimension_numbers<[1], [0], [0], [1], [0, 0, 1, 1], [], []>} : vector<8x8xf32>, vector<8x32xf32>, vector<8x32xf32> -> vector<8x32xf32>
    %134 = vector.extract_strided_slice %15 {offsets = [160, 0], sizes = [32, 32], strides = [1, 1]} : vector<256x32xf32> to vector<32x32xf32>
    %cst_50 = arith.constant dense<0.000000e+00> : vector<8x32xf32>
    %135 = tpu.matmul %133, %134, %cst_50 {dimension_numbers = #tpu.dot_dimension_numbers<[1], [0], [0], [1], [0, 0, 1, 1], [], []>} : vector<8x32xf32>, vector<32x32xf32>, vector<8x32xf32> -> vector<8x32xf32>
    %136 = arith.addf %116, %135 : vector<8x32xf32>
    %137 = vector.extract_strided_slice %6 {offsets = [0, 192], sizes = [8, 32], strides = [1, 1]} : vector<8x256xf32> to vector<8x32xf32>
    %138 = vector.extract_strided_slice %13 {offsets = [0, 192], sizes = [8, 32], strides = [1, 1]} : vector<8x256xf32> to vector<8x32xf32>
    %139 = vector.extract_strided_slice %14 {offsets = [0, 192], sizes = [8, 32], strides = [1, 1]} : vector<8x256xf32> to vector<8x32xf32>
    %cst_51 = arith.constant dense<0.000000e+00> : vector<8x8xf32>
    %140 = tpu.matmul %137, %138, %cst_51 {dimension_numbers = #tpu.dot_dimension_numbers<[1], [1], [0], [0], [0, 0, 1, 0], [], []>} : vector<8x32xf32>, vector<8x32xf32>, vector<8x8xf32> -> vector<8x8xf32>
    %cst_52 = arith.constant 5.65685415 : f32
    %141 = vector.broadcast %cst_52 : f32 to vector<8x8xf32>
    %142 = arith.divf %140, %141 : vector<8x8xf32>
    %cst_53 = arith.constant dense<0xFF800000> : vector<8xf32>
    %143 = vector.multi_reduction <maximumf>, %142, %cst_53 [1] : vector<8x8xf32> to vector<8xf32>
    %144 = vector.shape_cast %143 : vector<8xf32> to vector<8x1xf32>
    %145 = vector.broadcast %144 : vector<8x1xf32> to vector<8x8xf32>
    %146 = arith.subf %142, %145 : vector<8x8xf32>
    %147 = math.exp %146 : vector<8x8xf32>
    %cst_54 = arith.constant dense<0.000000e+00> : vector<8xf32>
    %148 = vector.multi_reduction <add>, %147, %cst_54 [1] : vector<8x8xf32> to vector<8xf32>
    %149 = vector.shape_cast %148 : vector<8xf32> to vector<8x1xf32>
    %150 = tpu.reciprocal %149 {approx = true} : vector<8x1xf32> -> vector<8x1xf32>
    %151 = vector.broadcast %150 : vector<8x1xf32> to vector<8x8xf32>
    %152 = arith.mulf %147, %151 : vector<8x8xf32>
    %cst_55 = arith.constant dense<0.000000e+00> : vector<8x32xf32>
    %153 = tpu.matmul %152, %139, %cst_55 {dimension_numbers = #tpu.dot_dimension_numbers<[1], [0], [0], [1], [0, 0, 1, 1], [], []>} : vector<8x8xf32>, vector<8x32xf32>, vector<8x32xf32> -> vector<8x32xf32>
    %154 = vector.extract_strided_slice %15 {offsets = [192, 0], sizes = [32, 32], strides = [1, 1]} : vector<256x32xf32> to vector<32x32xf32>
    %cst_56 = arith.constant dense<0.000000e+00> : vector<8x32xf32>
    %155 = tpu.matmul %153, %154, %cst_56 {dimension_numbers = #tpu.dot_dimension_numbers<[1], [0], [0], [1], [0, 0, 1, 1], [], []>} : vector<8x32xf32>, vector<32x32xf32>, vector<8x32xf32> -> vector<8x32xf32>
    %156 = arith.addf %136, %155 : vector<8x32xf32>
    %157 = vector.extract_strided_slice %6 {offsets = [0, 224], sizes = [8, 32], strides = [1, 1]} : vector<8x256xf32> to vector<8x32xf32>
    %158 = vector.extract_strided_slice %13 {offsets = [0, 224], sizes = [8, 32], strides = [1, 1]} : vector<8x256xf32> to vector<8x32xf32>
    %159 = vector.extract_strided_slice %14 {offsets = [0, 224], sizes = [8, 32], strides = [1, 1]} : vector<8x256xf32> to vector<8x32xf32>
    %cst_57 = arith.constant dense<0.000000e+00> : vector<8x8xf32>
    %160 = tpu.matmul %157, %158, %cst_57 {dimension_numbers = #tpu.dot_dimension_numbers<[1], [1], [0], [0], [0, 0, 1, 0], [], []>} : vector<8x32xf32>, vector<8x32xf32>, vector<8x8xf32> -> vector<8x8xf32>
    %cst_58 = arith.constant 5.65685415 : f32
    %161 = vector.broadcast %cst_58 : f32 to vector<8x8xf32>
    %162 = arith.divf %160, %161 : vector<8x8xf32>
    %cst_59 = arith.constant dense<0xFF800000> : vector<8xf32>
    %163 = vector.multi_reduction <maximumf>, %162, %cst_59 [1] : vector<8x8xf32> to vector<8xf32>
    %164 = vector.shape_cast %163 : vector<8xf32> to vector<8x1xf32>
    %165 = vector.broadcast %164 : vector<8x1xf32> to vector<8x8xf32>
    %166 = arith.subf %162, %165 : vector<8x8xf32>
    %167 = math.exp %166 : vector<8x8xf32>
    %cst_60 = arith.constant dense<0.000000e+00> : vector<8xf32>
    %168 = vector.multi_reduction <add>, %167, %cst_60 [1] : vector<8x8xf32> to vector<8xf32>
    %169 = vector.shape_cast %168 : vector<8xf32> to vector<8x1xf32>
    %170 = tpu.reciprocal %169 {approx = true} : vector<8x1xf32> -> vector<8x1xf32>
    %171 = vector.broadcast %170 : vector<8x1xf32> to vector<8x8xf32>
    %172 = arith.mulf %167, %171 : vector<8x8xf32>
    %cst_61 = arith.constant dense<0.000000e+00> : vector<8x32xf32>
    %173 = tpu.matmul %172, %159, %cst_61 {dimension_numbers = #tpu.dot_dimension_numbers<[1], [0], [0], [1], [0, 0, 1, 1], [], []>} : vector<8x8xf32>, vector<8x32xf32>, vector<8x32xf32> -> vector<8x32xf32>
    %174 = vector.extract_strided_slice %15 {offsets = [224, 0], sizes = [32, 32], strides = [1, 1]} : vector<256x32xf32> to vector<32x32xf32>
    %cst_62 = arith.constant dense<0.000000e+00> : vector<8x32xf32>
    %175 = tpu.matmul %173, %174, %cst_62 {dimension_numbers = #tpu.dot_dimension_numbers<[1], [0], [0], [1], [0, 0, 1, 1], [], []>} : vector<8x32xf32>, vector<32x32xf32>, vector<8x32xf32> -> vector<8x32xf32>
    %176 = arith.addf %156, %175 : vector<8x32xf32>
    %177 = arith.addf %176, %1 : vector<8x32xf32>
    %cst_63 = arith.constant dense<0.000000e+00> : vector<8xf32>
    %178 = vector.multi_reduction <add>, %177, %cst_63 [1] : vector<8x32xf32> to vector<8xf32>
    %179 = vector.shape_cast %178 : vector<8xf32> to vector<8x1xf32>
    %cst_64 = arith.constant 3.200000e+01 : f32
    %180 = vector.broadcast %cst_64 : f32 to vector<8x1xf32>
    %181 = arith.divf %179, %180 : vector<8x1xf32>
    %182 = vector.broadcast %181 : vector<8x1xf32> to vector<8x32xf32>
    %183 = arith.subf %177, %182 : vector<8x32xf32>
    %184 = arith.mulf %183, %183 : vector<8x32xf32>
    %cst_65 = arith.constant dense<0.000000e+00> : vector<8xf32>
    %185 = vector.multi_reduction <add>, %184, %cst_65 [1] : vector<8x32xf32> to vector<8xf32>
    %186 = vector.shape_cast %185 : vector<8xf32> to vector<8x1xf32>
    %cst_66 = arith.constant 3.200000e+01 : f32
    %187 = vector.broadcast %cst_66 : f32 to vector<8x1xf32>
    %188 = arith.divf %186, %187 : vector<8x1xf32>
    %189 = vector.broadcast %181 : vector<8x1xf32> to vector<8x32xf32>
    %190 = arith.subf %177, %189 : vector<8x32xf32>
    %cst_67 = arith.constant 9.99999974E-6 : f32
    %191 = vector.broadcast %cst_67 : f32 to vector<8x1xf32>
    %192 = arith.addf %188, %191 : vector<8x1xf32>
    %193 = math.rsqrt %192 : vector<8x1xf32>
    %194 = vector.broadcast %193 : vector<8x1xf32> to vector<8x32xf32>
    %195 = arith.mulf %190, %194 : vector<8x32xf32>
    %c0_68 = arith.constant 0 : index
    %c0_69 = arith.constant 0 : index
    %196 = vector.load %arg7[%c0_68, %c0_69] : memref<1x32xf32, #tpu.memory_space<vmem>>, vector<1x32xf32>
    %197 = vector.broadcast %196 : vector<1x32xf32> to vector<8x32xf32>
    %198 = arith.mulf %195, %197 : vector<8x32xf32>
    %c0_70 = arith.constant 0 : index
    %c0_71 = arith.constant 0 : index
    %199 = vector.load %arg8[%c0_70, %c0_71] : memref<1x32xf32, #tpu.memory_space<vmem>>, vector<1x32xf32>
    %200 = vector.broadcast %199 : vector<1x32xf32> to vector<8x32xf32>
    %201 = arith.addf %198, %200 : vector<8x32xf32>
    %c0_72 = arith.constant 0 : index
    %c0_73 = arith.constant 0 : index
    %202 = vector.load %arg9[%c0_72, %c0_73] : memref<32x128xf32, #tpu.memory_space<vmem>>, vector<32x128xf32>
    %cst_74 = arith.constant dense<0.000000e+00> : vector<8x128xf32>
    %203 = tpu.matmul %201, %202, %cst_74 {dimension_numbers = #tpu.dot_dimension_numbers<[1], [0], [0], [1], [0, 0, 1, 1], [], []>} : vector<8x32xf32>, vector<32x128xf32>, vector<8x128xf32> -> vector<8x128xf32>
    %c0_75 = arith.constant 0 : index
    %c0_76 = arith.constant 0 : index
    %204 = vector.load %arg10[%c0_75, %c0_76] : memref<1x128xf32, #tpu.memory_space<vmem>>, vector<1x128xf32>
    %205 = vector.broadcast %204 : vector<1x128xf32> to vector<8x128xf32>
    %206 = arith.addf %203, %205 : vector<8x128xf32>
    %c0_77 = arith.constant 0 : index
    %c0_78 = arith.constant 0 : index
    %c0_79 = arith.constant 0 : index
    %207 = vector.load %arg12[%c0_77, %c0_78, %c0_79] : memref<1x8x128xf32, #tpu.memory_space<vmem>>, vector<1x8x128xf32>
    %208 = vector.shape_cast %207 : vector<1x8x128xf32> to vector<8x128xf32>
    %209 = vector.shape_cast %206 : vector<8x128xf32> to vector<1x8x128xf32>
    tpu.vector_store %arg12[%c0_77, %c0_78, %c0_79], %209 {strides = array<i32>} : memref<1x8x128xf32, #tpu.memory_space<vmem>>, vector<1x8x128xf32>,
    %c0_80 = arith.constant 0 : index
    %c0_81 = arith.constant 0 : index
    %c0_82 = arith.constant 0 : index
    %210 = vector.load %arg13[%c0_80, %c0_81, %c0_82] : memref<1x8x128xf32, #tpu.memory_space<vmem>>, vector<1x8x128xf32>
    %211 = vector.shape_cast %210 : vector<1x8x128xf32> to vector<8x128xf32>
    %212 = vector.shape_cast %10 : vector<8x128xf32> to vector<1x8x128xf32>
    tpu.vector_store %arg13[%c0_80, %c0_81, %c0_82], %212 {strides = array<i32>} : memref<1x8x128xf32, #tpu.memory_space<vmem>>, vector<1x8x128xf32>,
    %213 = tpu.iota {dimensions = array<i32: 1>} : vector<8x128xi32>
    %c0_83 = arith.constant 0 : index
    %c0_84 = arith.constant 0 : index
    %c0_85 = arith.constant 0 : index
    %214 = vector.load %arg3[%c0_83, %c0_84, %c0_85] : memref<1x8x128xi32, #tpu.memory_space<vmem>>, vector<1x8x128xi32>
    %215 = vector.shape_cast %214 : vector<1x8x128xi32> to vector<8x128xi32>
    %c5_i32 = arith.constant 5 : i32
    %216 = vector.broadcast %c5_i32 : i32 to vector<8x128xi32>
    %217 = arith.cmpi slt, %213, %216 : vector<8x128xi32>
    %cst_86 = arith.constant -1.000000e+30 : f32
    %218 = vector.broadcast %cst_86 : f32 to vector<8x128xf32>
    %219 = arith.select %217, %10, %218 : vector<8x128xi1>, vector<8x128xf32>
    %cst_87 = arith.constant dense<0xFF800000> : vector<8xf32>
    %220 = vector.multi_reduction <maximumf>, %219, %cst_87 [1] : vector<8x128xf32> to vector<8xf32>
    %221 = vector.shape_cast %220 : vector<8xf32> to vector<8x1xf32>
    %222 = vector.broadcast %221 : vector<8x1xf32> to vector<8x128xf32>
    %223 = arith.subf %219, %222 : vector<8x128xf32>
    %224 = math.exp %223 : vector<8x128xf32>
    %cst_88 = arith.constant dense<0.000000e+00> : vector<8xf32>
    %225 = vector.multi_reduction <add>, %224, %cst_88 [1] : vector<8x128xf32> to vector<8xf32>
    %226 = vector.shape_cast %225 : vector<8xf32> to vector<8x1xf32>
    %227 = math.log %226 : vector<8x1xf32>
    %228 = arith.addf %227, %221 : vector<8x1xf32>
    %229 = arith.cmpi eq, %213, %215 : vector<8x128xi32>
    %cst_89 = arith.constant 0.000000e+00 : f32
    %230 = vector.broadcast %cst_89 : f32 to vector<8x128xf32>
    %231 = arith.select %229, %10, %230 : vector<8x128xi1>, vector<8x128xf32>
    %cst_90 = arith.constant dense<0.000000e+00> : vector<8xf32>
    %232 = vector.multi_reduction <add>, %231, %cst_90 [1] : vector<8x128xf32> to vector<8xf32>
    %233 = vector.shape_cast %232 : vector<8xf32> to vector<8x1xf32>
    %234 = vector.extract_strided_slice %215 {offsets = [0, 0], sizes = [8, 1], strides = [1, 1]} : vector<8x128xi32> to vector<8x1xi32>
    %c-100_i32 = arith.constant -100 : i32
    %235 = vector.broadcast %c-100_i32 : i32 to vector<8x1xi32>
    %236 = arith.cmpi ne, %234, %235 : vector<8x1xi32>
    %237 = arith.extui %236 : vector<8x1xi1> to vector<8x1xi32>
    %238 = arith.sitofp %237 : vector<8x1xi32> to vector<8x1xf32>
    %239 = arith.subf %228, %233 : vector<8x1xf32>
    %240 = arith.mulf %239, %238 : vector<8x1xf32>
    %cst_91 = arith.constant dense<0xFF800000> : vector<8xf32>
    %241 = vector.multi_reduction <maximumf>, %1, %cst_91 [1] : vector<8x32xf32> to vector<8xf32>
    %242 = vector.shape_cast %241 : vector<8xf32> to vector<8x1xf32>
    %243 = vector.broadcast %242 : vector<8x1xf32> to vector<8x32xf32>
    %244 = arith.subf %1, %243 : vector<8x32xf32>
    %245 = math.exp %244 : vector<8x32xf32>
    %cst_92 = arith.constant dense<0.000000e+00> : vector<8xf32>
    %246 = vector.multi_reduction <add>, %245, %cst_92 [1] : vector<8x32xf32> to vector<8xf32>
    %247 = vector.shape_cast %246 : vector<8xf32> to vector<8x1xf32>
    %248 = vector.broadcast %247 : vector<8x1xf32> to vector<8x32xf32>
    %249 = arith.divf %245, %248 : vector<8x32xf32>
    %cst_93 = arith.constant dense<0xFF800000> : vector<8xf32>
    %250 = vector.multi_reduction <maximumf>, %3, %cst_93 [1] : vector<8x32xf32> to vector<8xf32>
    %251 = vector.shape_cast %250 : vector<8xf32> to vector<8x1xf32>
    %252 = vector.broadcast %251 : vector<8x1xf32> to vector<8x32xf32>
    %253 = arith.subf %3, %252 : vector<8x32xf32>
    %254 = math.exp %253 : vector<8x32xf32>
    %cst_94 = arith.constant dense<0.000000e+00> : vector<8xf32>
    %255 = vector.multi_reduction <add>, %254, %cst_94 [1] : vector<8x32xf32> to vector<8xf32>
    %256 = vector.shape_cast %255 : vector<8xf32> to vector<8x1xf32>
    %257 = vector.broadcast %256 : vector<8x1xf32> to vector<8x32xf32>
    %258 = arith.divf %254, %257 : vector<8x32xf32>
    %cst_95 = arith.constant dense<0xFF800000> : vector<8xf32>
    %259 = vector.multi_reduction <maximumf>, %249, %cst_95 [1] : vector<8x32xf32> to vector<8xf32>
    %260 = vector.shape_cast %259 : vector<8xf32> to vector<8x1xf32>
    %261 = vector.broadcast %260 : vector<8x1xf32> to vector<8x32xf32>
    %262 = arith.subf %249, %261 : vector<8x32xf32>
    %263 = math.exp %262 : vector<8x32xf32>
    %cst_96 = arith.constant dense<0.000000e+00> : vector<8xf32>
    %264 = vector.multi_reduction <add>, %263, %cst_96 [1] : vector<8x32xf32> to vector<8xf32>
    %265 = vector.shape_cast %264 : vector<8xf32> to vector<8x1xf32>
    %266 = math.log %265 : vector<8x1xf32>
    %267 = vector.broadcast %266 : vector<8x1xf32> to vector<8x32xf32>
    %268 = arith.subf %262, %267 : vector<8x32xf32>
    %cst_97 = arith.constant dense<0xFF800000> : vector<8xf32>
    %269 = vector.multi_reduction <maximumf>, %258, %cst_97 [1] : vector<8x32xf32> to vector<8xf32>
    %270 = vector.shape_cast %269 : vector<8xf32> to vector<8x1xf32>
    %271 = vector.broadcast %270 : vector<8x1xf32> to vector<8x32xf32>
    %272 = arith.subf %258, %271 : vector<8x32xf32>
    %273 = math.exp %272 : vector<8x32xf32>
    %cst_98 = arith.constant dense<0.000000e+00> : vector<8xf32>
    %274 = vector.multi_reduction <add>, %273, %cst_98 [1] : vector<8x32xf32> to vector<8xf32>
    %275 = vector.shape_cast %274 : vector<8xf32> to vector<8x1xf32>
    %276 = vector.broadcast %275 : vector<8x1xf32> to vector<8x32xf32>
    %277 = arith.divf %273, %276 : vector<8x32xf32>
    %278 = math.log %277 : vector<8x32xf32>
    %279 = arith.subf %278, %268 : vector<8x32xf32>
    %280 = arith.mulf %277, %279 : vector<8x32xf32>
    %cst_99 = arith.constant dense<0.000000e+00> : vector<8xf32>
    %281 = vector.multi_reduction <add>, %280, %cst_99 [1] : vector<8x32xf32> to vector<8xf32>
    %282 = vector.shape_cast %281 : vector<8xf32> to vector<8x1xf32>
    %c0_i32 = arith.constant 0 : i32
    %283 = vector.broadcast %c0_i32 : i32 to vector<8x128xi32>
    %284 = arith.cmpi eq, %213, %283 : vector<8x128xi32>
    %cst_100 = arith.constant 0.000000e+00 : f32
    %285 = vector.shape_cast %240 : vector<8x1xf32> to vector<8x1xf32>
    %286 = vector.broadcast %285 : vector<8x1xf32> to vector<8x128xf32>
    %287 = vector.broadcast %cst_100 : f32 to vector<8x128xf32>
    %288 = arith.select %284, %286, %287 : vector<8x128xi1>, vector<8x128xf32>
    %c1_i32 = arith.constant 1 : i32
    %289 = vector.broadcast %c1_i32 : i32 to vector<8x128xi32>
    %290 = arith.cmpi eq, %213, %289 : vector<8x128xi32>
    %cst_101 = arith.constant 0.000000e+00 : f32
    %291 = vector.shape_cast %238 : vector<8x1xf32> to vector<8x1xf32>
    %292 = vector.broadcast %291 : vector<8x1xf32> to vector<8x128xf32>
    %293 = vector.broadcast %cst_101 : f32 to vector<8x128xf32>
    %294 = arith.select %290, %292, %293 : vector<8x128xi1>, vector<8x128xf32>
    %295 = arith.addf %288, %294 : vector<8x128xf32>
    %c2_i32 = arith.constant 2 : i32
    %296 = vector.broadcast %c2_i32 : i32 to vector<8x128xi32>
    %297 = arith.cmpi eq, %213, %296 : vector<8x128xi32>
    %cst_102 = arith.constant 0.000000e+00 : f32
    %298 = vector.shape_cast %282 : vector<8x1xf32> to vector<8x1xf32>
    %299 = vector.broadcast %298 : vector<8x1xf32> to vector<8x128xf32>
    %300 = vector.broadcast %cst_102 : f32 to vector<8x128xf32>
    %301 = arith.select %297, %299, %300 : vector<8x128xi1>, vector<8x128xf32>
    %302 = arith.addf %295, %301 : vector<8x128xf32>
    %c0_103 = arith.constant 0 : index
    %c0_104 = arith.constant 0 : index
    %c0_105 = arith.constant 0 : index
    %303 = vector.load %arg14[%c0_103, %c0_104, %c0_105] : memref<1x8x128xf32, #tpu.memory_space<vmem>>, vector<1x8x128xf32>
    %304 = vector.shape_cast %303 : vector<1x8x128xf32> to vector<8x128xf32>
    %305 = vector.shape_cast %302 : vector<8x128xf32> to vector<1x8x128xf32>
    tpu.vector_store %arg14[%c0_103, %c0_104, %c0_105], %305 {strides = array<i32>} : memref<1x8x128xf32, #tpu.memory_space<vmem>>, vector<1x8x128xf32>,
    return
  }
  func.func @transform_0(%arg0: i32) -> (i32, i32, i32) {
    %c0_i32 = arith.constant 0 : i32
    %c0_i32_0 = arith.constant 0 : i32
    %c0_i32_1 = arith.constant 0 : i32
    return %arg0, %c0_i32, %c0_i32_0 : i32, i32, i32
  }
  func.func @transform_1(%arg0: i32) -> (i32, i32, i32) {
    %c0_i32 = arith.constant 0 : i32
    %c0_i32_0 = arith.constant 0 : i32
    %c0_i32_1 = arith.constant 0 : i32
    return %arg0, %c0_i32, %c0_i32_0 : i32, i32, i32
  }
  func.func @transform_2(%arg0: i32) -> (i32, i32, i32) {
    %c0_i32 = arith.constant 0 : i32
    %c0_i32_0 = arith.constant 0 : i32
    %c0_i32_1 = arith.constant 0 : i32
    return %arg0, %c0_i32, %c0_i32_0 : i32, i32, i32
  }
  func.func @transform_3(%arg0: i32) -> (i32, i32) {
    %c0_i32 = arith.constant 0 : i32
    %c0_i32_0 = arith.constant 0 : i32
    %c0_i32_1 = arith.constant 0 : i32
    return %c0_i32, %c0_i32_0 : i32, i32
  }
  func.func @transform_4(%arg0: i32) -> (i32, i32) {
    %c0_i32 = arith.constant 0 : i32
    %c0_i32_0 = arith.constant 0 : i32
    %c0_i32_1 = arith.constant 0 : i32
    return %c0_i32, %c0_i32_0 : i32, i32
  }
  func.func @transform_5(%arg0: i32) -> (i32, i32) {
    %c0_i32 = arith.constant 0 : i32
    %c0_i32_0 = arith.constant 0 : i32
    %c0_i32_1 = arith.constant 0 : i32
    return %c0_i32, %c0_i32_0 : i32, i32
  }
  func.func @transform_6(%arg0: i32) -> (i32, i32) {
    %c0_i32 = arith.constant 0 : i32
    %c0_i32_0 = arith.constant 0 : i32
    %c0_i32_1 = arith.constant 0 : i32
    return %c0_i32, %c0_i32_0 : i32, i32
  }
  func.func @transform_7(%arg0: i32) -> (i32, i32) {
    %c0_i32 = arith.constant 0 : i32
    %c0_i32_0 = arith.constant 0 : i32
    %c0_i32_1 = arith.constant 0 : i32
    return %c0_i32, %c0_i32_0 : i32, i32
  }
  func.func @transform_8(%arg0: i32) -> (i32, i32) {
    %c0_i32 = arith.constant 0 : i32
    %c0_i32_0 = arith.constant 0 : i32
    %c0_i32_1 = arith.constant 0 : i32
    return %c0_i32, %c0_i32_0 : i32, i32
  }
  func.func @transform_9(%arg0: i32) -> (i32, i32) {
    %c0_i32 = arith.constant 0 : i32
    %c0_i32_0 = arith.constant 0 : i32
    %c0_i32_1 = arith.constant 0 : i32
    return %c0_i32, %c0_i32_0 : i32, i32
  }
  func.func @transform_10(%arg0: i32) -> (i32, i32) {
    %c0_i32 = arith.constant 0 : i32
    %c0_i32_0 = arith.constant 0 : i32
    %c0_i32_1 = arith.constant 0 : i32
    return %c0_i32, %c0_i32_0 : i32, i32
  }
  func.func @transform_11(%arg0: i32) -> (i32, i32, i32) {
    %c0_i32 = arith.constant 0 : i32
    %c0_i32_0 = arith.constant 0 : i32
    %c0_i32_1 = arith.constant 0 : i32
    return %arg0, %c0_i32, %c0_i32_0 : i32, i32, i32
  }
  func.func @transform_12(%arg0: i32) -> (i32, i32, i32) {
    %c0_i32 = arith.constant 0 : i32
    %c0_i32_0 = arith.constant 0 : i32
    %c0_i32_1 = arith.constant 0 : i32
    return %arg0, %c0_i32, %c0_i32_0 : i32, i32, i32
  }
  func.func @transform_13(%arg0: i32) -> (i32, i32, i32) {
    %c0_i32 = arith.constant 0 : i32
    %c0_i32_0 = arith.constant 0 : i32
    %c0_i32_1 = arith.constant 0 : i32
    return %arg0, %c0_i32, %c0_i32_0 : i32, i32, i32
  }
}

</mosaic_0001>

<llo_original>
// kernel: dtca_forward.1
$region0: #{dtca_forward.1}
  #allocation0 [shape = 'u32[]', space=smem, size = 0x4, offset = 0x4, fixed_abs, tag = 'smem constant byte address 0x4 - core index']
  #allocation1 [shape = 'u32[144,128]{1,0:T(1,128)}', space=vmem, size = 0x12000, scoped, tag = 'internal scratch']
  %s0 = inlined_call_operand.vmem [shape: f32[2,8,32], index: 0, kind: input, shape index: {}]
  %s1 = inlined_call_operand.vmem [shape: f32[2,8,32], index: 1, kind: input, shape index: {}]
  %s2 = inlined_call_operand.vmem [shape: s32[2,8,128], index: 2, kind: input, shape index: {}]
  %s3 = inlined_call_operand.vmem [shape: f32[32,384], index: 3, kind: input, shape index: {}]
  %s4 = inlined_call_operand.vmem [shape: f32[32,512], index: 4, kind: input, shape index: {}]
  %s5 = inlined_call_operand.vmem [shape: f32[256,32], index: 5, kind: input, shape index: {}]
  %s6 = inlined_call_operand.vmem [shape: f32[1,32], index: 6, kind: input, shape index: {}]
  %s7 = inlined_call_operand.vmem [shape: f32[1,32], index: 7, kind: input, shape index: {}]
  %s8 = inlined_call_operand.vmem [shape: f32[32,128], index: 8, kind: input, shape index: {}]
  %s9 = inlined_call_operand.vmem [shape: f32[1,128], index: 9, kind: input, shape index: {}]
  %s10 = inlined_call_operand.vmem [shape: f32[1,128], index: 10, kind: input, shape index: {}]
  %s11 = inlined_call_operand.vmem [shape: f32[2,8,128], index: 11, kind: output, shape index: {0}]
  %s12 = inlined_call_operand.vmem [shape: f32[2,8,128], index: 12, kind: output, shape index: {1}]
  %s13 = inlined_call_operand.vmem [shape: f32[2,8,128], index: 13, kind: output, shape index: {2}]
  %14 = xla_tuple %s11, %s12, %s13
  %s15 = sld [smem:[#allocation0]]
  $region93: #{dtca_forward.1} parent=0
    _
  %s17 = ssub.s32 1, %s15
  %s18 = scalar_select 0, %s17, %s15
  loop: start=0, step=1, limit=4
  $region2: #{dtca_forward.1} parent=0 // loop_pre_header
    _
  $region3: #{dtca_forward.1} parent=0 // loop_header
    %s20 = sphi 0, %s24
    %p21 = scmp.ge.s32.totalorder %s20, 4
    %s30 = sphi 0, %s32
    %s33 = sphi 0, %s30
    %s34 = sphi 0, %s33
    %s50 = sphi 0, %s34
    %s56 = sphi 0, %s58
    %s59 = sphi 0, %s56
    %s60 = sphi 0, %s59
    %s76 = sphi 0, %s60
    %s82 = sphi 0, %s84
    %s85 = sphi 0, %s82
    %s86 = sphi 0, %s85
    %s102 = sphi 0, %s86
    %s106 = sphi 0, %s106
    %s108 = sphi 0, %s106
    %s109 = sphi 0, %s108
    %s123 = sphi 0, %s109
    %s127 = sphi 0, %s127
    %s129 = sphi 0, %s127
    %s130 = sphi 0, %s129
    %s144 = sphi 0, %s130
    %s148 = sphi 0, %s148
    %s150 = sphi 0, %s148
    %s151 = sphi 0, %s150
    %s165 = sphi 0, %s151
    %s169 = sphi 0, %s169
    %s171 = sphi 0, %s169
    %s172 = sphi 0, %s171
    %s186 = sphi 0, %s172
    %s190 = sphi 0, %s190
    %s192 = sphi 0, %s190
    %s193 = sphi 0, %s192
    %s207 = sphi 0, %s193
    %s211 = sphi 0, %s211
    %s213 = sphi 0, %s211
    %s214 = sphi 0, %s213
    %s228 = sphi 0, %s214
    %s232 = sphi 0, %s232
    %s234 = sphi 0, %s232
    %s235 = sphi 0, %s234
    %s249 = sphi 0, %s235
    %s253 = sphi 0, %s253
    %s255 = sphi 0, %s253
    %s256 = sphi 0, %s255
    %s270 = sphi 0, %s256
    %s276 = sphi 0, %s278
    %s279 = sphi 0, %s276
    %s280 = sphi 0, %s279
    %s296 = sphi 0, %s280
    %s302 = sphi 0, %s304
    %s305 = sphi 0, %s302
    %s306 = sphi 0, %s305
    %s322 = sphi 0, %s306
    %s328 = sphi 0, %s330
    %s331 = sphi 0, %s328
    %s332 = sphi 0, %s331
    %s348 = sphi 0, %s332
  $region4: #{dtca_forward.1} parent=0 // loop_header_branch
    %23 = sbr.rel (%p21) target = $region8
  $region5: #{dtca_forward.1} parent=0 // loop_body
    %s25 = ssub.s32 %s20, 1
    %s26 = ssub.s32 %s20, 2
    %s27 = sadd.s32 %s20, 1
    %s28 = ssub.s32 %s20, %s27
    %p29 = scmp.eq.s32.totalorder %s28, 0
    %s31 = sadd.s32 %s30, 1
    %s32 = scalar_select %p29, %s30, %s31
    %p35 = pneg %p29
    %p36 = scmp.eq.s32.totalorder %s20, 1
    %p37 = por %p35, %p36
    %p38 = scmp.ne.s32.totalorder %s30, %s33
    %p39 = scmp.eq.s32.totalorder %s20, 0
    %p40 = por %p38, %p39
    %p41 = scmp.ne.s32.totalorder %s30, %s33
    %p42 = scmp.eq.s32.totalorder %s25, 1
    %p43 = por %p41, %p42
    %p44 = scmp.ne.s32.totalorder %s33, %s34
    %p45 = scmp.eq.s32.totalorder %s25, 0
    %p46 = por %p44, %p45
    %p47 = scmp.ne.s32.totalorder %s33, %s34
    %p48 = scmp.eq.s32.totalorder %s26, 1
    %p49 = por %p47, %p48
    %p51 = scmp.ne.s32.totalorder %s34, %s50
    %p52 = scmp.eq.s32.totalorder %s26, 0
    %p53 = por %p51, %p52
    %s54 = ssub.s32 %s20, %s27
    %p55 = scmp.eq.s32.totalorder %s54, 0
    %s57 = sadd.s32 %s56, 1
    %s58 = scalar_select %p55, %s56, %s57
    %p61 = pneg %p55
    %p62 = scmp.eq.s32.totalorder %s20, 1
    %p63 = por %p61, %p62
    %p64 = scmp.ne.s32.totalorder %s56, %s59
    %p65 = scmp.eq.s32.totalorder %s20, 0
    %p66 = por %p64, %p65
    %p67 = scmp.ne.s32.totalorder %s56, %s59
    %p68 = scmp.eq.s32.totalorder %s25, 1
    %p69 = por %p67, %p68
    %p70 = scmp.ne.s32.totalorder %s59, %s60
    %p71 = scmp.eq.s32.totalorder %s25, 0
    %p72 = por %p70, %p71
    %p73 = scmp.ne.s32.totalorder %s59, %s60
    %p74 = scmp.eq.s32.totalorder %s26, 1
    %p75 = por %p73, %p74
    %p77 = scmp.ne.s32.totalorder %s60, %s76
    %p78 = scmp.eq.s32.totalorder %s26, 0
    %p79 = por %p77, %p78
    %s80 = ssub.s32 %s20, %s27
    %p81 = scmp.eq.s32.totalorder %s80, 0
    %s83 = sadd.s32 %s82, 1
    %s84 = scalar_select %p81, %s82, %s83
    %p87 = pneg %p81
    %p88 = scmp.eq.s32.totalorder %s20, 1
    %p89 = por %p87, %p88
    %p90 = scmp.ne.s32.totalorder %s82, %s85
    %p91 = scmp.eq.s32.totalorder %s20, 0
    %p92 = por %p90, %p91
    %p93 = scmp.ne.s32.totalorder %s82, %s85
    %p94 = scmp.eq.s32.totalorder %s25, 1
    %p95 = por %p93, %p94
    %p96 = scmp.ne.s32.totalorder %s85, %s86
    %p97 = scmp.eq.s32.totalorder %s25, 0
    %p98 = por %p96, %p97
    %p99 = scmp.ne.s32.totalorder %s85, %s86
    %p100 = scmp.eq.s32.totalorder %s26, 1
    %p101 = por %p99, %p100
    %p103 = scmp.ne.s32.totalorder %s86, %s102
    %p104 = scmp.eq.s32.totalorder %s26, 0
    %p105 = por %p103, %p104
    %s107 = sadd.s32 %s106, 1
    %p110 = scmp.eq.s32.totalorder %s20, 1
    %p111 = scmp.ne.s32.totalorder %s106, %s108
    %p112 = scmp.eq.s32.totalorder %s20, 0
    %p113 = por %p111, %p112
    %p114 = scmp.ne.s32.totalorder %s106, %s108
    %p115 = scmp.eq.s32.totalorder %s25, 1
    %p116 = por %p114, %p115
    %p117 = scmp.ne.s32.totalorder %s108, %s109
    %p118 = scmp.eq.s32.totalorder %s25, 0
    %p119 = por %p117, %p118
    %p120 = scmp.ne.s32.totalorder %s108, %s109
    %p121 = scmp.eq.s32.totalorder %s26, 1
    %p122 = por %p120, %p121
    %p124 = scmp.ne.s32.totalorder %s109, %s123
    %p125 = scmp.eq.s32.totalorder %s26, 0
    %p126 = por %p124, %p125
    %s128 = sadd.s32 %s127, 1
    %p131 = scmp.eq.s32.totalorder %s20, 1
    %p132 = scmp.ne.s32.totalorder %s127, %s129
    %p133 = scmp.eq.s32.totalorder %s20, 0
    %p134 = por %p132, %p133
    %p135 = scmp.ne.s32.totalorder %s127, %s129
    %p136 = scmp.eq.s32.totalorder %s25, 1
    %p137 = por %p135, %p136
    %p138 = scmp.ne.s32.totalorder %s129, %s130
    %p139 = scmp.eq.s32.totalorder %s25, 0
    %p140 = por %p138, %p139
    %p141 = scmp.ne.s32.totalorder %s129, %s130
    %p142 = scmp.eq.s32.totalorder %s26, 1
    %p143 = por %p141, %p142
    %p145 = scmp.ne.s32.totalorder %s130, %s144
    %p146 = scmp.eq.s32.totalorder %s26, 0
    %p147 = por %p145, %p146
    %s149 = sadd.s32 %s148, 1
    %p152 = scmp.eq.s32.totalorder %s20, 1
    %p153 = scmp.ne.s32.totalorder %s148, %s150
    %p154 = scmp.eq.s32.totalorder %s20, 0
    %p155 = por %p153, %p154
    %p156 = scmp.ne.s32.totalorder %s148, %s150
    %p157 = scmp.eq.s32.totalorder %s25, 1
    %p158 = por %p156, %p157
    %p159 = scmp.ne.s32.totalorder %s150, %s151
    %p160 = scmp.eq.s32.totalorder %s25, 0
    %p161 = por %p159, %p160
    %p162 = scmp.ne.s32.totalorder %s150, %s151
    %p163 = scmp.eq.s32.totalorder %s26, 1
    %p164 = por %p162, %p163
    %p166 = scmp.ne.s32.totalorder %s151, %s165
    %p167 = scmp.eq.s32.totalorder %s26, 0
    %p168 = por %p166, %p167
    %s170 = sadd.s32 %s169, 1
    %p173 = scmp.eq.s32.totalorder %s20, 1
    %p174 = scmp.ne.s32.totalorder %s169, %s171
    %p175 = scmp.eq.s32.totalorder %s20, 0
    %p176 = por %p174, %p175
    %p177 = scmp.ne.s32.totalorder %s169, %s171
    %p178 = scmp.eq.s32.totalorder %s25, 1
    %p179 = por %p177, %p178
    %p180 = scmp.ne.s32.totalorder %s171, %s172
    %p181 = scmp.eq.s32.totalorder %s25, 0
    %p182 = por %p180, %p181
    %p183 = scmp.ne.s32.totalorder %s171, %s172
    %p184 = scmp.eq.s32.totalorder %s26, 1
    %p185 = por %p183, %p184
    %p187 = scmp.ne.s32.totalorder %s172, %s186
    %p188 = scmp.eq.s32.totalorder %s26, 0
    %p189 = por %p187, %p188
    %s191 = sadd.s32 %s190, 1
    %p194 = scmp.eq.s32.totalorder %s20, 1
    %p195 = scmp.ne.s32.totalorder %s190, %s192
    %p196 = scmp.eq.s32.totalorder %s20, 0
    %p197 = por %p195, %p196
    %p198 = scmp.ne.s32.totalorder %s190, %s192
    %p199 = scmp.eq.s32.totalorder %s25, 1
    %p200 = por %p198, %p199
    %p201 = scmp.ne.s32.totalorder %s192, %s193
    %p202 = scmp.eq.s32.totalorder %s25, 0
    %p203 = por %p201, %p202
    %p204 = scmp.ne.s32.totalorder %s192, %s193
    %p205 = scmp.eq.s32.totalorder %s26, 1
    %p206 = por %p204, %p205
    %p208 = scmp.ne.s32.totalorder %s193, %s207
    %p209 = scmp.eq.s32.totalorder %s26, 0
    %p210 = por %p208, %p209
    %s212 = sadd.s32 %s211, 1
    %p215 = scmp.eq.s32.totalorder %s20, 1
    %p216 = scmp.ne.s32.totalorder %s211, %s213
    %p217 = scmp.eq.s32.totalorder %s20, 0
    %p218 = por %p216, %p217
    %p219 = scmp.ne.s32.totalorder %s211, %s213
    %p220 = scmp.eq.s32.totalorder %s25, 1
    %p221 = por %p219, %p220
    %p222 = scmp.ne.s32.totalorder %s213, %s214
    %p223 = scmp.eq.s32.totalorder %s25, 0
    %p224 = por %p222, %p223
    %p225 = scmp.ne.s32.totalorder %s213, %s214
    %p226 = scmp.eq.s32.totalorder %s26, 1
    %p227 = por %p225, %p226
    %p229 = scmp.ne.s32.totalorder %s214, %s228
    %p230 = scmp.eq.s32.totalorder %s26, 0
    %p231 = por %p229, %p230
    %s233 = sadd.s32 %s232, 1
    %p236 = scmp.eq.s32.totalorder %s20, 1
    %p237 = scmp.ne.s32.totalorder %s232, %s234
    %p238 = scmp.eq.s32.totalorder %s20, 0
    %p239 = por %p237, %p238
    %p240 = scmp.ne.s32.totalorder %s232, %s234
    %p241 = scmp.eq.s32.totalorder %s25, 1
    %p242 = por %p240, %p241
    %p243 = scmp.ne.s32.totalorder %s234, %s235
    %p244 = scmp.eq.s32.totalorder %s25, 0
    %p245 = por %p243, %p244
    %p246 = scmp.ne.s32.totalorder %s234, %s235
    %p247 = scmp.eq.s32.totalorder %s26, 1
    %p248 = por %p246, %p247
    %p250 = scmp.ne.s32.totalorder %s235, %s249
    %p251 = scmp.eq.s32.totalorder %s26, 0
    %p252 = por %p250, %p251
    %s254 = sadd.s32 %s253, 1
    %p257 = scmp.eq.s32.totalorder %s20, 1
    %p258 = scmp.ne.s32.totalorder %s253, %s255
    %p259 = scmp.eq.s32.totalorder %s20, 0
    %p260 = por %p258, %p259
    %p261 = scmp.ne.s32.totalorder %s253, %s255
    %p262 = scmp.eq.s32.totalorder %s25, 1
    %p263 = por %p261, %p262
    %p264 = scmp.ne.s32.totalorder %s255, %s256
    %p265 = scmp.eq.s32.totalorder %s25, 0
    %p266 = por %p264, %p265
    %p267 = scmp.ne.s32.totalorder %s255, %s256
    %p268 = scmp.eq.s32.totalorder %s26, 1
    %p269 = por %p267, %p268
    %p271 = scmp.ne.s32.totalorder %s256, %s270
    %p272 = scmp.eq.s32.totalorder %s26, 0
    %p273 = por %p271, %p272
    %s274 = ssub.s32 %s20, %s27
    %p275 = scmp.eq.s32.totalorder %s274, 0
    %s277 = sadd.s32 %s276, 1
    %s278 = scalar_select %p275, %s276, %s277
    %p281 = pneg %p275
    %p282 = scmp.eq.s32.totalorder %s20, 1
    %p283 = por %p281, %p282
    %p284 = scmp.ne.s32.totalorder %s276, %s279
    %p285 = scmp.eq.s32.totalorder %s20, 0
    %p286 = por %p284, %p285
    %p287 = scmp.ne.s32.totalorder %s276, %s279
    %p288 = scmp.eq.s32.totalorder %s25, 1
    %p289 = por %p287, %p288
    %p290 = scmp.ne.s32.totalorder %s279, %s280
    %p291 = scmp.eq.s32.totalorder %s25, 0
    %p292 = por %p290, %p291
    %p293 = scmp.ne.s32.totalorder %s279, %s280
    %p294 = scmp.eq.s32.totalorder %s26, 1
    %p295 = por %p293, %p294
    %p297 = scmp.ne.s32.totalorder %s280, %s296
    %p298 = scmp.eq.s32.totalorder %s26, 0
    %p299 = por %p297, %p298
    %s300 = ssub.s32 %s20, %s27
    %p301 = scmp.eq.s32.totalorder %s300, 0
    %s303 = sadd.s32 %s302, 1
    %s304 = scalar_select %p301, %s302, %s303
    %p307 = pneg %p301
    %p308 = scmp.eq.s32.totalorder %s20, 1
    %p309 = por %p307, %p308
    %p310 = scmp.ne.s32.totalorder %s302, %s305
    %p311 = scmp.eq.s32.totalorder %s20, 0
    %p312 = por %p310, %p311
    %p313 = scmp.ne.s32.totalorder %s302, %s305
    %p314 = scmp.eq.s32.totalorder %s25, 1
    %p315 = por %p313, %p314
    %p316 = scmp.ne.s32.totalorder %s305, %s306
    %p317 = scmp.eq.s32.totalorder %s25, 0
    %p318 = por %p316, %p317
    %p319 = scmp.ne.s32.totalorder %s305, %s306
    %p320 = scmp.eq.s32.totalorder %s26, 1
    %p321 = por %p319, %p320
    %p323 = scmp.ne.s32.totalorder %s306, %s322
    %p324 = scmp.eq.s32.totalorder %s26, 0
    %p325 = por %p323, %p324
    %s326 = ssub.s32 %s20, %s27
    %p327 = scmp.eq.s32.totalorder %s326, 0
    %s329 = sadd.s32 %s328, 1
    %s330 = scalar_select %p327, %s328, %s329
    %p333 = pneg %p327
    %p334 = scmp.eq.s32.totalorder %s20, 1
    %p335 = por %p333, %p334
    %p336 = scmp.ne.s32.totalorder %s328, %s331
    %p337 = scmp.eq.s32.totalorder %s20, 0
    %p338 = por %p336, %p337
    %p339 = scmp.ne.s32.totalorder %s328, %s331
    %p340 = scmp.eq.s32.totalorder %s25, 1
    %p341 = por %p339, %p340
    %p342 = scmp.ne.s32.totalorder %s331, %s332
    %p343 = scmp.eq.s32.totalorder %s25, 0
    %p344 = por %p342, %p343
    %p345 = scmp.ne.s32.totalorder %s331, %s332
    %p346 = scmp.eq.s32.totalorder %s26, 1
    %p347 = por %p345, %p346
    %p349 = scmp.ne.s32.totalorder %s332, %s348
    %p350 = scmp.eq.s32.totalorder %s26, 0
    %p351 = por %p349, %p350
    %p352 = scmp.le.s32.totalorder 1, %s20
    %p353 = scmp.lt.s32.totalorder %s20, 3
    %p354 = pnand %p352, %p353
    %p355 = pneg %p354
    // Predicated region
    $region9: #{dtca_forward.1} parent=5 // pred_check
      _
    $region10: #{dtca_forward.1} parent=5 // pred_check_branch
      %357 = sbr.rel (%p354) target = $region12
    $region11: #{dtca_forward.1} parent=5 // pred_region
      %s358 = ssub.s32 %s20, 1
      // Predicated region
      $region13: #{dtca_forward.1} parent=11 // pred_check
        %p359 = pneg %p119
      $region14: #{dtca_forward.1} parent=11 // pred_check_branch
        %361 = sbr.rel (%p359) target = $region16
      $region15: #{dtca_forward.1} parent=11 // pred_region
        _
      $region16: #{dtca_forward.1} parent=11 // pred_fallthru
        _
      // Predicated region
      $region17: #{dtca_forward.1} parent=11 // pred_check
        %p362 = pneg %p140
      $region18: #{dtca_forward.1} parent=11 // pred_check_branch
        %364 = sbr.rel (%p362) target = $region20
      $region19: #{dtca_forward.1} parent=11 // pred_region
        _
      $region20: #{dtca_forward.1} parent=11 // pred_fallthru
        _
      // Predicated region
      $region21: #{dtca_forward.1} parent=11 // pred_check
        %p365 = pneg %p161
      $region22: #{dtca_forward.1} parent=11 // pred_check_branch
        %367 = sbr.rel (%p365) target = $region24
      $region23: #{dtca_forward.1} parent=11 // pred_region
        _
      $region24: #{dtca_forward.1} parent=11 // pred_fallthru
        _
      // Predicated region
      $region25: #{dtca_forward.1} parent=11 // pred_check
        %p368 = pneg %p182
      $region26: #{dtca_forward.1} parent=11 // pred_check_branch
        %370 = sbr.rel (%p368) target = $region28
      $region27: #{dtca_forward.1} parent=11 // pred_region
        _
      $region28: #{dtca_forward.1} parent=11 // pred_fallthru
        _
      // Predicated region
      $region29: #{dtca_forward.1} parent=11 // pred_check
        %p371 = pneg %p203
      $region30: #{dtca_forward.1} parent=11 // pred_check_branch
        %373 = sbr.rel (%p371) target = $region32
      $region31: #{dtca_forward.1} parent=11 // pred_region
        _
      $region32: #{dtca_forward.1} parent=11 // pred_fallthru
        _
      // Predicated region
      $region33: #{dtca_forward.1} parent=11 // pred_check
        %p374 = pneg %p224
      $region34: #{dtca_forward.1} parent=11 // pred_check_branch
        %376 = sbr.rel (%p374) target = $region36
      $region35: #{dtca_forward.1} parent=11 // pred_region
        _
      $region36: #{dtca_forward.1} parent=11 // pred_fallthru
        _
      // Predicated region
      $region37: #{dtca_forward.1} parent=11 // pred_check
        %p377 = pneg %p245
      $region38: #{dtca_forward.1} parent=11 // pred_check_branch
        %379 = sbr.rel (%p377) target = $region40
      $region39: #{dtca_forward.1} parent=11 // pred_region
        _
      $region40: #{dtca_forward.1} parent=11 // pred_fallthru
        _
      // Predicated region
      $region41: #{dtca_forward.1} parent=11 // pred_check
        %p380 = pneg %p266
      $region42: #{dtca_forward.1} parent=11 // pred_check_branch
        %382 = sbr.rel (%p380) target = $region44
      $region43: #{dtca_forward.1} parent=11 // pred_region
        _
      $region44: #{dtca_forward.1} parent=11 // pred_fallthru
        _
    $region12: #{dtca_forward.1} parent=5 // pred_fallthru
      _
    %p383 = scmp.lt.s32.totalorder %s20, 2
    // Predicated region
    $region45: #{dtca_forward.1} parent=5 // pred_check
      %p384 = pneg %p383
    $region46: #{dtca_forward.1} parent=5 // pred_check_branch
      %386 = sbr.rel (%p384) target = $region48
    $region47: #{dtca_forward.1} parent=5 // pred_region
      // Predicated region
      $region49: #{dtca_forward.1} parent=47 // pred_check
        %p387 = pneg %p40
      $region50: #{dtca_forward.1} parent=47 // pred_check_branch
        %389 = sbr.rel (%p387) target = $region52
      $region51: #{dtca_forward.1} parent=47 // pred_region
        %p390 = scmp.lt.s32.totalorder %s20, 1
        %s391 = scalar_select %p390, %s20, 1
        %s392 = smul.addr %s391, 8
        %s393 = scalar_lea.vmem %s0, %s392
      $region52: #{dtca_forward.1} parent=47 // pred_fallthru
        _
      // Predicated region
      $region53: #{dtca_forward.1} parent=47 // pred_check
        %p394 = pneg %p66
      $region54: #{dtca_forward.1} parent=47 // pred_check_branch
        %396 = sbr.rel (%p394) target = $region56
      $region55: #{dtca_forward.1} parent=47 // pred_region
        %p397 = scmp.lt.s32.totalorder %s20, 1
        %s398 = scalar_select %p397, %s20, 1
        %s399 = smul.addr %s398, 8
        %s400 = scalar_lea.vmem %s1, %s399
      $region56: #{dtca_forward.1} parent=47 // pred_fallthru
        _
      // Predicated region
      $region57: #{dtca_forward.1} parent=47 // pred_check
        %p401 = pneg %p92
      $region58: #{dtca_forward.1} parent=47 // pred_check_branch
        %403 = sbr.rel (%p401) target = $region60
      $region59: #{dtca_forward.1} parent=47 // pred_region
        %p404 = scmp.lt.s32.totalorder %s20, 1
        %s405 = scalar_select %p404, %s20, 1
        %s406 = smul.addr %s405, 8
        %s407 = scalar_lea.vmem %s2, %s406
      $region60: #{dtca_forward.1} parent=47 // pred_fallthru
        _
    $region48: #{dtca_forward.1} parent=5 // pred_fallthru
      _
    %p408 = scmp.le.s32.totalorder 1, %s20
    %p409 = scmp.lt.s32.totalorder %s20, 3
    %p410 = pnand %p408, %p409
    %p411 = pneg %p410
    // Predicated region
    $region61: #{dtca_forward.1} parent=5 // pred_check
      _
    $region62: #{dtca_forward.1} parent=5 // pred_check_branch
      %413 = sbr.rel (%p410) target = $region64
    $region63: #{dtca_forward.1} parent=5 // pred_region
      %s414 = ssub.s32 %s20, 1
      %p415 = scmp.lt.s32.totalorder %s25, 1
      %s416 = scalar_select %p415, %s25, 1
      %s417 = smul.addr %s416, 8
      %s418 = scalar_lea.vmem %s0, %s417
      %p419 = pneg %p46
      %p420 = pneg %p43
      %p421 = scmp.lt.s32.totalorder %s25, 1
      %s422 = scalar_select %p421, %s25, 1
      %s423 = smul.addr %s422, 8
      %s424 = scalar_lea.vmem %s1, %s423
      %p425 = pneg %p72
      %p426 = pneg %p69
      %p427 = scmp.lt.s32.totalorder %s25, 1
      %s428 = scalar_select %p427, %s25, 1
      %s429 = smul.addr %s428, 8
      %s430 = scalar_lea.vmem %s2, %s429
      %p431 = pneg %p98
      %p432 = pneg %p95
      %p433 = pneg %p119
      %p434 = pneg %p116
      %p435 = pneg %p140
      %p436 = pneg %p137
      %p437 = pneg %p161
      %p438 = pneg %p158
      %p439 = pneg %p182
      %p440 = pneg %p179
      %p441 = pneg %p203
      %p442 = pneg %p200
      %p443 = pneg %p224
      %p444 = pneg %p221
      %p445 = pneg %p245
      %p446 = pneg %p242
      %p447 = pneg %p266
      %p448 = pneg %p263
      %p449 = pneg %p292
      %p450 = pneg %p289
      %p451 = scmp.lt.s32.totalorder %s25, 1
      %s452 = scalar_select %p451, %s25, 1
      %s453 = smul.addr %s452, 8
      %s454 = scalar_lea.vmem %s11, %s453
      %p455 = pneg %p318
      %p456 = pneg %p315
      %p457 = scmp.lt.s32.totalorder %s25, 1
      %s458 = scalar_select %p457, %s25, 1
      %s459 = smul.addr %s458, 8
      %s460 = scalar_lea.vmem %s12, %s459
      %p461 = pneg %p344
      %p462 = pneg %p341
      %p463 = scmp.lt.s32.totalorder %s25, 1
      %s464 = scalar_select %p463, %s25, 1
      %s465 = smul.addr %s464, 8
      %s466 = scalar_lea.vmem %s13, %s465
      %p467 = scmp.lt.s32.totalorder %s25, 1
      %s468 = scalar_select %p467, %s25, 1
      %s469 = smul.addr %s468, 8
      %s470 = scalar_lea.vmem %s0, %s469
      %p471 = scmp.lt.s32.totalorder %s25, 1
      %s472 = scalar_select %p471, %s25, 1
      %s473 = smul.addr %s472, 8
      %s474 = scalar_lea.vmem %s1, %s473
      %p475 = scmp.lt.s32.totalorder %s25, 1
      %s476 = scalar_select %p475, %s25, 1
      %s477 = smul.addr %s476, 8
      %s478 = scalar_lea.vmem %s2, %s477
      %p479 = scmp.lt.s32.totalorder %s25, 1
      %s480 = scalar_select %p479, %s25, 1
      %s481 = smul.addr %s480, 8
      %s482 = scalar_lea.vmem %s11, %s481
      %p483 = scmp.lt.s32.totalorder %s25, 1
      %s484 = scalar_select %p483, %s25, 1
      %s485 = smul.addr %s484, 8
      %s486 = scalar_lea.vmem %s12, %s485
      %p487 = scmp.lt.s32.totalorder %s25, 1
      %s488 = scalar_select %p487, %s25, 1
      %s489 = smul.addr %s488, 8
      %s490 = scalar_lea.vmem %s13, %s489
      %v491 = vld [vmem:[%s470] sm:$0xff]
      %v492 = vld [vmem:[%s474] sm:$0xff]
      %v493 = vld [vmem:[%s3] sm:$0xff]
      %v494 = vld [vmem:[%s3 + $0x8] sm:$0xff]
      %v495 = vld [vmem:[%s3 + $0x10] sm:$0xff]
      %v496 = vld [vmem:[%s3 + $0x18] sm:$0xff]
      %v497 = vld [vmem:[%s3 + $0x20] sm:$0xff]
      %v498 = vld [vmem:[%s3 + $0x28] sm:$0xff]
      %v499 = vld [vmem:[%s3 + $0x30] sm:$0xff]
      %v500 = vld [vmem:[%s3 + $0x38] sm:$0xff]
      %v501 = vld [vmem:[%s3 + $0x40] sm:$0xff]
      %v502 = vld [vmem:[%s3 + $0x48] sm:$0xff]
      %v503 = vld [vmem:[%s3 + $0x50] sm:$0xff]
      %v504 = vld [vmem:[%s3 + $0x58] sm:$0xff]
      %vm505 = vcmask 261120
      %v507 = vsel %vm505, %v491, 0
      %509 = vmatprep.subr.mxu0 %v494
      %510 = vmatpush1.msra.mxu0 %v493
      %511 = vmatprep.subr.mxu0 %v497
      %512 = vmatpush1.msra.mxu0 %v496
      %513 = vmatprep.subr.mxu0 %v500
      %514 = vmatpush1.msra.mxu0 %v499
      %515 = vmatprep.subr.mxu0 %v503
      %516 = vmatpush1.msra.mxu0 %v502
      %517 = vmatprep.subr.mxu0 0.0
      %518 = vmatpush1.msra.mxu0 0.0
      %519 = vmatprep.subr.mxu0 0.0
      %520 = vmatpush1.msra.mxu0 0.0
      %521 = vmatprep.subr.mxu0 0.0
      %522 = vmatpush1.msra.mxu0 0.0
      %523 = vmatprep.subr.mxu0 0.0
      %524 = vmatpush1.msra.mxu0 0.0
      %525 = vmatprep.subr.mxu0 0.0
      %526 = vmatpush1.msra.mxu0 0.0
      %527 = vmatprep.subr.mxu0 0.0
      %528 = vmatpush1.msra.mxu0 0.0
      %529 = vmatprep.subr.mxu0 0.0
      %530 = vmatpush1.msra.mxu0 0.0
      %531 = vmatprep.subr.mxu0 0.0
      %532 = vmatpush1.msra.mxu0 0.0
      %533 = vmatprep.subr.mxu0 0.0
      %534 = vmatpush1.msra.mxu0 0.0
      %535 = vmatprep.subr.mxu0 0.0
      %536 = vmatpush1.msra.mxu0 0.0
      %537 = vmatprep.subr.mxu0 0.0
      %538 = vmatpush1.msra.mxu0 0.0
      %539 = vmatprep.subr.mxu0 0.0
      %540 = vmatpush1.msra.mxu0 0.0
      %541 = vmatprep.subr.mxu0 0.0
      %542 = vmatpush1.msra.mxu0 0.0
      %543 = vmatprep.subr.mxu0 0.0
      %544 = vmatpush1.msra.mxu0 0.0
      %545 = vmatprep.subr.mxu0 0.0
      %546 = vmatpush1.msra.mxu0 0.0
      %547 = vmatprep.subr.mxu0 0.0
      %548 = vmatpush1.msra.mxu0 0.0
      %549 = vmatprep.subr.mxu0 0.0
      %550 = vmatpush1.msra.mxu0 0.0
      %551 = vmatprep.subr.mxu0 0.0
      %552 = vmatpush1.msra.mxu0 0.0
      %553 = vmatprep.subr.mxu0 0.0
      %554 = vmatpush1.msra.mxu0 0.0
      %555 = vmatprep.subr.mxu0 0.0
      %556 = vmatpush1.msra.mxu0 0.0
      %557 = vmatprep.subr.mxu0 0.0
      %558 = vmatpush1.msra.mxu0 0.0
      %559 = vmatprep.subr.mxu0 0.0
      %560 = vmatpush1.msra.mxu0 0.0
      %561 = vmatprep.subr.mxu0 0.0
      %562 = vmatpush1.msra.mxu0 0.0
      %563 = vmatprep.subr.mxu0 0.0
      %564 = vmatpush1.msra.mxu0 0.0
      %565 = vmatprep.subr.mxu0 0.0
      %566 = vmatpush1.msra.mxu0 0.0
      %567 = vmatprep.subr.mxu0 0.0
      %568 = vmatpush1.msra.mxu0 0.0
      %569 = vmatprep.subr.mxu0 0.0
      %570 = vmatpush1.msra.mxu0 0.0
      %571 = vmatprep.subr.mxu0 0.0
      %572 = vmatpush1.msra.mxu0 0.0
      %573 = vmatprep.mubr.f32.mxu0 0.0
      %574 = vmatmul.mubr.f32.gmra.mrb[0].mxu0 %v507
      %v575 = vpop.f32.mrb[0].mxu0
      %v576 = vadd.f32 0.0, %v575
      %v577 = vpop.f32.mrb[0].mxu0
      %v578 = vadd.f32 0.0, %v577
      %579 = vdwg.mxu0
      %580 = vmatprep.subr.mxu0 0.0
      %581 = vmatpush1.msra.mxu0 %v495
      %582 = vmatprep.subr.mxu0 0.0
      %583 = vmatpush1.msra.mxu0 %v498
      %584 = vmatprep.subr.mxu0 0.0
      %585 = vmatpush1.msra.mxu0 %v501
      %586 = vmatprep.subr.mxu0 0.0
      %587 = vmatpush1.msra.mxu0 %v504
      %588 = vmatprep.subr.mxu0 0.0
      %589 = vmatpush1.msra.mxu0 0.0
      %590 = vmatprep.subr.mxu0 0.0
      %591 = vmatpush1.msra.mxu0 0.0
      %592 = vmatprep.subr.mxu0 0.0
      %593 = vmatpush1.msra.mxu0 0.0
      %594 = vmatprep.subr.mxu0 0.0
      %595 = vmatpush1.msra.mxu0 0.0
      %596 = vmatprep.subr.mxu0 0.0
      %597 = vmatpush1.msra.mxu0 0.0
      %598 = vmatprep.subr.mxu0 0.0
      %599 = vmatpush1.msra.mxu0 0.0
      %600 = vmatprep.subr.mxu0 0.0
      %601 = vmatpush1.msra.mxu0 0.0
      %602 = vmatprep.subr.mxu0 0.0
      %603 = vmatpush1.msra.mxu0 0.0
      %604 = vmatprep.subr.mxu0 0.0
      %605 = vmatpush1.msra.mxu0 0.0
      %606 = vmatprep.subr.mxu0 0.0
      %607 = vmatpush1.msra.mxu0 0.0
      %608 = vmatprep.subr.mxu0 0.0
      %609 = vmatpush1.msra.mxu0 0.0
      %610 = vmatprep.subr.mxu0 0.0
      %611 = vmatpush1.msra.mxu0 0.0
      %612 = vmatprep.subr.mxu0 0.0
      %613 = vmatpush1.msra.mxu0 0.0
      %614 = vmatprep.subr.mxu0 0.0
      %615 = vmatpush1.msra.mxu0 0.0
      %616 = vmatprep.subr.mxu0 0.0
      %617 = vmatpush1.msra.mxu0 0.0
      %618 = vmatprep.subr.mxu0 0.0
      %619 = vmatpush1.msra.mxu0 0.0
      %620 = vmatprep.subr.mxu0 0.0
      %621 = vmatpush1.msra.mxu0 0.0
      %622 = vmatprep.subr.mxu0 0.0
      %623 = vmatpush1.msra.mxu0 0.0
      %624 = vmatprep.subr.mxu0 0.0
      %625 = vmatpush1.msra.mxu0 0.0
      %626 = vmatprep.subr.mxu0 0.0
      %627 = vmatpush1.msra.mxu0 0.0
      %628 = vmatprep.subr.mxu0 0.0
      %629 = vmatpush1.msra.mxu0 0.0
      %630 = vmatprep.subr.mxu0 0.0
      %631 = vmatpush1.msra.mxu0 0.0
      %632 = vmatprep.subr.mxu0 0.0
      %633 = vmatpush1.msra.mxu0 0.0
      %634 = vmatprep.subr.mxu0 0.0
      %635 = vmatpush1.msra.mxu0 0.0
      %636 = vmatprep.subr.mxu0 0.0
      %637 = vmatpush1.msra.mxu0 0.0
      %638 = vmatprep.subr.mxu0 0.0
      %639 = vmatpush1.msra.mxu0 0.0
      %640 = vmatprep.subr.mxu0 0.0
      %641 = vmatpush1.msra.mxu0 0.0
      %642 = vmatprep.subr.mxu0 0.0
      %643 = vmatpush1.msra.mxu0 0.0
      %644 = vmatprep.mubr.f32.mxu0 0.0
      %645 = vmatmul.mubr.f32.gmra.mrb[0].mxu0 %v507
      %v646 = vpop.f32.mrb[0].mxu0
      %v647 = vadd.f32 0.0, %v646
      %v648 = vpop.f32.mrb[0].mxu0
      %649 = vdwg.mxu0
      %v650 = vld [vmem:[%s10] sm:$0x1]
      %v652 = vlaneseq
      %v653 = vshrl.u32 %v652, 7
      %v654 = vsub.s32 0, %v653
      %v655 = vrot.slane %v650, %v654
      %v657 = vadd.f32 %v647, %v655
      %v658 = vld [vmem:[%s4] sm:$0xff]
      %v659 = vld [vmem:[%s4 + $0x8] sm:$0xff]
      %v660 = vld [vmem:[%s4 + $0x10] sm:$0xff]
      %v661 = vld [vmem:[%s4 + $0x18] sm:$0xff]
      %v662 = vld [vmem:[%s4 + $0x20] sm:$0xff]
      %v663 = vld [vmem:[%s4 + $0x28] sm:$0xff]
      %v664 = vld [vmem:[%s4 + $0x30] sm:$0xff]
      %v665 = vld [vmem:[%s4 + $0x38] sm:$0xff]
      %v666 = vld [vmem:[%s4 + $0x40] sm:$0xff]
      %v667 = vld [vmem:[%s4 + $0x48] sm:$0xff]
      %v668 = vld [vmem:[%s4 + $0x50] sm:$0xff]
      %v669 = vld [vmem:[%s4 + $0x58] sm:$0xff]
      %v670 = vld [vmem:[%s4 + $0x60] sm:$0xff]
      %v671 = vld [vmem:[%s4 + $0x68] sm:$0xff]
      %v672 = vld [vmem:[%s4 + $0x70] sm:$0xff]
      %v673 = vld [vmem:[%s4 + $0x78] sm:$0xff]
      %v675 = vsel %vm505, %v492, 0
      %677 = vmatprep.subr.mxu0 %v659
      %678 = vmatpush1.msra.mxu0 %v658
      %679 = vmatprep.subr.mxu0 %v663
      %680 = vmatpush1.msra.mxu0 %v662
      %681 = vmatprep.subr.mxu0 %v667
      %682 = vmatpush1.msra.mxu0 %v666
      %683 = vmatprep.subr.mxu0 %v671
      %684 = vmatpush1.msra.mxu0 %v670
      %685 = vmatprep.subr.mxu0 0.0
      %686 = vmatpush1.msra.mxu0 0.0
      %687 = vmatprep.subr.mxu0 0.0
      %688 = vmatpush1.msra.mxu0 0.0
      %689 = vmatprep.subr.mxu0 0.0
      %690 = vmatpush1.msra.mxu0 0.0
      %691 = vmatprep.subr.mxu0 0.0
      %692 = vmatpush1.msra.mxu0 0.0
      %693 = vmatprep.subr.mxu0 0.0
      %694 = vmatpush1.msra.mxu0 0.0
      %695 = vmatprep.subr.mxu0 0.0
      %696 = vmatpush1.msra.mxu0 0.0
      %697 = vmatprep.subr.mxu0 0.0
      %698 = vmatpush1.msra.mxu0 0.0
      %699 = vmatprep.subr.mxu0 0.0
      %700 = vmatpush1.msra.mxu0 0.0
      %701 = vmatprep.subr.mxu0 0.0
      %702 = vmatpush1.msra.mxu0 0.0
      %703 = vmatprep.subr.mxu0 0.0
      %704 = vmatpush1.msra.mxu0 0.0
      %705 = vmatprep.subr.mxu0 0.0
      %706 = vmatpush1.msra.mxu0 0.0
      %707 = vmatprep.subr.mxu0 0.0
      %708 = vmatpush1.msra.mxu0 0.0
      %709 = vmatprep.subr.mxu0 0.0
      %710 = vmatpush1.msra.mxu0 0.0
      %711 = vmatprep.subr.mxu0 0.0
      %712 = vmatpush1.msra.mxu0 0.0
      %713 = vmatprep.subr.mxu0 0.0
      %714 = vmatpush1.msra.mxu0 0.0
      %715 = vmatprep.subr.mxu0 0.0
      %716 = vmatpush1.msra.mxu0 0.0
      %717 = vmatprep.subr.mxu0 0.0
      %718 = vmatpush1.msra.mxu0 0.0
      %719 = vmatprep.subr.mxu0 0.0
      %720 = vmatpush1.msra.mxu0 0.0
      %721 = vmatprep.subr.mxu0 0.0
      %722 = vmatpush1.msra.mxu0 0.0
      %723 = vmatprep.subr.mxu0 0.0
      %724 = vmatpush1.msra.mxu0 0.0
      %725 = vmatprep.subr.mxu0 0.0
      %726 = vmatpush1.msra.mxu0 0.0
      %727 = vmatprep.subr.mxu0 0.0
      %728 = vmatpush1.msra.mxu0 0.0
      %729 = vmatprep.subr.mxu0 0.0
      %730 = vmatpush1.msra.mxu0 0.0
      %731 = vmatprep.subr.mxu0 0.0
      %732 = vmatpush1.msra.mxu0 0.0
      %733 = vmatprep.subr.mxu0 0.0
      %734 = vmatpush1.msra.mxu0 0.0
      %735 = vmatprep.subr.mxu0 0.0
      %736 = vmatpush1.msra.mxu0 0.0
      %737 = vmatprep.subr.mxu0 0.0
      %738 = vmatpush1.msra.mxu0 0.0
      %739 = vmatprep.subr.mxu0 0.0
      %740 = vmatpush1.msra.mxu0 0.0
      %741 = vmatprep.mubr.f32.mxu0 0.0
      %742 = vmatmul.mubr.f32.gmra.mrb[0].mxu0 %v675
      %v743 = vpop.f32.mrb[0].mxu0
      %v744 = vadd.f32 0.0, %v743
      %v745 = vpop.f32.mrb[0].mxu0
      %v746 = vadd.f32 0.0, %v745
      %747 = vdwg.mxu0
      %748 = vmatprep.subr.mxu0 %v661
      %749 = vmatpush1.msra.mxu0 %v660
      %750 = vmatprep.subr.mxu0 %v665
      %751 = vmatpush1.msra.mxu0 %v664
      %752 = vmatprep.subr.mxu0 %v669
      %753 = vmatpush1.msra.mxu0 %v668
      %754 = vmatprep.subr.mxu0 %v673
      %755 = vmatpush1.msra.mxu0 %v672
      %756 = vmatprep.subr.mxu0 0.0
      %757 = vmatpush1.msra.mxu0 0.0
      %758 = vmatprep.subr.mxu0 0.0
      %759 = vmatpush1.msra.mxu0 0.0
      %760 = vmatprep.subr.mxu0 0.0
      %761 = vmatpush1.msra.mxu0 0.0
      %762 = vmatprep.subr.mxu0 0.0
      %763 = vmatpush1.msra.mxu0 0.0
      %764 = vmatprep.subr.mxu0 0.0
      %765 = vmatpush1.msra.mxu0 0.0
      %766 = vmatprep.subr.mxu0 0.0
      %767 = vmatpush1.msra.mxu0 0.0
      %768 = vmatprep.subr.mxu0 0.0
      %769 = vmatpush1.msra.mxu0 0.0
      %770 = vmatprep.subr.mxu0 0.0
      %771 = vmatpush1.msra.mxu0 0.0
      %772 = vmatprep.subr.mxu0 0.0
      %773 = vmatpush1.msra.mxu0 0.0
      %774 = vmatprep.subr.mxu0 0.0
      %775 = vmatpush1.msra.mxu0 0.0
      %776 = vmatprep.subr.mxu0 0.0
      %777 = vmatpush1.msra.mxu0 0.0
      %778 = vmatprep.subr.mxu0 0.0
      %779 = vmatpush1.msra.mxu0 0.0
      %780 = vmatprep.subr.mxu0 0.0
      %781 = vmatpush1.msra.mxu0 0.0
      %782 = vmatprep.subr.mxu0 0.0
      %783 = vmatpush1.msra.mxu0 0.0
      %784 = vmatprep.subr.mxu0 0.0
      %785 = vmatpush1.msra.mxu0 0.0
      %786 = vmatprep.subr.mxu0 0.0
      %787 = vmatpush1.msra.mxu0 0.0
      %788 = vmatprep.subr.mxu0 0.0
      %789 = vmatpush1.msra.mxu0 0.0
      %790 = vmatprep.subr.mxu0 0.0
      %791 = vmatpush1.msra.mxu0 0.0
      %792 = vmatprep.subr.mxu0 0.0
      %793 = vmatpush1.msra.mxu0 0.0
      %794 = vmatprep.subr.mxu0 0.0
      %795 = vmatpush1.msra.mxu0 0.0
      %796 = vmatprep.subr.mxu0 0.0
      %797 = vmatpush1.msra.mxu0 0.0
      %798 = vmatprep.subr.mxu0 0.0
      %799 = vmatpush1.msra.mxu0 0.0
      %800 = vmatprep.subr.mxu0 0.0
      %801 = vmatpush1.msra.mxu0 0.0
      %802 = vmatprep.subr.mxu0 0.0
      %803 = vmatpush1.msra.mxu0 0.0
      %804 = vmatprep.subr.mxu0 0.0
      %805 = vmatpush1.msra.mxu0 0.0
      %806 = vmatprep.subr.mxu0 0.0
      %807 = vmatpush1.msra.mxu0 0.0
      %808 = vmatprep.subr.mxu0 0.0
      %809 = vmatpush1.msra.mxu0 0.0
      %810 = vmatprep.subr.mxu0 0.0
      %811 = vmatpush1.msra.mxu0 0.0
      %812 = vmatprep.mubr.f32.mxu0 0.0
      %813 = vmatmul.mubr.f32.gmra.mrb[0].mxu0 %v675
      %v814 = vpop.f32.mrb[0].mxu0
      %v815 = vadd.f32 0.0, %v814
      %v816 = vpop.f32.mrb[0].mxu0
      %v817 = vadd.f32 0.0, %v816
      %818 = vdwg.mxu0
      %v819 = vld [vmem:[%s5] sm:$0xff]
      %v820 = vld [vmem:[%s5 + $0x8] sm:$0xff]
      %v821 = vld [vmem:[%s5 + $0x10] sm:$0xff]
      %v822 = vld [vmem:[%s5 + $0x18] sm:$0xff]
      %v823 = vld [vmem:[%s5 + $0x20] sm:$0xff]
      %v824 = vld [vmem:[%s5 + $0x28] sm:$0xff]
      %v825 = vld [vmem:[%s5 + $0x30] sm:$0xff]
      %v826 = vld [vmem:[%s5 + $0x38] sm:$0xff]
      %v827 = vld [vmem:[%s5 + $0x40] sm:$0xff]
      %v828 = vld [vmem:[%s5 + $0x48] sm:$0xff]
      %v829 = vld [vmem:[%s5 + $0x50] sm:$0xff]
      %v830 = vld [vmem:[%s5 + $0x58] sm:$0xff]
      %v831 = vld [vmem:[%s5 + $0x60] sm:$0xff]
      %v832 = vld [vmem:[%s5 + $0x68] sm:$0xff]
      %v833 = vld [vmem:[%s5 + $0x70] sm:$0xff]
      %v834 = vld [vmem:[%s5 + $0x78] sm:$0xff]
      %v835 = vld [vmem:[%s5 + $0x80] sm:$0xff]
      %v836 = vld [vmem:[%s5 + $0x88] sm:$0xff]
      %v837 = vld [vmem:[%s5 + $0x90] sm:$0xff]
      %v838 = vld [vmem:[%s5 + $0x98] sm:$0xff]
      %v839 = vld [vmem:[%s5 + $0xa0] sm:$0xff]
      %v840 = vld [vmem:[%s5 + $0xa8] sm:$0xff]
      %v841 = vld [vmem:[%s5 + $0xb0] sm:$0xff]
      %v842 = vld [vmem:[%s5 + $0xb8] sm:$0xff]
      %v843 = vld [vmem:[%s5 + $0xc0] sm:$0xff]
      %v844 = vld [vmem:[%s5 + $0xc8] sm:$0xff]
      %v845 = vld [vmem:[%s5 + $0xd0] sm:$0xff]
      %v846 = vld [vmem:[%s5 + $0xd8] sm:$0xff]
      %v847 = vld [vmem:[%s5 + $0xe0] sm:$0xff]
      %v848 = vld [vmem:[%s5 + $0xe8] sm:$0xff]
      %v849 = vld [vmem:[%s5 + $0xf0] sm:$0xff]
      %v850 = vld [vmem:[%s5 + $0xf8] sm:$0xff]
      %v852 = vsel %vm505, %v576, 0
      %v855 = vsel %vm505, %v744, 0
      %857 = vmatprep.subr.mxu0 0.0
      %858 = vmatpush1.xpose.msra.mxu0 %v855
      %859 = vmatprep.subr.mxu0 0.0
      %860 = vmatpush1.xpose.msra.mxu0 0.0
      %861 = vmatprep.subr.mxu0 0.0
      %862 = vmatpush1.xpose.msra.mxu0 0.0
      %863 = vmatprep.subr.mxu0 0.0
      %864 = vmatpush1.xpose.msra.mxu0 0.0
      %865 = vmatprep.subr.mxu0 0.0
      %866 = vmatpush1.xpose.msra.mxu0 0.0
      %867 = vmatprep.subr.mxu0 0.0
      %868 = vmatpush1.xpose.msra.mxu0 0.0
      %869 = vmatprep.subr.mxu0 0.0
      %870 = vmatpush1.xpose.msra.mxu0 0.0
      %871 = vmatprep.subr.mxu0 0.0
      %872 = vmatpush1.xpose.msra.mxu0 0.0
      %873 = vmatprep.subr.mxu0 0.0
      %874 = vmatpush1.xpose.msra.mxu0 0.0
      %875 = vmatprep.subr.mxu0 0.0
      %876 = vmatpush1.xpose.msra.mxu0 0.0
      %877 = vmatprep.subr.mxu0 0.0
      %878 = vmatpush1.xpose.msra.mxu0 0.0
      %879 = vmatprep.subr.mxu0 0.0
      %880 = vmatpush1.xpose.msra.mxu0 0.0
      %881 = vmatprep.subr.mxu0 0.0
      %882 = vmatpush1.xpose.msra.mxu0 0.0
      %883 = vmatprep.subr.mxu0 0.0
      %884 = vmatpush1.xpose.msra.mxu0 0.0
      %885 = vmatprep.subr.mxu0 0.0
      %886 = vmatpush1.xpose.msra.mxu0 0.0
      %887 = vmatprep.subr.mxu0 0.0
      %888 = vmatpush1.xpose.msra.mxu0 0.0
      %889 = vmatprep.subr.mxu0 0.0
      %890 = vmatpush1.xpose.msra.mxu0 0.0
      %891 = vmatprep.subr.mxu0 0.0
      %892 = vmatpush1.xpose.msra.mxu0 0.0
      %893 = vmatprep.subr.mxu0 0.0
      %894 = vmatpush1.xpose.msra.mxu0 0.0
      %895 = vmatprep.subr.mxu0 0.0
      %896 = vmatpush1.xpose.msra.mxu0 0.0
      %897 = vmatprep.subr.mxu0 0.0
      %898 = vmatpush1.xpose.msra.mxu0 0.0
      %899 = vmatprep.subr.mxu0 0.0
      %900 = vmatpush1.xpose.msra.mxu0 0.0
      %901 = vmatprep.subr.mxu0 0.0
      %902 = vmatpush1.xpose.msra.mxu0 0.0
      %903 = vmatprep.subr.mxu0 0.0
      %904 = vmatpush1.xpose.msra.mxu0 0.0
      %905 = vmatprep.subr.mxu0 0.0
      %906 = vmatpush1.xpose.msra.mxu0 0.0
      %907 = vmatprep.subr.mxu0 0.0
      %908 = vmatpush1.xpose.msra.mxu0 0.0
      %909 = vmatprep.subr.mxu0 0.0
      %910 = vmatpush1.xpose.msra.mxu0 0.0
      %911 = vmatprep.subr.mxu0 0.0
      %912 = vmatpush1.xpose.msra.mxu0 0.0
      %913 = vmatprep.subr.mxu0 0.0
      %914 = vmatpush1.xpose.msra.mxu0 0.0
      %915 = vmatprep.subr.mxu0 0.0
      %916 = vmatpush1.xpose.msra.mxu0 0.0
      %917 = vmatprep.subr.mxu0 0.0
      %918 = vmatpush1.xpose.msra.mxu0 0.0
      %919 = vmatprep.subr.mxu0 0.0
      %920 = vmatpush1.xpose.msra.mxu0 0.0
      %921 = vmatprep.mubr.f32.mxu0 0.0
      %922 = vmatmul.mubr.f32.gmra.mrb[0].mxu0 %v852
      %v923 = vpop.f32.mrb[0].mxu0
      %v924 = vadd.f32 0.0, %v923
      %v925 = vpop.f32.mrb[0].mxu0
      %926 = vdwg.mxu0
      %v927 = vrcp.pop 5.656854
      %v928 = vmul.f32 %v924, %v927
      %vm929 = vcmask 64512
      %v930 = vsel %vm929, %v928, -inf
      %931 = vmax.xlane.f32.xlu0 %v930
      %v932 = vpop.xlane.xlu0 %931
      %v933 = vsub.f32 %v928, %v932
      %v934 = vmul.f32 %v933, 1.442695
      %v935 = vpow.pop %v934
      %v936 = vsel %vm929, %v935, 0.0
      %937 = vadd.xlane.f32.xlu0 %v936
      %v938 = vpop.xlane.xlu0 %937
      %v939 = vrcp.pop %v938
      %v940 = vmul.f32 %v935, %v939
      %v942 = vsel %vm929, %v940, 0
      %944 = vmatprep.subr.mxu0 0.0
      %945 = vmatpush1.msra.mxu0 %v815
      %946 = vmatprep.subr.mxu0 0.0
      %947 = vmatpush1.msra.mxu0 0.0
      %948 = vmatprep.subr.mxu0 0.0
      %949 = vmatpush1.msra.mxu0 0.0
      %950 = vmatprep.subr.mxu0 0.0
      %951 = vmatpush1.msra.mxu0 0.0
      %952 = vmatprep.subr.mxu0 0.0
      %953 = vmatpush1.msra.mxu0 0.0
      %954 = vmatprep.subr.mxu0 0.0
      %955 = vmatpush1.msra.mxu0 0.0
      %956 = vmatprep.subr.mxu0 0.0
      %957 = vmatpush1.msra.mxu0 0.0
      %958 = vmatprep.subr.mxu0 0.0
      %959 = vmatpush1.msra.mxu0 0.0
      %960 = vmatprep.subr.mxu0 0.0
      %961 = vmatpush1.msra.mxu0 0.0
      %962 = vmatprep.subr.mxu0 0.0
      %963 = vmatpush1.msra.mxu0 0.0
      %964 = vmatprep.subr.mxu0 0.0
      %965 = vmatpush1.msra.mxu0 0.0
      %966 = vmatprep.subr.mxu0 0.0
      %967 = vmatpush1.msra.mxu0 0.0
      %968 = vmatprep.subr.mxu0 0.0
      %969 = vmatpush1.msra.mxu0 0.0
      %970 = vmatprep.subr.mxu0 0.0
      %971 = vmatpush1.msra.mxu0 0.0
      %972 = vmatprep.subr.mxu0 0.0
      %973 = vmatpush1.msra.mxu0 0.0
      %974 = vmatprep.subr.mxu0 0.0
      %975 = vmatpush1.msra.mxu0 0.0
      %976 = vmatprep.subr.mxu0 0.0
      %977 = vmatpush1.msra.mxu0 0.0
      %978 = vmatprep.subr.mxu0 0.0
      %979 = vmatpush1.msra.mxu0 0.0
      %980 = vmatprep.subr.mxu0 0.0
      %981 = vmatpush1.msra.mxu0 0.0
      %982 = vmatprep.subr.mxu0 0.0
      %983 = vmatpush1.msra.mxu0 0.0
      %984 = vmatprep.subr.mxu0 0.0
      %985 = vmatpush1.msra.mxu0 0.0
      %986 = vmatprep.subr.mxu0 0.0
      %987 = vmatpush1.msra.mxu0 0.0
      %988 = vmatprep.subr.mxu0 0.0
      %989 = vmatpush1.msra.mxu0 0.0
      %990 = vmatprep.subr.mxu0 0.0
      %991 = vmatpush1.msra.mxu0 0.0
      %992 = vmatprep.subr.mxu0 0.0
      %993 = vmatpush1.msra.mxu0 0.0
      %994 = vmatprep.subr.mxu0 0.0
      %995 = vmatpush1.msra.mxu0 0.0
      %996 = vmatprep.subr.mxu0 0.0
      %997 = vmatpush1.msra.mxu0 0.0
      %998 = vmatprep.subr.mxu0 0.0
      %999 = vmatpush1.msra.mxu0 0.0
      %1000 = vmatprep.subr.mxu0 0.0
      %1001 = vmatpush1.msra.mxu0 0.0
      %1002 = vmatprep.subr.mxu0 0.0
      %1003 = vmatpush1.msra.mxu0 0.0
      %1004 = vmatprep.subr.mxu0 0.0
      %1005 = vmatpush1.msra.mxu0 0.0
      %1006 = vmatprep.subr.mxu0 0.0
      %1007 = vmatpush1.msra.mxu0 0.0
      %1008 = vmatprep.mubr.f32.mxu0 0.0
      %1009 = vmatmul.mubr.f32.gmra.mrb[0].mxu0 %v942
      %v1010 = vpop.f32.mrb[0].mxu0
      %v1011 = vadd.f32 0.0, %v1010
      %v1012 = vpop.f32.mrb[0].mxu0
      %1013 = vdwg.mxu0
      %1014 = vrot.lane.b32.xlu0 %v576, 96
      %v1015 = vpop.permute.xlu0 %1014
      %1016 = vrot.lane.b32.xlu0 %v744, 96
      %v1017 = vpop.permute.xlu0 %1016
      %v1018 = vsel %vm505, %v1015, 0
      %v1020 = vsel %vm505, %v1017, 0
      %1022 = vmatprep.subr.mxu0 0.0
      %1023 = vmatpush1.xpose.msra.mxu0 %v1020
      %1024 = vmatprep.subr.mxu0 0.0
      %1025 = vmatpush1.xpose.msra.mxu0 0.0
      %1026 = vmatprep.subr.mxu0 0.0
      %1027 = vmatpush1.xpose.msra.mxu0 0.0
      %1028 = vmatprep.subr.mxu0 0.0
      %1029 = vmatpush1.xpose.msra.mxu0 0.0
      %1030 = vmatprep.subr.mxu0 0.0
      %1031 = vmatpush1.xpose.msra.mxu0 0.0
      %1032 = vmatprep.subr.mxu0 0.0
      %1033 = vmatpush1.xpose.msra.mxu0 0.0
      %1034 = vmatprep.subr.mxu0 0.0
      %1035 = vmatpush1.xpose.msra.mxu0 0.0
      %1036 = vmatprep.subr.mxu0 0.0
      %1037 = vmatpush1.xpose.msra.mxu0 0.0
      %1038 = vmatprep.subr.mxu0 0.0
      %1039 = vmatpush1.xpose.msra.mxu0 0.0
      %1040 = vmatprep.subr.mxu0 0.0
      %1041 = vmatpush1.xpose.msra.mxu0 0.0
      %1042 = vmatprep.subr.mxu0 0.0
      %1043 = vmatpush1.xpose.msra.mxu0 0.0
      %1044 = vmatprep.subr.mxu0 0.0
      %1045 = vmatpush1.xpose.msra.mxu0 0.0
      %1046 = vmatprep.subr.mxu0 0.0
      %1047 = vmatpush1.xpose.msra.mxu0 0.0
      %1048 = vmatprep.subr.mxu0 0.0
      %1049 = vmatpush1.xpose.msra.mxu0 0.0
      %1050 = vmatprep.subr.mxu0 0.0
      %1051 = vmatpush1.xpose.msra.mxu0 0.0
      %1052 = vmatprep.subr.mxu0 0.0
      %1053 = vmatpush1.xpose.msra.mxu0 0.0
      %1054 = vmatprep.subr.mxu0 0.0
      %1055 = vmatpush1.xpose.msra.mxu0 0.0
      %1056 = vmatprep.subr.mxu0 0.0
      %1057 = vmatpush1.xpose.msra.mxu0 0.0
      %1058 = vmatprep.subr.mxu0 0.0
      %1059 = vmatpush1.xpose.msra.mxu0 0.0
      %1060 = vmatprep.subr.mxu0 0.0
      %1061 = vmatpush1.xpose.msra.mxu0 0.0
      %1062 = vmatprep.subr.mxu0 0.0
      %1063 = vmatpush1.xpose.msra.mxu0 0.0
      %1064 = vmatprep.subr.mxu0 0.0
      %1065 = vmatpush1.xpose.msra.mxu0 0.0
      %1066 = vmatprep.subr.mxu0 0.0
      %1067 = vmatpush1.xpose.msra.mxu0 0.0
      %1068 = vmatprep.subr.mxu0 0.0
      %1069 = vmatpush1.xpose.msra.mxu0 0.0
      %1070 = vmatprep.subr.mxu0 0.0
      %1071 = vmatpush1.xpose.msra.mxu0 0.0
      %1072 = vmatprep.subr.mxu0 0.0
      %1073 = vmatpush1.xpose.msra.mxu0 0.0
      %1074 = vmatprep.subr.mxu0 0.0
      %1075 = vmatpush1.xpose.msra.mxu0 0.0
      %1076 = vmatprep.subr.mxu0 0.0
      %1077 = vmatpush1.xpose.msra.mxu0 0.0
      %1078 = vmatprep.subr.mxu0 0.0
      %1079 = vmatpush1.xpose.msra.mxu0 0.0
      %1080 = vmatprep.subr.mxu0 0.0
      %1081 = vmatpush1.xpose.msra.mxu0 0.0
      %1082 = vmatprep.subr.mxu0 0.0
      %1083 = vmatpush1.xpose.msra.mxu0 0.0
      %1084 = vmatprep.subr.mxu0 0.0
      %1085 = vmatpush1.xpose.msra.mxu0 0.0
      %1086 = vmatprep.mubr.f32.mxu0 0.0
      %1087 = vmatmul.mubr.f32.gmra.mrb[0].mxu0 %v1018
      %v1088 = vpop.f32.mrb[0].mxu0
      %v1089 = vadd.f32 0.0, %v1088
      %v1090 = vpop.f32.mrb[0].mxu0
      %1091 = vdwg.mxu0
      %v1092 = vmul.f32 %v1089, %v927
      %v1093 = vsel %vm929, %v1092, -inf
      %1094 = vmax.xlane.f32.xlu0 %v1093
      %v1095 = vpop.xlane.xlu0 %1094
      %v1096 = vsub.f32 %v1092, %v1095
      %v1097 = vmul.f32 %v1096, 1.442695
      %v1098 = vpow.pop %v1097
      %v1099 = vsel %vm929, %v1098, 0.0
      %1100 = vadd.xlane.f32.xlu0 %v1099
      %v1101 = vpop.xlane.xlu0 %1100
      %v1102 = vrcp.pop %v1101
      %v1103 = vmul.f32 %v1098, %v1102
      %1105 = vrot.lane.b32.xlu0 %v815, 96
      %v1106 = vpop.permute.xlu0 %1105
      %v1109 = vsel %vm929, %v1103, 0
      %1111 = vmatprep.subr.mxu0 0.0
      %1112 = vmatpush1.msra.mxu0 %v1106
      %1113 = vmatprep.subr.mxu0 0.0
      %1114 = vmatpush1.msra.mxu0 0.0
      %1115 = vmatprep.subr.mxu0 0.0
      %1116 = vmatpush1.msra.mxu0 0.0
      %1117 = vmatprep.subr.mxu0 0.0
      %1118 = vmatpush1.msra.mxu0 0.0
      %1119 = vmatprep.subr.mxu0 0.0
      %1120 = vmatpush1.msra.mxu0 0.0
      %1121 = vmatprep.subr.mxu0 0.0
      %1122 = vmatpush1.msra.mxu0 0.0
      %1123 = vmatprep.subr.mxu0 0.0
      %1124 = vmatpush1.msra.mxu0 0.0
      %1125 = vmatprep.subr.mxu0 0.0
      %1126 = vmatpush1.msra.mxu0 0.0
      %1127 = vmatprep.subr.mxu0 0.0
      %1128 = vmatpush1.msra.mxu0 0.0
      %1129 = vmatprep.subr.mxu0 0.0
      %1130 = vmatpush1.msra.mxu0 0.0
      %1131 = vmatprep.subr.mxu0 0.0
      %1132 = vmatpush1.msra.mxu0 0.0
      %1133 = vmatprep.subr.mxu0 0.0
      %1134 = vmatpush1.msra.mxu0 0.0
      %1135 = vmatprep.subr.mxu0 0.0
      %1136 = vmatpush1.msra.mxu0 0.0
      %1137 = vmatprep.subr.mxu0 0.0
      %1138 = vmatpush1.msra.mxu0 0.0
      %1139 = vmatprep.subr.mxu0 0.0
      %1140 = vmatpush1.msra.mxu0 0.0
      %1141 = vmatprep.subr.mxu0 0.0
      %1142 = vmatpush1.msra.mxu0 0.0
      %1143 = vmatprep.subr.mxu0 0.0
      %1144 = vmatpush1.msra.mxu0 0.0
      %1145 = vmatprep.subr.mxu0 0.0
      %1146 = vmatpush1.msra.mxu0 0.0
      %1147 = vmatprep.subr.mxu0 0.0
      %1148 = vmatpush1.msra.mxu0 0.0
      %1149 = vmatprep.subr.mxu0 0.0
      %1150 = vmatpush1.msra.mxu0 0.0
      %1151 = vmatprep.subr.mxu0 0.0
      %1152 = vmatpush1.msra.mxu0 0.0
      %1153 = vmatprep.subr.mxu0 0.0
      %1154 = vmatpush1.msra.mxu0 0.0
      %1155 = vmatprep.subr.mxu0 0.0
      %1156 = vmatpush1.msra.mxu0 0.0
      %1157 = vmatprep.subr.mxu0 0.0
      %1158 = vmatpush1.msra.mxu0 0.0
      %1159 = vmatprep.subr.mxu0 0.0
      %1160 = vmatpush1.msra.mxu0 0.0
      %1161 = vmatprep.subr.mxu0 0.0
      %1162 = vmatpush1.msra.mxu0 0.0
      %1163 = vmatprep.subr.mxu0 0.0
      %1164 = vmatpush1.msra.mxu0 0.0
      %1165 = vmatprep.subr.mxu0 0.0
      %1166 = vmatpush1.msra.mxu0 0.0
      %1167 = vmatprep.subr.mxu0 0.0
      %1168 = vmatpush1.msra.mxu0 0.0
      %1169 = vmatprep.subr.mxu0 0.0
      %1170 = vmatpush1.msra.mxu0 0.0
      %1171 = vmatprep.subr.mxu0 0.0
      %1172 = vmatpush1.msra.mxu0 0.0
      %1173 = vmatprep.subr.mxu0 0.0
      %1174 = vmatpush1.msra.mxu0 0.0
      %1175 = vmatprep.mubr.f32.mxu0 0.0
      %1176 = vmatmul.mubr.f32.gmra.mrb[0].mxu0 %v1109
      %v1177 = vpop.f32.mrb[0].mxu0
      %v1178 = vadd.f32 0.0, %v1177
      %v1179 = vpop.f32.mrb[0].mxu0
      %1180 = vdwg.mxu0
      %v1182 = vsel %vm505, %v1178, 0
      %1184 = vmatprep.subr.mxu0 0.0
      %1185 = vmatpush1.msra.mxu0 %v823
      %1186 = vmatprep.subr.mxu0 0.0
      %1187 = vmatpush1.msra.mxu0 %v824
      %1188 = vmatprep.subr.mxu0 0.0
      %1189 = vmatpush1.msra.mxu0 %v825
      %1190 = vmatprep.subr.mxu0 0.0
      %1191 = vmatpush1.msra.mxu0 %v826
      %1192 = vmatprep.subr.mxu0 0.0
      %1193 = vmatpush1.msra.mxu0 0.0
      %1194 = vmatprep.subr.mxu0 0.0
      %1195 = vmatpush1.msra.mxu0 0.0
      %1196 = vmatprep.subr.mxu0 0.0
      %1197 = vmatpush1.msra.mxu0 0.0
      %1198 = vmatprep.subr.mxu0 0.0
      %1199 = vmatpush1.msra.mxu0 0.0
      %1200 = vmatprep.subr.mxu0 0.0
      %1201 = vmatpush1.msra.mxu0 0.0
      %1202 = vmatprep.subr.mxu0 0.0
      %1203 = vmatpush1.msra.mxu0 0.0
      %1204 = vmatprep.subr.mxu0 0.0
      %1205 = vmatpush1.msra.mxu0 0.0
      %1206 = vmatprep.subr.mxu0 0.0
      %1207 = vmatpush1.msra.mxu0 0.0
      %1208 = vmatprep.subr.mxu0 0.0
      %1209 = vmatpush1.msra.mxu0 0.0
      %1210 = vmatprep.subr.mxu0 0.0
      %1211 = vmatpush1.msra.mxu0 0.0
      %1212 = vmatprep.subr.mxu0 0.0
      %1213 = vmatpush1.msra.mxu0 0.0
      %1214 = vmatprep.subr.mxu0 0.0
      %1215 = vmatpush1.msra.mxu0 0.0
      %1216 = vmatprep.subr.mxu0 0.0
      %1217 = vmatpush1.msra.mxu0 0.0
      %1218 = vmatprep.subr.mxu0 0.0
      %1219 = vmatpush1.msra.mxu0 0.0
      %1220 = vmatprep.subr.mxu0 0.0
      %1221 = vmatpush1.msra.mxu0 0.0
      %1222 = vmatprep.subr.mxu0 0.0
      %1223 = vmatpush1.msra.mxu0 0.0
      %1224 = vmatprep.subr.mxu0 0.0
      %1225 = vmatpush1.msra.mxu0 0.0
      %1226 = vmatprep.subr.mxu0 0.0
      %1227 = vmatpush1.msra.mxu0 0.0
      %1228 = vmatprep.subr.mxu0 0.0
      %1229 = vmatpush1.msra.mxu0 0.0
      %1230 = vmatprep.subr.mxu0 0.0
      %1231 = vmatpush1.msra.mxu0 0.0
      %1232 = vmatprep.subr.mxu0 0.0
      %1233 = vmatpush1.msra.mxu0 0.0
      %1234 = vmatprep.subr.mxu0 0.0
      %1235 = vmatpush1.msra.mxu0 0.0
      %1236 = vmatprep.subr.mxu0 0.0
      %1237 = vmatpush1.msra.mxu0 0.0
      %1238 = vmatprep.subr.mxu0 0.0
      %1239 = vmatpush1.msra.mxu0 0.0
      %1240 = vmatprep.subr.mxu0 0.0
      %1241 = vmatpush1.msra.mxu0 0.0
      %1242 = vmatprep.subr.mxu0 0.0
      %1243 = vmatpush1.msra.mxu0 0.0
      %1244 = vmatprep.subr.mxu0 0.0
      %1245 = vmatpush1.msra.mxu0 0.0
      %1246 = vmatprep.subr.mxu0 0.0
      %1247 = vmatpush1.msra.mxu0 0.0
      %1248 = vmatprep.mubr.f32.mxu0 0.0
      %1249 = vmatmul.mubr.f32.gmra.mrb[0].mxu0 %v1182
      %v1250 = vpop.f32.mrb[0].mxu0
      %v1251 = vadd.f32 0.0, %v1250
      %v1252 = vpop.f32.mrb[0].mxu0
      %1253 = vdwg.mxu0
      %v1255 = vsel %vm505, %v1011, 0
      %1257 = vmatprep.subr.mxu0 0.0
      %1258 = vmatpush1.msra.mxu0 %v819
      %1259 = vmatprep.subr.mxu0 0.0
      %1260 = vmatpush1.msra.mxu0 %v820
      %1261 = vmatprep.subr.mxu0 0.0
      %1262 = vmatpush1.msra.mxu0 %v821
      %1263 = vmatprep.subr.mxu0 0.0
      %1264 = vmatpush1.msra.mxu0 %v822
      %1265 = vmatprep.subr.mxu0 0.0
      %1266 = vmatpush1.msra.mxu0 0.0
      %1267 = vmatprep.subr.mxu0 0.0
      %1268 = vmatpush1.msra.mxu0 0.0
      %1269 = vmatprep.subr.mxu0 0.0
      %1270 = vmatpush1.msra.mxu0 0.0
      %1271 = vmatprep.subr.mxu0 0.0
      %1272 = vmatpush1.msra.mxu0 0.0
      %1273 = vmatprep.subr.mxu0 0.0
      %1274 = vmatpush1.msra.mxu0 0.0
      %1275 = vmatprep.subr.mxu0 0.0
      %1276 = vmatpush1.msra.mxu0 0.0
      %1277 = vmatprep.subr.mxu0 0.0
      %1278 = vmatpush1.msra.mxu0 0.0
      %1279 = vmatprep.subr.mxu0 0.0
      %1280 = vmatpush1.msra.mxu0 0.0
      %1281 = vmatprep.subr.mxu0 0.0
      %1282 = vmatpush1.msra.mxu0 0.0
      %1283 = vmatprep.subr.mxu0 0.0
      %1284 = vmatpush1.msra.mxu0 0.0
      %1285 = vmatprep.subr.mxu0 0.0
      %1286 = vmatpush1.msra.mxu0 0.0
      %1287 = vmatprep.subr.mxu0 0.0
      %1288 = vmatpush1.msra.mxu0 0.0
      %1289 = vmatprep.subr.mxu0 0.0
      %1290 = vmatpush1.msra.mxu0 0.0
      %1291 = vmatprep.subr.mxu0 0.0
      %1292 = vmatpush1.msra.mxu0 0.0
      %1293 = vmatprep.subr.mxu0 0.0
      %1294 = vmatpush1.msra.mxu0 0.0
      %1295 = vmatprep.subr.mxu0 0.0
      %1296 = vmatpush1.msra.mxu0 0.0
      %1297 = vmatprep.subr.mxu0 0.0
      %1298 = vmatpush1.msra.mxu0 0.0
      %1299 = vmatprep.subr.mxu0 0.0
      %1300 = vmatpush1.msra.mxu0 0.0
      %1301 = vmatprep.subr.mxu0 0.0
      %1302 = vmatpush1.msra.mxu0 0.0
      %1303 = vmatprep.subr.mxu0 0.0
      %1304 = vmatpush1.msra.mxu0 0.0
      %1305 = vmatprep.subr.mxu0 0.0
      %1306 = vmatpush1.msra.mxu0 0.0
      %1307 = vmatprep.subr.mxu0 0.0
      %1308 = vmatpush1.msra.mxu0 0.0
      %1309 = vmatprep.subr.mxu0 0.0
      %1310 = vmatpush1.msra.mxu0 0.0
      %1311 = vmatprep.subr.mxu0 0.0
      %1312 = vmatpush1.msra.mxu0 0.0
      %1313 = vmatprep.subr.mxu0 0.0
      %1314 = vmatpush1.msra.mxu0 0.0
      %1315 = vmatprep.subr.mxu0 0.0
      %1316 = vmatpush1.msra.mxu0 0.0
      %1317 = vmatprep.subr.mxu0 0.0
      %1318 = vmatpush1.msra.mxu0 0.0
      %1319 = vmatprep.subr.mxu0 0.0
      %1320 = vmatpush1.msra.mxu0 0.0
      %1321 = vmatprep.mubr.f32.mxu0 0.0
      %1322 = vmatmul.mubr.f32.gmra.mrb[0].mxu0 %v1255
      %v1323 = vpop.f32.mrb[0].mxu0
      %v1324 = vadd.f32 %v1251, %v1323
      %v1325 = vpop.f32.mrb[0].mxu0
      %1326 = vdwg.mxu0
      %1327 = vrot.lane.b32.xlu0 %v576, 64
      %v1328 = vpop.permute.xlu0 %1327
      %1329 = vrot.lane.b32.xlu0 %v744, 64
      %v1330 = vpop.permute.xlu0 %1329
      %v1331 = vsel %vm505, %v1328, 0
      %v1333 = vsel %vm505, %v1330, 0
      %1335 = vmatprep.subr.mxu0 0.0
      %1336 = vmatpush1.xpose.msra.mxu0 %v1333
      %1337 = vmatprep.subr.mxu0 0.0
      %1338 = vmatpush1.xpose.msra.mxu0 0.0
      %1339 = vmatprep.subr.mxu0 0.0
      %1340 = vmatpush1.xpose.msra.mxu0 0.0
      %1341 = vmatprep.subr.mxu0 0.0
      %1342 = vmatpush1.xpose.msra.mxu0 0.0
      %1343 = vmatprep.subr.mxu0 0.0
      %1344 = vmatpush1.xpose.msra.mxu0 0.0
      %1345 = vmatprep.subr.mxu0 0.0
      %1346 = vmatpush1.xpose.msra.mxu0 0.0
      %1347 = vmatprep.subr.mxu0 0.0
      %1348 = vmatpush1.xpose.msra.mxu0 0.0
      %1349 = vmatprep.subr.mxu0 0.0
      %1350 = vmatpush1.xpose.msra.mxu0 0.0
      %1351 = vmatprep.subr.mxu0 0.0
      %1352 = vmatpush1.xpose.msra.mxu0 0.0
      %1353 = vmatprep.subr.mxu0 0.0
      %1354 = vmatpush1.xpose.msra.mxu0 0.0
      %1355 = vmatprep.subr.mxu0 0.0
      %1356 = vmatpush1.xpose.msra.mxu0 0.0
      %1357 = vmatprep.subr.mxu0 0.0
      %1358 = vmatpush1.xpose.msra.mxu0 0.0
      %1359 = vmatprep.subr.mxu0 0.0
      %1360 = vmatpush1.xpose.msra.mxu0 0.0
      %1361 = vmatprep.subr.mxu0 0.0
      %1362 = vmatpush1.xpose.msra.mxu0 0.0
      %1363 = vmatprep.subr.mxu0 0.0
      %1364 = vmatpush1.xpose.msra.mxu0 0.0
      %1365 = vmatprep.subr.mxu0 0.0
      %1366 = vmatpush1.xpose.msra.mxu0 0.0
      %1367 = vmatprep.subr.mxu0 0.0
      %1368 = vmatpush1.xpose.msra.mxu0 0.0
      %1369 = vmatprep.subr.mxu0 0.0
      %1370 = vmatpush1.xpose.msra.mxu0 0.0
      %1371 = vmatprep.subr.mxu0 0.0
      %1372 = vmatpush1.xpose.msra.mxu0 0.0
      %1373 = vmatprep.subr.mxu0 0.0
      %1374 = vmatpush1.xpose.msra.mxu0 0.0
      %1375 = vmatprep.subr.mxu0 0.0
      %1376 = vmatpush1.xpose.msra.mxu0 0.0
      %1377 = vmatprep.subr.mxu0 0.0
      %1378 = vmatpush1.xpose.msra.mxu0 0.0
      %1379 = vmatprep.subr.mxu0 0.0
      %1380 = vmatpush1.xpose.msra.mxu0 0.0
      %1381 = vmatprep.subr.mxu0 0.0
      %1382 = vmatpush1.xpose.msra.mxu0 0.0
      %1383 = vmatprep.subr.mxu0 0.0
      %1384 = vmatpush1.xpose.msra.mxu0 0.0
      %1385 = vmatprep.subr.mxu0 0.0
      %1386 = vmatpush1.xpose.msra.mxu0 0.0
      %1387 = vmatprep.subr.mxu0 0.0
      %1388 = vmatpush1.xpose.msra.mxu0 0.0
      %1389 = vmatprep.subr.mxu0 0.0
      %1390 = vmatpush1.xpose.msra.mxu0 0.0
      %1391 = vmatprep.subr.mxu0 0.0
      %1392 = vmatpush1.xpose.msra.mxu0 0.0
      %1393 = vmatprep.subr.mxu0 0.0
      %1394 = vmatpush1.xpose.msra.mxu0 0.0
      %1395 = vmatprep.subr.mxu0 0.0
      %1396 = vmatpush1.xpose.msra.mxu0 0.0
      %1397 = vmatprep.subr.mxu0 0.0
      %1398 = vmatpush1.xpose.msra.mxu0 0.0
      %1399 = vmatprep.mubr.f32.mxu0 0.0
      %1400 = vmatmul.mubr.f32.gmra.mrb[0].mxu0 %v1331
      %v1401 = vpop.f32.mrb[0].mxu0
      %v1402 = vadd.f32 0.0, %v1401
      %v1403 = vpop.f32.mrb[0].mxu0
      %1404 = vdwg.mxu0
      %v1405 = vmul.f32 %v1402, %v927
      %v1406 = vsel %vm929, %v1405, -inf
      %1407 = vmax.xlane.f32.xlu0 %v1406
      %v1408 = vpop.xlane.xlu0 %1407
      %v1409 = vsub.f32 %v1405, %v1408
      %v1410 = vmul.f32 %v1409, 1.442695
      %v1411 = vpow.pop %v1410
      %v1412 = vsel %vm929, %v1411, 0.0
      %1413 = vadd.xlane.f32.xlu0 %v1412
      %v1414 = vpop.xlane.xlu0 %1413
      %v1415 = vrcp.pop %v1414
      %v1416 = vmul.f32 %v1411, %v1415
      %1417 = vrot.lane.b32.xlu0 %v815, 64
      %v1418 = vpop.permute.xlu0 %1417
      %v1421 = vsel %vm929, %v1416, 0
      %1423 = vmatprep.subr.mxu0 0.0
      %1424 = vmatpush1.msra.mxu0 %v1418
      %1425 = vmatprep.subr.mxu0 0.0
      %1426 = vmatpush1.msra.mxu0 0.0
      %1427 = vmatprep.subr.mxu0 0.0
      %1428 = vmatpush1.msra.mxu0 0.0
      %1429 = vmatprep.subr.mxu0 0.0
      %1430 = vmatpush1.msra.mxu0 0.0
      %1431 = vmatprep.subr.mxu0 0.0
      %1432 = vmatpush1.msra.mxu0 0.0
      %1433 = vmatprep.subr.mxu0 0.0
      %1434 = vmatpush1.msra.mxu0 0.0
      %1435 = vmatprep.subr.mxu0 0.0
      %1436 = vmatpush1.msra.mxu0 0.0
      %1437 = vmatprep.subr.mxu0 0.0
      %1438 = vmatpush1.msra.mxu0 0.0
      %1439 = vmatprep.subr.mxu0 0.0
      %1440 = vmatpush1.msra.mxu0 0.0
      %1441 = vmatprep.subr.mxu0 0.0
      %1442 = vmatpush1.msra.mxu0 0.0
      %1443 = vmatprep.subr.mxu0 0.0
      %1444 = vmatpush1.msra.mxu0 0.0
      %1445 = vmatprep.subr.mxu0 0.0
      %1446 = vmatpush1.msra.mxu0 0.0
      %1447 = vmatprep.subr.mxu0 0.0
      %1448 = vmatpush1.msra.mxu0 0.0
      %1449 = vmatprep.subr.mxu0 0.0
      %1450 = vmatpush1.msra.mxu0 0.0
      %1451 = vmatprep.subr.mxu0 0.0
      %1452 = vmatpush1.msra.mxu0 0.0
      %1453 = vmatprep.subr.mxu0 0.0
      %1454 = vmatpush1.msra.mxu0 0.0
      %1455 = vmatprep.subr.mxu0 0.0
      %1456 = vmatpush1.msra.mxu0 0.0
      %1457 = vmatprep.subr.mxu0 0.0
      %1458 = vmatpush1.msra.mxu0 0.0
      %1459 = vmatprep.subr.mxu0 0.0
      %1460 = vmatpush1.msra.mxu0 0.0
      %1461 = vmatprep.subr.mxu0 0.0
      %1462 = vmatpush1.msra.mxu0 0.0
      %1463 = vmatprep.subr.mxu0 0.0
      %1464 = vmatpush1.msra.mxu0 0.0
      %1465 = vmatprep.subr.mxu0 0.0
      %1466 = vmatpush1.msra.mxu0 0.0
      %1467 = vmatprep.subr.mxu0 0.0
      %1468 = vmatpush1.msra.mxu0 0.0
      %1469 = vmatprep.subr.mxu0 0.0
      %1470 = vmatpush1.msra.mxu0 0.0
      %1471 = vmatprep.subr.mxu0 0.0
      %1472 = vmatpush1.msra.mxu0 0.0
      %1473 = vmatprep.subr.mxu0 0.0
      %1474 = vmatpush1.msra.mxu0 0.0
      %1475 = vmatprep.subr.mxu0 0.0
      %1476 = vmatpush1.msra.mxu0 0.0
      %1477 = vmatprep.subr.mxu0 0.0
      %1478 = vmatpush1.msra.mxu0 0.0
      %1479 = vmatprep.subr.mxu0 0.0
      %1480 = vmatpush1.msra.mxu0 0.0
      %1481 = vmatprep.subr.mxu0 0.0
      %1482 = vmatpush1.msra.mxu0 0.0
      %1483 = vmatprep.subr.mxu0 0.0
      %1484 = vmatpush1.msra.mxu0 0.0
      %1485 = vmatprep.subr.mxu0 0.0
      %1486 = vmatpush1.msra.mxu0 0.0
      %1487 = vmatprep.mubr.f32.mxu0 0.0
      %1488 = vmatmul.mubr.f32.gmra.mrb[0].mxu0 %v1421
      %v1489 = vpop.f32.mrb[0].mxu0
      %v1490 = vadd.f32 0.0, %v1489
      %v1491 = vpop.f32.mrb[0].mxu0
      %1492 = vdwg.mxu0
      %v1494 = vsel %vm505, %v1490, 0
      %1496 = vmatprep.subr.mxu0 0.0
      %1497 = vmatpush1.msra.mxu0 %v827
      %1498 = vmatprep.subr.mxu0 0.0
      %1499 = vmatpush1.msra.mxu0 %v828
      %1500 = vmatprep.subr.mxu0 0.0
      %1501 = vmatpush1.msra.mxu0 %v829
      %1502 = vmatprep.subr.mxu0 0.0
      %1503 = vmatpush1.msra.mxu0 %v830
      %1504 = vmatprep.subr.mxu0 0.0
      %1505 = vmatpush1.msra.mxu0 0.0
      %1506 = vmatprep.subr.mxu0 0.0
      %1507 = vmatpush1.msra.mxu0 0.0
      %1508 = vmatprep.subr.mxu0 0.0
      %1509 = vmatpush1.msra.mxu0 0.0
      %1510 = vmatprep.subr.mxu0 0.0
      %1511 = vmatpush1.msra.mxu0 0.0
      %1512 = vmatprep.subr.mxu0 0.0
      %1513 = vmatpush1.msra.mxu0 0.0
      %1514 = vmatprep.subr.mxu0 0.0
      %1515 = vmatpush1.msra.mxu0 0.0
      %1516 = vmatprep.subr.mxu0 0.0
      %1517 = vmatpush1.msra.mxu0 0.0
      %1518 = vmatprep.subr.mxu0 0.0
      %1519 = vmatpush1.msra.mxu0 0.0
      %1520 = vmatprep.subr.mxu0 0.0
      %1521 = vmatpush1.msra.mxu0 0.0
      %1522 = vmatprep.subr.mxu0 0.0
      %1523 = vmatpush1.msra.mxu0 0.0
      %1524 = vmatprep.subr.mxu0 0.0
      %1525 = vmatpush1.msra.mxu0 0.0
      %1526 = vmatprep.subr.mxu0 0.0
      %1527 = vmatpush1.msra.mxu0 0.0
      %1528 = vmatprep.subr.mxu0 0.0
      %1529 = vmatpush1.msra.mxu0 0.0
      %1530 = vmatprep.subr.mxu0 0.0
      %1531 = vmatpush1.msra.mxu0 0.0
      %1532 = vmatprep.subr.mxu0 0.0
      %1533 = vmatpush1.msra.mxu0 0.0
      %1534 = vmatprep.subr.mxu0 0.0
      %1535 = vmatpush1.msra.mxu0 0.0
      %1536 = vmatprep.subr.mxu0 0.0
      %1537 = vmatpush1.msra.mxu0 0.0
      %1538 = vmatprep.subr.mxu0 0.0
      %1539 = vmatpush1.msra.mxu0 0.0
      %1540 = vmatprep.subr.mxu0 0.0
      %1541 = vmatpush1.msra.mxu0 0.0
      %1542 = vmatprep.subr.mxu0 0.0
      %1543 = vmatpush1.msra.mxu0 0.0
      %1544 = vmatprep.subr.mxu0 0.0
      %1545 = vmatpush1.msra.mxu0 0.0
      %1546 = vmatprep.subr.mxu0 0.0
      %1547 = vmatpush1.msra.mxu0 0.0
      %1548 = vmatprep.subr.mxu0 0.0
      %1549 = vmatpush1.msra.mxu0 0.0
      %1550 = vmatprep.subr.mxu0 0.0
      %1551 = vmatpush1.msra.mxu0 0.0
      %1552 = vmatprep.subr.mxu0 0.0
      %1553 = vmatpush1.msra.mxu0 0.0
      %1554 = vmatprep.subr.mxu0 0.0
      %1555 = vmatpush1.msra.mxu0 0.0
      %1556 = vmatprep.subr.mxu0 0.0
      %1557 = vmatpush1.msra.mxu0 0.0
      %1558 = vmatprep.subr.mxu0 0.0
      %1559 = vmatpush1.msra.mxu0 0.0
      %1560 = vmatprep.mubr.f32.mxu0 0.0
      %1561 = vmatmul.mubr.f32.gmra.mrb[0].mxu0 %v1494
      %v1562 = vpop.f32.mrb[0].mxu0
      %v1563 = vadd.f32 0.0, %v1562
      %v1564 = vpop.f32.mrb[0].mxu0
      %1565 = vdwg.mxu0
      %v1566 = vadd.f32 %v1324, %v1563
      %1567 = vrot.lane.b32.xlu0 %v576, 32
      %v1568 = vpop.permute.xlu0 %1567
      %1569 = vrot.lane.b32.xlu0 %v744, 32
      %v1570 = vpop.permute.xlu0 %1569
      %v1571 = vsel %vm505, %v1568, 0
      %v1573 = vsel %vm505, %v1570, 0
      %1575 = vmatprep.subr.mxu0 0.0
      %1576 = vmatpush1.xpose.msra.mxu0 %v1573
      %1577 = vmatprep.subr.mxu0 0.0
      %1578 = vmatpush1.xpose.msra.mxu0 0.0
      %1579 = vmatprep.subr.mxu0 0.0
      %1580 = vmatpush1.xpose.msra.mxu0 0.0
      %1581 = vmatprep.subr.mxu0 0.0
      %1582 = vmatpush1.xpose.msra.mxu0 0.0
      %1583 = vmatprep.subr.mxu0 0.0
      %1584 = vmatpush1.xpose.msra.mxu0 0.0
      %1585 = vmatprep.subr.mxu0 0.0
      %1586 = vmatpush1.xpose.msra.mxu0 0.0
      %1587 = vmatprep.subr.mxu0 0.0
      %1588 = vmatpush1.xpose.msra.mxu0 0.0
      %1589 = vmatprep.subr.mxu0 0.0
      %1590 = vmatpush1.xpose.msra.mxu0 0.0
      %1591 = vmatprep.subr.mxu0 0.0
      %1592 = vmatpush1.xpose.msra.mxu0 0.0
      %1593 = vmatprep.subr.mxu0 0.0
      %1594 = vmatpush1.xpose.msra.mxu0 0.0
      %1595 = vmatprep.subr.mxu0 0.0
      %1596 = vmatpush1.xpose.msra.mxu0 0.0
      %1597 = vmatprep.subr.mxu0 0.0
      %1598 = vmatpush1.xpose.msra.mxu0 0.0
      %1599 = vmatprep.subr.mxu0 0.0
      %1600 = vmatpush1.xpose.msra.mxu0 0.0
      %1601 = vmatprep.subr.mxu0 0.0
      %1602 = vmatpush1.xpose.msra.mxu0 0.0
      %1603 = vmatprep.subr.mxu0 0.0
      %1604 = vmatpush1.xpose.msra.mxu0 0.0
      %1605 = vmatprep.subr.mxu0 0.0
      %1606 = vmatpush1.xpose.msra.mxu0 0.0
      %1607 = vmatprep.subr.mxu0 0.0
      %1608 = vmatpush1.xpose.msra.mxu0 0.0
      %1609 = vmatprep.subr.mxu0 0.0
      %1610 = vmatpush1.xpose.msra.mxu0 0.0
      %1611 = vmatprep.subr.mxu0 0.0
      %1612 = vmatpush1.xpose.msra.mxu0 0.0
      %1613 = vmatprep.subr.mxu0 0.0
      %1614 = vmatpush1.xpose.msra.mxu0 0.0
      %1615 = vmatprep.subr.mxu0 0.0
      %1616 = vmatpush1.xpose.msra.mxu0 0.0
      %1617 = vmatprep.subr.mxu0 0.0
      %1618 = vmatpush1.xpose.msra.mxu0 0.0
      %1619 = vmatprep.subr.mxu0 0.0
      %1620 = vmatpush1.xpose.msra.mxu0 0.0
      %1621 = vmatprep.subr.mxu0 0.0
      %1622 = vmatpush1.xpose.msra.mxu0 0.0
      %1623 = vmatprep.subr.mxu0 0.0
      %1624 = vmatpush1.xpose.msra.mxu0 0.0
      %1625 = vmatprep.subr.mxu0 0.0
      %1626 = vmatpush1.xpose.msra.mxu0 0.0
      %1627 = vmatprep.subr.mxu0 0.0
      %1628 = vmatpush1.xpose.msra.mxu0 0.0
      %1629 = vmatprep.subr.mxu0 0.0
      %1630 = vmatpush1.xpose.msra.mxu0 0.0
      %1631 = vmatprep.subr.mxu0 0.0
      %1632 = vmatpush1.xpose.msra.mxu0 0.0
      %1633 = vmatprep.subr.mxu0 0.0
      %1634 = vmatpush1.xpose.msra.mxu0 0.0
      %1635 = vmatprep.subr.mxu0 0.0
      %1636 = vmatpush1.xpose.msra.mxu0 0.0
      %1637 = vmatprep.subr.mxu0 0.0
      %1638 = vmatpush1.xpose.msra.mxu0 0.0
      %1639 = vmatprep.mubr.f32.mxu0 0.0
      %1640 = vmatmul.mubr.f32.gmra.mrb[0].mxu0 %v1571
      %v1641 = vpop.f32.mrb[0].mxu0
      %v1642 = vadd.f32 0.0, %v1641
      %v1643 = vpop.f32.mrb[0].mxu0
      %1644 = vdwg.mxu0
      %v1645 = vmul.f32 %v1642, %v927
      %v1646 = vsel %vm929, %v1645, -inf
      %1647 = vmax.xlane.f32.xlu0 %v1646
      %v1648 = vpop.xlane.xlu0 %1647
      %v1649 = vsub.f32 %v1645, %v1648
      %v1650 = vmul.f32 %v1649, 1.442695
      %v1651 = vpow.pop %v1650
      %v1652 = vsel %vm929, %v1651, 0.0
      %1653 = vadd.xlane.f32.xlu0 %v1652
      %v1654 = vpop.xlane.xlu0 %1653
      %v1655 = vrcp.pop %v1654
      %v1656 = vmul.f32 %v1651, %v1655
      %1657 = vrot.lane.b32.xlu0 %v815, 32
      %v1658 = vpop.permute.xlu0 %1657
      %v1661 = vsel %vm929, %v1656, 0
      %1663 = vmatprep.subr.mxu0 0.0
      %1664 = vmatpush1.msra.mxu0 %v1658
      %1665 = vmatprep.subr.mxu0 0.0
      %1666 = vmatpush1.msra.mxu0 0.0
      %1667 = vmatprep.subr.mxu0 0.0
      %1668 = vmatpush1.msra.mxu0 0.0
      %1669 = vmatprep.subr.mxu0 0.0
      %1670 = vmatpush1.msra.mxu0 0.0
      %1671 = vmatprep.subr.mxu0 0.0
      %1672 = vmatpush1.msra.mxu0 0.0
      %1673 = vmatprep.subr.mxu0 0.0
      %1674 = vmatpush1.msra.mxu0 0.0
      %1675 = vmatprep.subr.mxu0 0.0
      %1676 = vmatpush1.msra.mxu0 0.0
      %1677 = vmatprep.subr.mxu0 0.0
      %1678 = vmatpush1.msra.mxu0 0.0
      %1679 = vmatprep.subr.mxu0 0.0
      %1680 = vmatpush1.msra.mxu0 0.0
      %1681 = vmatprep.subr.mxu0 0.0
      %1682 = vmatpush1.msra.mxu0 0.0
      %1683 = vmatprep.subr.mxu0 0.0
      %1684 = vmatpush1.msra.mxu0 0.0
      %1685 = vmatprep.subr.mxu0 0.0
      %1686 = vmatpush1.msra.mxu0 0.0
      %1687 = vmatprep.subr.mxu0 0.0
      %1688 = vmatpush1.msra.mxu0 0.0
      %1689 = vmatprep.subr.mxu0 0.0
      %1690 = vmatpush1.msra.mxu0 0.0
      %1691 = vmatprep.subr.mxu0 0.0
      %1692 = vmatpush1.msra.mxu0 0.0
      %1693 = vmatprep.subr.mxu0 0.0
      %1694 = vmatpush1.msra.mxu0 0.0
      %1695 = vmatprep.subr.mxu0 0.0
      %1696 = vmatpush1.msra.mxu0 0.0
      %1697 = vmatprep.subr.mxu0 0.0
      %1698 = vmatpush1.msra.mxu0 0.0
      %1699 = vmatprep.subr.mxu0 0.0
      %1700 = vmatpush1.msra.mxu0 0.0
      %1701 = vmatprep.subr.mxu0 0.0
      %1702 = vmatpush1.msra.mxu0 0.0
      %1703 = vmatprep.subr.mxu0 0.0
      %1704 = vmatpush1.msra.mxu0 0.0
      %1705 = vmatprep.subr.mxu0 0.0
      %1706 = vmatpush1.msra.mxu0 0.0
      %1707 = vmatprep.subr.mxu0 0.0
      %1708 = vmatpush1.msra.mxu0 0.0
      %1709 = vmatprep.subr.mxu0 0.0
      %1710 = vmatpush1.msra.mxu0 0.0
      %1711 = vmatprep.subr.mxu0 0.0
      %1712 = vmatpush1.msra.mxu0 0.0
      %1713 = vmatprep.subr.mxu0 0.0
      %1714 = vmatpush1.msra.mxu0 0.0
      %1715 = vmatprep.subr.mxu0 0.0
      %1716 = vmatpush1.msra.mxu0 0.0
      %1717 = vmatprep.subr.mxu0 0.0
      %1718 = vmatpush1.msra.mxu0 0.0
      %1719 = vmatprep.subr.mxu0 0.0
      %1720 = vmatpush1.msra.mxu0 0.0
      %1721 = vmatprep.subr.mxu0 0.0
      %1722 = vmatpush1.msra.mxu0 0.0
      %1723 = vmatprep.subr.mxu0 0.0
      %1724 = vmatpush1.msra.mxu0 0.0
      %1725 = vmatprep.subr.mxu0 0.0
      %1726 = vmatpush1.msra.mxu0 0.0
      %1727 = vmatprep.mubr.f32.mxu0 0.0
      %1728 = vmatmul.mubr.f32.gmra.mrb[0].mxu0 %v1661
      %v1729 = vpop.f32.mrb[0].mxu0
      %v1730 = vadd.f32 0.0, %v1729
      %v1731 = vpop.f32.mrb[0].mxu0
      %1732 = vdwg.mxu0
      %v1734 = vsel %vm505, %v1730, 0
      %1736 = vmatprep.subr.mxu0 0.0
      %1737 = vmatpush1.msra.mxu0 %v831
      %1738 = vmatprep.subr.mxu0 0.0
      %1739 = vmatpush1.msra.mxu0 %v832
      %1740 = vmatprep.subr.mxu0 0.0
      %1741 = vmatpush1.msra.mxu0 %v833
      %1742 = vmatprep.subr.mxu0 0.0
      %1743 = vmatpush1.msra.mxu0 %v834
      %1744 = vmatprep.subr.mxu0 0.0
      %1745 = vmatpush1.msra.mxu0 0.0
      %1746 = vmatprep.subr.mxu0 0.0
      %1747 = vmatpush1.msra.mxu0 0.0
      %1748 = vmatprep.subr.mxu0 0.0
      %1749 = vmatpush1.msra.mxu0 0.0
      %1750 = vmatprep.subr.mxu0 0.0
      %1751 = vmatpush1.msra.mxu0 0.0
      %1752 = vmatprep.subr.mxu0 0.0
      %1753 = vmatpush1.msra.mxu0 0.0
      %1754 = vmatprep.subr.mxu0 0.0
      %1755 = vmatpush1.msra.mxu0 0.0
      %1756 = vmatprep.subr.mxu0 0.0
      %1757 = vmatpush1.msra.mxu0 0.0
      %1758 = vmatprep.subr.mxu0 0.0
      %1759 = vmatpush1.msra.mxu0 0.0
      %1760 = vmatprep.subr.mxu0 0.0
      %1761 = vmatpush1.msra.mxu0 0.0
      %1762 = vmatprep.subr.mxu0 0.0
      %1763 = vmatpush1.msra.mxu0 0.0
      %1764 = vmatprep.subr.mxu0 0.0
      %1765 = vmatpush1.msra.mxu0 0.0
      %1766 = vmatprep.subr.mxu0 0.0
      %1767 = vmatpush1.msra.mxu0 0.0
      %1768 = vmatprep.subr.mxu0 0.0
      %1769 = vmatpush1.msra.mxu0 0.0
      %1770 = vmatprep.subr.mxu0 0.0
      %1771 = vmatpush1.msra.mxu0 0.0
      %1772 = vmatprep.subr.mxu0 0.0
      %1773 = vmatpush1.msra.mxu0 0.0
      %1774 = vmatprep.subr.mxu0 0.0
      %1775 = vmatpush1.msra.mxu0 0.0
      %1776 = vmatprep.subr.mxu0 0.0
      %1777 = vmatpush1.msra.mxu0 0.0
      %1778 = vmatprep.subr.mxu0 0.0
      %1779 = vmatpush1.msra.mxu0 0.0
      %1780 = vmatprep.subr.mxu0 0.0
      %1781 = vmatpush1.msra.mxu0 0.0
      %1782 = vmatprep.subr.mxu0 0.0
      %1783 = vmatpush1.msra.mxu0 0.0
      %1784 = vmatprep.subr.mxu0 0.0
      %1785 = vmatpush1.msra.mxu0 0.0
      %1786 = vmatprep.subr.mxu0 0.0
      %1787 = vmatpush1.msra.mxu0 0.0
      %1788 = vmatprep.subr.mxu0 0.0
      %1789 = vmatpush1.msra.mxu0 0.0
      %1790 = vmatprep.subr.mxu0 0.0
      %1791 = vmatpush1.msra.mxu0 0.0
      %1792 = vmatprep.subr.mxu0 0.0
      %1793 = vmatpush1.msra.mxu0 0.0
      %1794 = vmatprep.subr.mxu0 0.0
      %1795 = vmatpush1.msra.mxu0 0.0
      %1796 = vmatprep.subr.mxu0 0.0
      %1797 = vmatpush1.msra.mxu0 0.0
      %1798 = vmatprep.subr.mxu0 0.0
      %1799 = vmatpush1.msra.mxu0 0.0
      %1800 = vmatprep.mubr.f32.mxu0 0.0
      %1801 = vmatmul.mubr.f32.gmra.mrb[0].mxu0 %v1734
      %v1802 = vpop.f32.mrb[0].mxu0
      %v1803 = vadd.f32 0.0, %v1802
      %v1804 = vpop.f32.mrb[0].mxu0
      %1805 = vdwg.mxu0
      %v1806 = vadd.f32 %v1566, %v1803
      %v1808 = vsel %vm505, %v578, 0
      %v1811 = vsel %vm505, %v746, 0
      %1813 = vmatprep.subr.mxu0 0.0
      %1814 = vmatpush1.xpose.msra.mxu0 %v1811
      %1815 = vmatprep.subr.mxu0 0.0
      %1816 = vmatpush1.xpose.msra.mxu0 0.0
      %1817 = vmatprep.subr.mxu0 0.0
      %1818 = vmatpush1.xpose.msra.mxu0 0.0
      %1819 = vmatprep.subr.mxu0 0.0
      %1820 = vmatpush1.xpose.msra.mxu0 0.0
      %1821 = vmatprep.subr.mxu0 0.0
      %1822 = vmatpush1.xpose.msra.mxu0 0.0
      %1823 = vmatprep.subr.mxu0 0.0
      %1824 = vmatpush1.xpose.msra.mxu0 0.0
      %1825 = vmatprep.subr.mxu0 0.0
      %1826 = vmatpush1.xpose.msra.mxu0 0.0
      %1827 = vmatprep.subr.mxu0 0.0
      %1828 = vmatpush1.xpose.msra.mxu0 0.0
      %1829 = vmatprep.subr.mxu0 0.0
      %1830 = vmatpush1.xpose.msra.mxu0 0.0
      %1831 = vmatprep.subr.mxu0 0.0
      %1832 = vmatpush1.xpose.msra.mxu0 0.0
      %1833 = vmatprep.subr.mxu0 0.0
      %1834 = vmatpush1.xpose.msra.mxu0 0.0
      %1835 = vmatprep.subr.mxu0 0.0
      %1836 = vmatpush1.xpose.msra.mxu0 0.0
      %1837 = vmatprep.subr.mxu0 0.0
      %1838 = vmatpush1.xpose.msra.mxu0 0.0
      %1839 = vmatprep.subr.mxu0 0.0
      %1840 = vmatpush1.xpose.msra.mxu0 0.0
      %1841 = vmatprep.subr.mxu0 0.0
      %1842 = vmatpush1.xpose.msra.mxu0 0.0
      %1843 = vmatprep.subr.mxu0 0.0
      %1844 = vmatpush1.xpose.msra.mxu0 0.0
      %1845 = vmatprep.subr.mxu0 0.0
      %1846 = vmatpush1.xpose.msra.mxu0 0.0
      %1847 = vmatprep.subr.mxu0 0.0
      %1848 = vmatpush1.xpose.msra.mxu0 0.0
      %1849 = vmatprep.subr.mxu0 0.0
      %1850 = vmatpush1.xpose.msra.mxu0 0.0
      %1851 = vmatprep.subr.mxu0 0.0
      %1852 = vmatpush1.xpose.msra.mxu0 0.0
      %1853 = vmatprep.subr.mxu0 0.0
      %1854 = vmatpush1.xpose.msra.mxu0 0.0
      %1855 = vmatprep.subr.mxu0 0.0
      %1856 = vmatpush1.xpose.msra.mxu0 0.0
      %1857 = vmatprep.subr.mxu0 0.0
      %1858 = vmatpush1.xpose.msra.mxu0 0.0
      %1859 = vmatprep.subr.mxu0 0.0
      %1860 = vmatpush1.xpose.msra.mxu0 0.0
      %1861 = vmatprep.subr.mxu0 0.0
      %1862 = vmatpush1.xpose.msra.mxu0 0.0
      %1863 = vmatprep.subr.mxu0 0.0
      %1864 = vmatpush1.xpose.msra.mxu0 0.0
      %1865 = vmatprep.subr.mxu0 0.0
      %1866 = vmatpush1.xpose.msra.mxu0 0.0
      %1867 = vmatprep.subr.mxu0 0.0
      %1868 = vmatpush1.xpose.msra.mxu0 0.0
      %1869 = vmatprep.subr.mxu0 0.0
      %1870 = vmatpush1.xpose.msra.mxu0 0.0
      %1871 = vmatprep.subr.mxu0 0.0
      %1872 = vmatpush1.xpose.msra.mxu0 0.0
      %1873 = vmatprep.subr.mxu0 0.0
      %1874 = vmatpush1.xpose.msra.mxu0 0.0
      %1875 = vmatprep.subr.mxu0 0.0
      %1876 = vmatpush1.xpose.msra.mxu0 0.0
      %1877 = vmatprep.mubr.f32.mxu0 0.0
      %1878 = vmatmul.mubr.f32.gmra.mrb[0].mxu0 %v1808
      %v1879 = vpop.f32.mrb[0].mxu0
      %v1880 = vadd.f32 0.0, %v1879
      %v1881 = vpop.f32.mrb[0].mxu0
      %1882 = vdwg.mxu0
      %v1883 = vmul.f32 %v1880, %v927
      %v1884 = vsel %vm929, %v1883, -inf
      %1885 = vmax.xlane.f32.xlu0 %v1884
      %v1886 = vpop.xlane.xlu0 %1885
      %v1887 = vsub.f32 %v1883, %v1886
      %v1888 = vmul.f32 %v1887, 1.442695
      %v1889 = vpow.pop %v1888
      %v1890 = vsel %vm929, %v1889, 0.0
      %1891 = vadd.xlane.f32.xlu0 %v1890
      %v1892 = vpop.xlane.xlu0 %1891
      %v1893 = vrcp.pop %v1892
      %v1894 = vmul.f32 %v1889, %v1893
      %v1896 = vsel %vm929, %v1894, 0
      %1898 = vmatprep.subr.mxu0 0.0
      %1899 = vmatpush1.msra.mxu0 %v817
      %1900 = vmatprep.subr.mxu0 0.0
      %1901 = vmatpush1.msra.mxu0 0.0
      %1902 = vmatprep.subr.mxu0 0.0
      %1903 = vmatpush1.msra.mxu0 0.0
      %1904 = vmatprep.subr.mxu0 0.0
      %1905 = vmatpush1.msra.mxu0 0.0
      %1906 = vmatprep.subr.mxu0 0.0
      %1907 = vmatpush1.msra.mxu0 0.0
      %1908 = vmatprep.subr.mxu0 0.0
      %1909 = vmatpush1.msra.mxu0 0.0
      %1910 = vmatprep.subr.mxu0 0.0
      %1911 = vmatpush1.msra.mxu0 0.0
      %1912 = vmatprep.subr.mxu0 0.0
      %1913 = vmatpush1.msra.mxu0 0.0
      %1914 = vmatprep.subr.mxu0 0.0
      %1915 = vmatpush1.msra.mxu0 0.0
      %1916 = vmatprep.subr.mxu0 0.0
      %1917 = vmatpush1.msra.mxu0 0.0
      %1918 = vmatprep.subr.mxu0 0.0
      %1919 = vmatpush1.msra.mxu0 0.0
      %1920 = vmatprep.subr.mxu0 0.0
      %1921 = vmatpush1.msra.mxu0 0.0
      %1922 = vmatprep.subr.mxu0 0.0
      %1923 = vmatpush1.msra.mxu0 0.0
      %1924 = vmatprep.subr.mxu0 0.0
      %1925 = vmatpush1.msra.mxu0 0.0
      %1926 = vmatprep.subr.mxu0 0.0
      %1927 = vmatpush1.msra.mxu0 0.0
      %1928 = vmatprep.subr.mxu0 0.0
      %1929 = vmatpush1.msra.mxu0 0.0
      %1930 = vmatprep.subr.mxu0 0.0
      %1931 = vmatpush1.msra.mxu0 0.0
      %1932 = vmatprep.subr.mxu0 0.0
      %1933 = vmatpush1.msra.mxu0 0.0
      %1934 = vmatprep.subr.mxu0 0.0
      %1935 = vmatpush1.msra.mxu0 0.0
      %1936 = vmatprep.subr.mxu0 0.0
      %1937 = vmatpush1.msra.mxu0 0.0
      %1938 = vmatprep.subr.mxu0 0.0
      %1939 = vmatpush1.msra.mxu0 0.0
      %1940 = vmatprep.subr.mxu0 0.0
      %1941 = vmatpush1.msra.mxu0 0.0
      %1942 = vmatprep.subr.mxu0 0.0
      %1943 = vmatpush1.msra.mxu0 0.0
      %1944 = vmatprep.subr.mxu0 0.0
      %1945 = vmatpush1.msra.mxu0 0.0
      %1946 = vmatprep.subr.mxu0 0.0
      %1947 = vmatpush1.msra.mxu0 0.0
      %1948 = vmatprep.subr.mxu0 0.0
      %1949 = vmatpush1.msra.mxu0 0.0
      %1950 = vmatprep.subr.mxu0 0.0
      %1951 = vmatpush1.msra.mxu0 0.0
      %1952 = vmatprep.subr.mxu0 0.0
      %1953 = vmatpush1.msra.mxu0 0.0
      %1954 = vmatprep.subr.mxu0 0.0
      %1955 = vmatpush1.msra.mxu0 0.0
      %1956 = vmatprep.subr.mxu0 0.0
      %1957 = vmatpush1.msra.mxu0 0.0
      %1958 = vmatprep.subr.mxu0 0.0
      %1959 = vmatpush1.msra.mxu0 0.0
      %1960 = vmatprep.subr.mxu0 0.0
      %1961 = vmatpush1.msra.mxu0 0.0
      %1962 = vmatprep.mubr.f32.mxu0 0.0
      %1963 = vmatmul.mubr.f32.gmra.mrb[0].mxu0 %v1896
      %v1964 = vpop.f32.mrb[0].mxu0
      %v1965 = vadd.f32 0.0, %v1964
      %v1966 = vpop.f32.mrb[0].mxu0
      %1967 = vdwg.mxu0
      %v1969 = vsel %vm505, %v1965, 0
      %1971 = vmatprep.subr.mxu0 0.0
      %1972 = vmatpush1.msra.mxu0 %v835
      %1973 = vmatprep.subr.mxu0 0.0
      %1974 = vmatpush1.msra.mxu0 %v836
      %1975 = vmatprep.subr.mxu0 0.0
      %1976 = vmatpush1.msra.mxu0 %v837
      %1977 = vmatprep.subr.mxu0 0.0
      %1978 = vmatpush1.msra.mxu0 %v838
      %1979 = vmatprep.subr.mxu0 0.0
      %1980 = vmatpush1.msra.mxu0 0.0
      %1981 = vmatprep.subr.mxu0 0.0
      %1982 = vmatpush1.msra.mxu0 0.0
      %1983 = vmatprep.subr.mxu0 0.0
      %1984 = vmatpush1.msra.mxu0 0.0
      %1985 = vmatprep.subr.mxu0 0.0
      %1986 = vmatpush1.msra.mxu0 0.0
      %1987 = vmatprep.subr.mxu0 0.0
      %1988 = vmatpush1.msra.mxu0 0.0
      %1989 = vmatprep.subr.mxu0 0.0
      %1990 = vmatpush1.msra.mxu0 0.0
      %1991 = vmatprep.subr.mxu0 0.0
      %1992 = vmatpush1.msra.mxu0 0.0
      %1993 = vmatprep.subr.mxu0 0.0
      %1994 = vmatpush1.msra.mxu0 0.0
      %1995 = vmatprep.subr.mxu0 0.0
      %1996 = vmatpush1.msra.mxu0 0.0
      %1997 = vmatprep.subr.mxu0 0.0
      %1998 = vmatpush1.msra.mxu0 0.0
      %1999 = vmatprep.subr.mxu0 0.0
      %2000 = vmatpush1.msra.mxu0 0.0
      %2001 = vmatprep.subr.mxu0 0.0
      %2002 = vmatpush1.msra.mxu0 0.0
      %2003 = vmatprep.subr.mxu0 0.0
      %2004 = vmatpush1.msra.mxu0 0.0
      %2005 = vmatprep.subr.mxu0 0.0
      %2006 = vmatpush1.msra.mxu0 0.0
      %2007 = vmatprep.subr.mxu0 0.0
      %2008 = vmatpush1.msra.mxu0 0.0
      %2009 = vmatprep.subr.mxu0 0.0
      %2010 = vmatpush1.msra.mxu0 0.0
      %2011 = vmatprep.subr.mxu0 0.0
      %2012 = vmatpush1.msra.mxu0 0.0
      %2013 = vmatprep.subr.mxu0 0.0
      %2014 = vmatpush1.msra.mxu0 0.0
      %2015 = vmatprep.subr.mxu0 0.0
      %2016 = vmatpush1.msra.mxu0 0.0
      %2017 = vmatprep.subr.mxu0 0.0
      %2018 = vmatpush1.msra.mxu0 0.0
      %2019 = vmatprep.subr.mxu0 0.0
      %2020 = vmatpush1.msra.mxu0 0.0
      %2021 = vmatprep.subr.mxu0 0.0
      %2022 = vmatpush1.msra.mxu0 0.0
      %2023 = vmatprep.subr.mxu0 0.0
      %2024 = vmatpush1.msra.mxu0 0.0
      %2025 = vmatprep.subr.mxu0 0.0
      %2026 = vmatpush1.msra.mxu0 0.0
      %2027 = vmatprep.subr.mxu0 0.0
      %2028 = vmatpush1.msra.mxu0 0.0
      %2029 = vmatprep.subr.mxu0 0.0
      %2030 = vmatpush1.msra.mxu0 0.0
      %2031 = vmatprep.subr.mxu0 0.0
      %2032 = vmatpush1.msra.mxu0 0.0
      %2033 = vmatprep.subr.mxu0 0.0
      %2034 = vmatpush1.msra.mxu0 0.0
      %2035 = vmatprep.mubr.f32.mxu0 0.0
      %2036 = vmatmul.mubr.f32.gmra.mrb[0].mxu0 %v1969
      %v2037 = vpop.f32.mrb[0].mxu0
      %v2038 = vadd.f32 0.0, %v2037
      %v2039 = vpop.f32.mrb[0].mxu0
      %2040 = vdwg.mxu0
      %v2041 = vadd.f32 %v1806, %v2038
      %2042 = vrot.lane.b32.xlu0 %v578, 96
      %v2043 = vpop.permute.xlu0 %2042
      %2044 = vrot.lane.b32.xlu0 %v746, 96
      %v2045 = vpop.permute.xlu0 %2044
      %v2046 = vsel %vm505, %v2043, 0
      %v2048 = vsel %vm505, %v2045, 0
      %2050 = vmatprep.subr.mxu0 0.0
      %2051 = vmatpush1.xpose.msra.mxu0 %v2048
      %2052 = vmatprep.subr.mxu0 0.0
      %2053 = vmatpush1.xpose.msra.mxu0 0.0
      %2054 = vmatprep.subr.mxu0 0.0
      %2055 = vmatpush1.xpose.msra.mxu0 0.0
      %2056 = vmatprep.subr.mxu0 0.0
      %2057 = vmatpush1.xpose.msra.mxu0 0.0
      %2058 = vmatprep.subr.mxu0 0.0
      %2059 = vmatpush1.xpose.msra.mxu0 0.0
      %2060 = vmatprep.subr.mxu0 0.0
      %2061 = vmatpush1.xpose.msra.mxu0 0.0
      %2062 = vmatprep.subr.mxu0 0.0
      %2063 = vmatpush1.xpose.msra.mxu0 0.0
      %2064 = vmatprep.subr.mxu0 0.0
      %2065 = vmatpush1.xpose.msra.mxu0 0.0
      %2066 = vmatprep.subr.mxu0 0.0
      %2067 = vmatpush1.xpose.msra.mxu0 0.0
      %2068 = vmatprep.subr.mxu0 0.0
      %2069 = vmatpush1.xpose.msra.mxu0 0.0
      %2070 = vmatprep.subr.mxu0 0.0
      %2071 = vmatpush1.xpose.msra.mxu0 0.0
      %2072 = vmatprep.subr.mxu0 0.0
      %2073 = vmatpush1.xpose.msra.mxu0 0.0
      %2074 = vmatprep.subr.mxu0 0.0
      %2075 = vmatpush1.xpose.msra.mxu0 0.0
      %2076 = vmatprep.subr.mxu0 0.0
      %2077 = vmatpush1.xpose.msra.mxu0 0.0
      %2078 = vmatprep.subr.mxu0 0.0
      %2079 = vmatpush1.xpose.msra.mxu0 0.0
      %2080 = vmatprep.subr.mxu0 0.0
      %2081 = vmatpush1.xpose.msra.mxu0 0.0
      %2082 = vmatprep.subr.mxu0 0.0
      %2083 = vmatpush1.xpose.msra.mxu0 0.0
      %2084 = vmatprep.subr.mxu0 0.0
      %2085 = vmatpush1.xpose.msra.mxu0 0.0
      %2086 = vmatprep.subr.mxu0 0.0
      %2087 = vmatpush1.xpose.msra.mxu0 0.0
      %2088 = vmatprep.subr.mxu0 0.0
      %2089 = vmatpush1.xpose.msra.mxu0 0.0
      %2090 = vmatprep.subr.mxu0 0.0
      %2091 = vmatpush1.xpose.msra.mxu0 0.0
      %2092 = vmatprep.subr.mxu0 0.0
      %2093 = vmatpush1.xpose.msra.mxu0 0.0
      %2094 = vmatprep.subr.mxu0 0.0
      %2095 = vmatpush1.xpose.msra.mxu0 0.0
      %2096 = vmatprep.subr.mxu0 0.0
      %2097 = vmatpush1.xpose.msra.mxu0 0.0
      %2098 = vmatprep.subr.mxu0 0.0
      %2099 = vmatpush1.xpose.msra.mxu0 0.0
      %2100 = vmatprep.subr.mxu0 0.0
      %2101 = vmatpush1.xpose.msra.mxu0 0.0
      %2102 = vmatprep.subr.mxu0 0.0
      %2103 = vmatpush1.xpose.msra.mxu0 0.0
      %2104 = vmatprep.subr.mxu0 0.0
      %2105 = vmatpush1.xpose.msra.mxu0 0.0
      %2106 = vmatprep.subr.mxu0 0.0
      %2107 = vmatpush1.xpose.msra.mxu0 0.0
      %2108 = vmatprep.subr.mxu0 0.0
      %2109 = vmatpush1.xpose.msra.mxu0 0.0
      %2110 = vmatprep.subr.mxu0 0.0
      %2111 = vmatpush1.xpose.msra.mxu0 0.0
      %2112 = vmatprep.subr.mxu0 0.0
      %2113 = vmatpush1.xpose.msra.mxu0 0.0
      %2114 = vmatprep.mubr.f32.mxu0 0.0
      %2115 = vmatmul.mubr.f32.gmra.mrb[0].mxu0 %v2046
      %v2116 = vpop.f32.mrb[0].mxu0
      %v2117 = vadd.f32 0.0, %v2116
      %v2118 = vpop.f32.mrb[0].mxu0
      %2119 = vdwg.mxu0
      %v2120 = vmul.f32 %v2117, %v927
      %v2121 = vsel %vm929, %v2120, -inf
      %2122 = vmax.xlane.f32.xlu0 %v2121
      %v2123 = vpop.xlane.xlu0 %2122
      %v2124 = vsub.f32 %v2120, %v2123
      %v2125 = vmul.f32 %v2124, 1.442695
      %v2126 = vpow.pop %v2125
      %v2127 = vsel %vm929, %v2126, 0.0
      %2128 = vadd.xlane.f32.xlu0 %v2127
      %v2129 = vpop.xlane.xlu0 %2128
      %v2130 = vrcp.pop %v2129
      %v2131 = vmul.f32 %v2126, %v2130
      %2133 = vrot.lane.b32.xlu0 %v817, 96
      %v2134 = vpop.permute.xlu0 %2133
      %v2137 = vsel %vm929, %v2131, 0
      %2139 = vmatprep.subr.mxu0 0.0
      %2140 = vmatpush1.msra.mxu0 %v2134
      %2141 = vmatprep.subr.mxu0 0.0
      %2142 = vmatpush1.msra.mxu0 0.0
      %2143 = vmatprep.subr.mxu0 0.0
      %2144 = vmatpush1.msra.mxu0 0.0
      %2145 = vmatprep.subr.mxu0 0.0
      %2146 = vmatpush1.msra.mxu0 0.0
      %2147 = vmatprep.subr.mxu0 0.0
      %2148 = vmatpush1.msra.mxu0 0.0
      %2149 = vmatprep.subr.mxu0 0.0
      %2150 = vmatpush1.msra.mxu0 0.0
      %2151 = vmatprep.subr.mxu0 0.0
      %2152 = vmatpush1.msra.mxu0 0.0
      %2153 = vmatprep.subr.mxu0 0.0
      %2154 = vmatpush1.msra.mxu0 0.0
      %2155 = vmatprep.subr.mxu0 0.0
      %2156 = vmatpush1.msra.mxu0 0.0
      %2157 = vmatprep.subr.mxu0 0.0
      %2158 = vmatpush1.msra.mxu0 0.0
      %2159 = vmatprep.subr.mxu0 0.0
      %2160 = vmatpush1.msra.mxu0 0.0
      %2161 = vmatprep.subr.mxu0 0.0
      %2162 = vmatpush1.msra.mxu0 0.0
      %2163 = vmatprep.subr.mxu0 0.0
      %2164 = vmatpush1.msra.mxu0 0.0
      %2165 = vmatprep.subr.mxu0 0.0
      %2166 = vmatpush1.msra.mxu0 0.0
      %2167 = vmatprep.subr.mxu0 0.0
      %2168 = vmatpush1.msra.mxu0 0.0
      %2169 = vmatprep.subr.mxu0 0.0
      %2170 = vmatpush1.msra.mxu0 0.0
      %2171 = vmatprep.subr.mxu0 0.0
      %2172 = vmatpush1.msra.mxu0 0.0
      %2173 = vmatprep.subr.mxu0 0.0
      %2174 = vmatpush1.msra.mxu0 0.0
      %2175 = vmatprep.subr.mxu0 0.0
      %2176 = vmatpush1.msra.mxu0 0.0
      %2177 = vmatprep.subr.mxu0 0.0
      %2178 = vmatpush1.msra.mxu0 0.0
      %2179 = vmatprep.subr.mxu0 0.0
      %2180 = vmatpush1.msra.mxu0 0.0
      %2181 = vmatprep.subr.mxu0 0.0
      %2182 = vmatpush1.msra.mxu0 0.0
      %2183 = vmatprep.subr.mxu0 0.0
      %2184 = vmatpush1.msra.mxu0 0.0
      %2185 = vmatprep.subr.mxu0 0.0
      %2186 = vmatpush1.msra.mxu0 0.0
      %2187 = vmatprep.subr.mxu0 0.0
      %2188 = vmatpush1.msra.mxu0 0.0
      %2189 = vmatprep.subr.mxu0 0.0
      %2190 = vmatpush1.msra.mxu0 0.0
      %2191 = vmatprep.subr.mxu0 0.0
      %2192 = vmatpush1.msra.mxu0 0.0
      %2193 = vmatprep.subr.mxu0 0.0
      %2194 = vmatpush1.msra.mxu0 0.0
      %2195 = vmatprep.subr.mxu0 0.0
      %2196 = vmatpush1.msra.mxu0 0.0
      %2197 = vmatprep.subr.mxu0 0.0
      %2198 = vmatpush1.msra.mxu0 0.0
      %2199 = vmatprep.subr.mxu0 0.0
      %2200 = vmatpush1.msra.mxu0 0.0
      %2201 = vmatprep.subr.mxu0 0.0
      %2202 = vmatpush1.msra.mxu0 0.0
      %2203 = vmatprep.mubr.f32.mxu0 0.0
      %2204 = vmatmul.mubr.f32.gmra.mrb[0].mxu0 %v2137
      %v2205 = vpop.f32.mrb[0].mxu0
      %v2206 = vadd.f32 0.0, %v2205
      %v2207 = vpop.f32.mrb[0].mxu0
      %2208 = vdwg.mxu0
      %v2210 = vsel %vm505, %v2206, 0
      %2212 = vmatprep.subr.mxu0 0.0
      %2213 = vmatpush1.msra.mxu0 %v839
      %2214 = vmatprep.subr.mxu0 0.0
      %2215 = vmatpush1.msra.mxu0 %v840
      %2216 = vmatprep.subr.mxu0 0.0
      %2217 = vmatpush1.msra.mxu0 %v841
      %2218 = vmatprep.subr.mxu0 0.0
      %2219 = vmatpush1.msra.mxu0 %v842
      %2220 = vmatprep.subr.mxu0 0.0
      %2221 = vmatpush1.msra.mxu0 0.0
      %2222 = vmatprep.subr.mxu0 0.0
      %2223 = vmatpush1.msra.mxu0 0.0
      %2224 = vmatprep.subr.mxu0 0.0
      %2225 = vmatpush1.msra.mxu0 0.0
      %2226 = vmatprep.subr.mxu0 0.0
      %2227 = vmatpush1.msra.mxu0 0.0
      %2228 = vmatprep.subr.mxu0 0.0
      %2229 = vmatpush1.msra.mxu0 0.0
      %2230 = vmatprep.subr.mxu0 0.0
      %2231 = vmatpush1.msra.mxu0 0.0
      %2232 = vmatprep.subr.mxu0 0.0
      %2233 = vmatpush1.msra.mxu0 0.0
      %2234 = vmatprep.subr.mxu0 0.0
      %2235 = vmatpush1.msra.mxu0 0.0
      %2236 = vmatprep.subr.mxu0 0.0
      %2237 = vmatpush1.msra.mxu0 0.0
      %2238 = vmatprep.subr.mxu0 0.0
      %2239 = vmatpush1.msra.mxu0 0.0
      %2240 = vmatprep.subr.mxu0 0.0
      %2241 = vmatpush1.msra.mxu0 0.0
      %2242 = vmatprep.subr.mxu0 0.0
      %2243 = vmatpush1.msra.mxu0 0.0
      %2244 = vmatprep.subr.mxu0 0.0
      %2245 = vmatpush1.msra.mxu0 0.0
      %2246 = vmatprep.subr.mxu0 0.0
      %2247 = vmatpush1.msra.mxu0 0.0
      %2248 = vmatprep.subr.mxu0 0.0
      %2249 = vmatpush1.msra.mxu0 0.0
      %2250 = vmatprep.subr.mxu0 0.0
      %2251 = vmatpush1.msra.mxu0 0.0
      %2252 = vmatprep.subr.mxu0 0.0
      %2253 = vmatpush1.msra.mxu0 0.0
      %2254 = vmatprep.subr.mxu0 0.0
      %2255 = vmatpush1.msra.mxu0 0.0
      %2256 = vmatprep.subr.mxu0 0.0
      %2257 = vmatpush1.msra.mxu0 0.0
      %2258 = vmatprep.subr.mxu0 0.0
      %2259 = vmatpush1.msra.mxu0 0.0
      %2260 = vmatprep.subr.mxu0 0.0
      %2261 = vmatpush1.msra.mxu0 0.0
      %2262 = vmatprep.subr.mxu0 0.0
      %2263 = vmatpush1.msra.mxu0 0.0
      %2264 = vmatprep.subr.mxu0 0.0
      %2265 = vmatpush1.msra.mxu0 0.0
      %2266 = vmatprep.subr.mxu0 0.0
      %2267 = vmatpush1.msra.mxu0 0.0
      %2268 = vmatprep.subr.mxu0 0.0
      %2269 = vmatpush1.msra.mxu0 0.0
      %2270 = vmatprep.subr.mxu0 0.0
      %2271 = vmatpush1.msra.mxu0 0.0
      %2272 = vmatprep.subr.mxu0 0.0
      %2273 = vmatpush1.msra.mxu0 0.0
      %2274 = vmatprep.subr.mxu0 0.0
      %2275 = vmatpush1.msra.mxu0 0.0
      %2276 = vmatprep.mubr.f32.mxu0 0.0
      %2277 = vmatmul.mubr.f32.gmra.mrb[0].mxu0 %v2210
      %v2278 = vpop.f32.mrb[0].mxu0
      %v2279 = vadd.f32 0.0, %v2278
      %v2280 = vpop.f32.mrb[0].mxu0
      %2281 = vdwg.mxu0
      %v2282 = vadd.f32 %v2041, %v2279
      %2283 = vrot.lane.b32.xlu0 %v578, 64
      %v2284 = vpop.permute.xlu0 %2283
      %2285 = vrot.lane.b32.xlu0 %v746, 64
      %v2286 = vpop.permute.xlu0 %2285
      %v2287 = vsel %vm505, %v2284, 0
      %v2289 = vsel %vm505, %v2286, 0
      %2291 = vmatprep.subr.mxu0 0.0
      %2292 = vmatpush1.xpose.msra.mxu0 %v2289
      %2293 = vmatprep.subr.mxu0 0.0
      %2294 = vmatpush1.xpose.msra.mxu0 0.0
      %2295 = vmatprep.subr.mxu0 0.0
      %2296 = vmatpush1.xpose.msra.mxu0 0.0
      %2297 = vmatprep.subr.mxu0 0.0
      %2298 = vmatpush1.xpose.msra.mxu0 0.0
      %2299 = vmatprep.subr.mxu0 0.0
      %2300 = vmatpush1.xpose.msra.mxu0 0.0
      %2301 = vmatprep.subr.mxu0 0.0
      %2302 = vmatpush1.xpose.msra.mxu0 0.0
      %2303 = vmatprep.subr.mxu0 0.0
      %2304 = vmatpush1.xpose.msra.mxu0 0.0
      %2305 = vmatprep.subr.mxu0 0.0
      %2306 = vmatpush1.xpose.msra.mxu0 0.0
      %2307 = vmatprep.subr.mxu0 0.0
      %2308 = vmatpush1.xpose.msra.mxu0 0.0
      %2309 = vmatprep.subr.mxu0 0.0
      %2310 = vmatpush1.xpose.msra.mxu0 0.0
      %2311 = vmatprep.subr.mxu0 0.0
      %2312 = vmatpush1.xpose.msra.mxu0 0.0
      %2313 = vmatprep.subr.mxu0 0.0
      %2314 = vmatpush1.xpose.msra.mxu0 0.0
      %2315 = vmatprep.subr.mxu0 0.0
      %2316 = vmatpush1.xpose.msra.mxu0 0.0
      %2317 = vmatprep.subr.mxu0 0.0
      %2318 = vmatpush1.xpose.msra.mxu0 0.0
      %2319 = vmatprep.subr.mxu0 0.0
      %2320 = vmatpush1.xpose.msra.mxu0 0.0
      %2321 = vmatprep.subr.mxu0 0.0
      %2322 = vmatpush1.xpose.msra.mxu0 0.0
      %2323 = vmatprep.subr.mxu0 0.0
      %2324 = vmatpush1.xpose.msra.mxu0 0.0
      %2325 = vmatprep.subr.mxu0 0.0
      %2326 = vmatpush1.xpose.msra.mxu0 0.0
      %2327 = vmatprep.subr.mxu0 0.0
      %2328 = vmatpush1.xpose.msra.mxu0 0.0
      %2329 = vmatprep.subr.mxu0 0.0
      %2330 = vmatpush1.xpose.msra.mxu0 0.0
      %2331 = vmatprep.subr.mxu0 0.0
      %2332 = vmatpush1.xpose.msra.mxu0 0.0
      %2333 = vmatprep.subr.mxu0 0.0
      %2334 = vmatpush1.xpose.msra.mxu0 0.0
      %2335 = vmatprep.subr.mxu0 0.0
      %2336 = vmatpush1.xpose.msra.mxu0 0.0
      %2337 = vmatprep.subr.mxu0 0.0
      %2338 = vmatpush1.xpose.msra.mxu0 0.0
      %2339 = vmatprep.subr.mxu0 0.0
      %2340 = vmatpush1.xpose.msra.mxu0 0.0
      %2341 = vmatprep.subr.mxu0 0.0
      %2342 = vmatpush1.xpose.msra.mxu0 0.0
      %2343 = vmatprep.subr.mxu0 0.0
      %2344 = vmatpush1.xpose.msra.mxu0 0.0
      %2345 = vmatprep.subr.mxu0 0.0
      %2346 = vmatpush1.xpose.msra.mxu0 0.0
      %2347 = vmatprep.subr.mxu0 0.0
      %2348 = vmatpush1.xpose.msra.mxu0 0.0
      %2349 = vmatprep.subr.mxu0 0.0
      %2350 = vmatpush1.xpose.msra.mxu0 0.0
      %2351 = vmatprep.subr.mxu0 0.0
      %2352 = vmatpush1.xpose.msra.mxu0 0.0
      %2353 = vmatprep.subr.mxu0 0.0
      %2354 = vmatpush1.xpose.msra.mxu0 0.0
      %2355 = vmatprep.mubr.f32.mxu0 0.0
      %2356 = vmatmul.mubr.f32.gmra.mrb[0].mxu0 %v2287
      %v2357 = vpop.f32.mrb[0].mxu0
      %v2358 = vadd.f32 0.0, %v2357
      %v2359 = vpop.f32.mrb[0].mxu0
      %2360 = vdwg.mxu0
      %v2361 = vmul.f32 %v2358, %v927
      %v2362 = vsel %vm929, %v2361, -inf
      %2363 = vmax.xlane.f32.xlu0 %v2362
      %v2364 = vpop.xlane.xlu0 %2363
      %v2365 = vsub.f32 %v2361, %v2364
      %v2366 = vmul.f32 %v2365, 1.442695
      %v2367 = vpow.pop %v2366
      %v2368 = vsel %vm929, %v2367, 0.0
      %2369 = vadd.xlane.f32.xlu0 %v2368
      %v2370 = vpop.xlane.xlu0 %2369
      %v2371 = vrcp.pop %v2370
      %v2372 = vmul.f32 %v2367, %v2371
      %2373 = vrot.lane.b32.xlu0 %v817, 64
      %v2374 = vpop.permute.xlu0 %2373
      %v2377 = vsel %vm929, %v2372, 0
      %2379 = vmatprep.subr.mxu0 0.0
      %2380 = vmatpush1.msra.mxu0 %v2374
      %2381 = vmatprep.subr.mxu0 0.0
      %2382 = vmatpush1.msra.mxu0 0.0
      %2383 = vmatprep.subr.mxu0 0.0
      %2384 = vmatpush1.msra.mxu0 0.0
      %2385 = vmatprep.subr.mxu0 0.0
      %2386 = vmatpush1.msra.mxu0 0.0
      %2387 = vmatprep.subr.mxu0 0.0
      %2388 = vmatpush1.msra.mxu0 0.0
      %2389 = vmatprep.subr.mxu0 0.0
      %2390 = vmatpush1.msra.mxu0 0.0
      %2391 = vmatprep.subr.mxu0 0.0
      %2392 = vmatpush1.msra.mxu0 0.0
      %2393 = vmatprep.subr.mxu0 0.0
      %2394 = vmatpush1.msra.mxu0 0.0
      %2395 = vmatprep.subr.mxu0 0.0
      %2396 = vmatpush1.msra.mxu0 0.0
      %2397 = vmatprep.subr.mxu0 0.0
      %2398 = vmatpush1.msra.mxu0 0.0
      %2399 = vmatprep.subr.mxu0 0.0
      %2400 = vmatpush1.msra.mxu0 0.0
      %2401 = vmatprep.subr.mxu0 0.0
      %2402 = vmatpush1.msra.mxu0 0.0
      %2403 = vmatprep.subr.mxu0 0.0
      %2404 = vmatpush1.msra.mxu0 0.0
      %2405 = vmatprep.subr.mxu0 0.0
      %2406 = vmatpush1.msra.mxu0 0.0
      %2407 = vmatprep.subr.mxu0 0.0
      %2408 = vmatpush1.msra.mxu0 0.0
      %2409 = vmatprep.subr.mxu0 0.0
      %2410 = vmatpush1.msra.mxu0 0.0
      %2411 = vmatprep.subr.mxu0 0.0
      %2412 = vmatpush1.msra.mxu0 0.0
      %2413 = vmatprep.subr.mxu0 0.0
      %2414 = vmatpush1.msra.mxu0 0.0
      %2415 = vmatprep.subr.mxu0 0.0
      %2416 = vmatpush1.msra.mxu0 0.0
      %2417 = vmatprep.subr.mxu0 0.0
      %2418 = vmatpush1.msra.mxu0 0.0
      %2419 = vmatprep.subr.mxu0 0.0
      %2420 = vmatpush1.msra.mxu0 0.0
      %2421 = vmatprep.subr.mxu0 0.0
      %2422 = vmatpush1.msra.mxu0 0.0
      %2423 = vmatprep.subr.mxu0 0.0
      %2424 = vmatpush1.msra.mxu0 0.0
      %2425 = vmatprep.subr.mxu0 0.0
      %2426 = vmatpush1.msra.mxu0 0.0
      %2427 = vmatprep.subr.mxu0 0.0
      %2428 = vmatpush1.msra.mxu0 0.0
      %2429 = vmatprep.subr.mxu0 0.0
      %2430 = vmatpush1.msra.mxu0 0.0
      %2431 = vmatprep.subr.mxu0 0.0
      %2432 = vmatpush1.msra.mxu0 0.0
      %2433 = vmatprep.subr.mxu0 0.0
      %2434 = vmatpush1.msra.mxu0 0.0
      %2435 = vmatprep.subr.mxu0 0.0
      %2436 = vmatpush1.msra.mxu0 0.0
      %2437 = vmatprep.subr.mxu0 0.0
      %2438 = vmatpush1.msra.mxu0 0.0
      %2439 = vmatprep.subr.mxu0 0.0
      %2440 = vmatpush1.msra.mxu0 0.0
      %2441 = vmatprep.subr.mxu0 0.0
      %2442 = vmatpush1.msra.mxu0 0.0
      %2443 = vmatprep.mubr.f32.mxu0 0.0
      %2444 = vmatmul.mubr.f32.gmra.mrb[0].mxu0 %v2377
      %v2445 = vpop.f32.mrb[0].mxu0
      %v2446 = vadd.f32 0.0, %v2445
      %v2447 = vpop.f32.mrb[0].mxu0
      %2448 = vdwg.mxu0
      %v2450 = vsel %vm505, %v2446, 0
      %2452 = vmatprep.subr.mxu0 0.0
      %2453 = vmatpush1.msra.mxu0 %v843
      %2454 = vmatprep.subr.mxu0 0.0
      %2455 = vmatpush1.msra.mxu0 %v844
      %2456 = vmatprep.subr.mxu0 0.0
      %2457 = vmatpush1.msra.mxu0 %v845
      %2458 = vmatprep.subr.mxu0 0.0
      %2459 = vmatpush1.msra.mxu0 %v846
      %2460 = vmatprep.subr.mxu0 0.0
      %2461 = vmatpush1.msra.mxu0 0.0
      %2462 = vmatprep.subr.mxu0 0.0
      %2463 = vmatpush1.msra.mxu0 0.0
      %2464 = vmatprep.subr.mxu0 0.0
      %2465 = vmatpush1.msra.mxu0 0.0
      %2466 = vmatprep.subr.mxu0 0.0
      %2467 = vmatpush1.msra.mxu0 0.0
      %2468 = vmatprep.subr.mxu0 0.0
      %2469 = vmatpush1.msra.mxu0 0.0
      %2470 = vmatprep.subr.mxu0 0.0
      %2471 = vmatpush1.msra.mxu0 0.0
      %2472 = vmatprep.subr.mxu0 0.0
      %2473 = vmatpush1.msra.mxu0 0.0
      %2474 = vmatprep.subr.mxu0 0.0
      %2475 = vmatpush1.msra.mxu0 0.0
      %2476 = vmatprep.subr.mxu0 0.0
      %2477 = vmatpush1.msra.mxu0 0.0
      %2478 = vmatprep.subr.mxu0 0.0
      %2479 = vmatpush1.msra.mxu0 0.0
      %2480 = vmatprep.subr.mxu0 0.0
      %2481 = vmatpush1.msra.mxu0 0.0
      %2482 = vmatprep.subr.mxu0 0.0
      %2483 = vmatpush1.msra.mxu0 0.0
      %2484 = vmatprep.subr.mxu0 0.0
      %2485 = vmatpush1.msra.mxu0 0.0
      %2486 = vmatprep.subr.mxu0 0.0
      %2487 = vmatpush1.msra.mxu0 0.0
      %2488 = vmatprep.subr.mxu0 0.0
      %2489 = vmatpush1.msra.mxu0 0.0
      %2490 = vmatprep.subr.mxu0 0.0
      %2491 = vmatpush1.msra.mxu0 0.0
      %2492 = vmatprep.subr.mxu0 0.0
      %2493 = vmatpush1.msra.mxu0 0.0
      %2494 = vmatprep.subr.mxu0 0.0
      %2495 = vmatpush1.msra.mxu0 0.0
      %2496 = vmatprep.subr.mxu0 0.0
      %2497 = vmatpush1.msra.mxu0 0.0
      %2498 = vmatprep.subr.mxu0 0.0
      %2499 = vmatpush1.msra.mxu0 0.0
      %2500 = vmatprep.subr.mxu0 0.0
      %2501 = vmatpush1.msra.mxu0 0.0
      %2502 = vmatprep.subr.mxu0 0.0
      %2503 = vmatpush1.msra.mxu0 0.0
      %2504 = vmatprep.subr.mxu0 0.0
      %2505 = vmatpush1.msra.mxu0 0.0
      %2506 = vmatprep.subr.mxu0 0.0
      %2507 = vmatpush1.msra.mxu0 0.0
      %2508 = vmatprep.subr.mxu0 0.0
      %2509 = vmatpush1.msra.mxu0 0.0
      %2510 = vmatprep.subr.mxu0 0.0
      %2511 = vmatpush1.msra.mxu0 0.0
      %2512 = vmatprep.subr.mxu0 0.0
      %2513 = vmatpush1.msra.mxu0 0.0
      %2514 = vmatprep.subr.mxu0 0.0
      %2515 = vmatpush1.msra.mxu0 0.0
      %2516 = vmatprep.mubr.f32.mxu0 0.0
      %2517 = vmatmul.mubr.f32.gmra.mrb[0].mxu0 %v2450
      %v2518 = vpop.f32.mrb[0].mxu0
      %v2519 = vadd.f32 0.0, %v2518
      %v2520 = vpop.f32.mrb[0].mxu0
      %2521 = vdwg.mxu0
      %v2522 = vadd.f32 %v2282, %v2519
      %2523 = vrot.lane.b32.xlu0 %v578, 32
      %v2524 = vpop.permute.xlu0 %2523
      %2525 = vrot.lane.b32.xlu0 %v746, 32
      %v2526 = vpop.permute.xlu0 %2525
      %v2527 = vsel %vm505, %v2524, 0
      %v2529 = vsel %vm505, %v2526, 0
      %2531 = vmatprep.subr.mxu0 0.0
      %2532 = vmatpush1.xpose.msra.mxu0 %v2529
      %2533 = vmatprep.subr.mxu0 0.0
      %2534 = vmatpush1.xpose.msra.mxu0 0.0
      %2535 = vmatprep.subr.mxu0 0.0
      %2536 = vmatpush1.xpose.msra.mxu0 0.0
      %2537 = vmatprep.subr.mxu0 0.0
      %2538 = vmatpush1.xpose.msra.mxu0 0.0
      %2539 = vmatprep.subr.mxu0 0.0
      %2540 = vmatpush1.xpose.msra.mxu0 0.0
      %2541 = vmatprep.subr.mxu0 0.0
      %2542 = vmatpush1.xpose.msra.mxu0 0.0
      %2543 = vmatprep.subr.mxu0 0.0
      %2544 = vmatpush1.xpose.msra.mxu0 0.0
      %2545 = vmatprep.subr.mxu0 0.0
      %2546 = vmatpush1.xpose.msra.mxu0 0.0
      %2547 = vmatprep.subr.mxu0 0.0
      %2548 = vmatpush1.xpose.msra.mxu0 0.0
      %2549 = vmatprep.subr.mxu0 0.0
      %2550 = vmatpush1.xpose.msra.mxu0 0.0
      %2551 = vmatprep.subr.mxu0 0.0
      %2552 = vmatpush1.xpose.msra.mxu0 0.0
      %2553 = vmatprep.subr.mxu0 0.0
      %2554 = vmatpush1.xpose.msra.mxu0 0.0
      %2555 = vmatprep.subr.mxu0 0.0
      %2556 = vmatpush1.xpose.msra.mxu0 0.0
      %2557 = vmatprep.subr.mxu0 0.0
      %2558 = vmatpush1.xpose.msra.mxu0 0.0
      %2559 = vmatprep.subr.mxu0 0.0
      %2560 = vmatpush1.xpose.msra.mxu0 0.0
      %2561 = vmatprep.subr.mxu0 0.0
      %2562 = vmatpush1.xpose.msra.mxu0 0.0
      %2563 = vmatprep.subr.mxu0 0.0
      %2564 = vmatpush1.xpose.msra.mxu0 0.0
      %2565 = vmatprep.subr.mxu0 0.0
      %2566 = vmatpush1.xpose.msra.mxu0 0.0
      %2567 = vmatprep.subr.mxu0 0.0
      %2568 = vmatpush1.xpose.msra.mxu0 0.0
      %2569 = vmatprep.subr.mxu0 0.0
      %2570 = vmatpush1.xpose.msra.mxu0 0.0
      %2571 = vmatprep.subr.mxu0 0.0
      %2572 = vmatpush1.xpose.msra.mxu0 0.0
      %2573 = vmatprep.subr.mxu0 0.0
      %2574 = vmatpush1.xpose.msra.mxu0 0.0
      %2575 = vmatprep.subr.mxu0 0.0
      %2576 = vmatpush1.xpose.msra.mxu0 0.0
      %2577 = vmatprep.subr.mxu0 0.0
      %2578 = vmatpush1.xpose.msra.mxu0 0.0
      %2579 = vmatprep.subr.mxu0 0.0
      %2580 = vmatpush1.xpose.msra.mxu0 0.0
      %2581 = vmatprep.subr.mxu0 0.0
      %2582 = vmatpush1.xpose.msra.mxu0 0.0
      %2583 = vmatprep.subr.mxu0 0.0
      %2584 = vmatpush1.xpose.msra.mxu0 0.0
      %2585 = vmatprep.subr.mxu0 0.0
      %2586 = vmatpush1.xpose.msra.mxu0 0.0
      %2587 = vmatprep.subr.mxu0 0.0
      %2588 = vmatpush1.xpose.msra.mxu0 0.0
      %2589 = vmatprep.subr.mxu0 0.0
      %2590 = vmatpush1.xpose.msra.mxu0 0.0
      %2591 = vmatprep.subr.mxu0 0.0
      %2592 = vmatpush1.xpose.msra.mxu0 0.0
      %2593 = vmatprep.subr.mxu0 0.0
      %2594 = vmatpush1.xpose.msra.mxu0 0.0
      %2595 = vmatprep.mubr.f32.mxu0 0.0
      %2596 = vmatmul.mubr.f32.gmra.mrb[0].mxu0 %v2527
      %v2597 = vpop.f32.mrb[0].mxu0
      %v2598 = vadd.f32 0.0, %v2597
      %v2599 = vpop.f32.mrb[0].mxu0
      %2600 = vdwg.mxu0
      %v2601 = vmul.f32 %v2598, %v927
      %v2602 = vsel %vm929, %v2601, -inf
      %2603 = vmax.xlane.f32.xlu0 %v2602
      %v2604 = vpop.xlane.xlu0 %2603
      %v2605 = vsub.f32 %v2601, %v2604
      %v2606 = vmul.f32 %v2605, 1.442695
      %v2607 = vpow.pop %v2606
      %v2608 = vsel %vm929, %v2607, 0.0
      %2609 = vadd.xlane.f32.xlu0 %v2608
      %v2610 = vpop.xlane.xlu0 %2609
      %v2611 = vrcp.pop %v2610
      %v2612 = vmul.f32 %v2607, %v2611
      %2613 = vrot.lane.b32.xlu0 %v817, 32
      %v2614 = vpop.permute.xlu0 %2613
      %v2617 = vsel %vm929, %v2612, 0
      %2619 = vmatprep.subr.mxu0 0.0
      %2620 = vmatpush1.msra.mxu0 %v2614
      %2621 = vmatprep.subr.mxu0 0.0
      %2622 = vmatpush1.msra.mxu0 0.0
      %2623 = vmatprep.subr.mxu0 0.0
      %2624 = vmatpush1.msra.mxu0 0.0
      %2625 = vmatprep.subr.mxu0 0.0
      %2626 = vmatpush1.msra.mxu0 0.0
      %2627 = vmatprep.subr.mxu0 0.0
      %2628 = vmatpush1.msra.mxu0 0.0
      %2629 = vmatprep.subr.mxu0 0.0
      %2630 = vmatpush1.msra.mxu0 0.0
      %2631 = vmatprep.subr.mxu0 0.0
      %2632 = vmatpush1.msra.mxu0 0.0
      %2633 = vmatprep.subr.mxu0 0.0
      %2634 = vmatpush1.msra.mxu0 0.0
      %2635 = vmatprep.subr.mxu0 0.0
      %2636 = vmatpush1.msra.mxu0 0.0
      %2637 = vmatprep.subr.mxu0 0.0
      %2638 = vmatpush1.msra.mxu0 0.0
      %2639 = vmatprep.subr.mxu0 0.0
      %2640 = vmatpush1.msra.mxu0 0.0
      %2641 = vmatprep.subr.mxu0 0.0
      %2642 = vmatpush1.msra.mxu0 0.0
      %2643 = vmatprep.subr.mxu0 0.0
      %2644 = vmatpush1.msra.mxu0 0.0
      %2645 = vmatprep.subr.mxu0 0.0
      %2646 = vmatpush1.msra.mxu0 0.0
      %2647 = vmatprep.subr.mxu0 0.0
      %2648 = vmatpush1.msra.mxu0 0.0
      %2649 = vmatprep.subr.mxu0 0.0
      %2650 = vmatpush1.msra.mxu0 0.0
      %2651 = vmatprep.subr.mxu0 0.0
      %2652 = vmatpush1.msra.mxu0 0.0
      %2653 = vmatprep.subr.mxu0 0.0
      %2654 = vmatpush1.msra.mxu0 0.0
      %2655 = vmatprep.subr.mxu0 0.0
      %2656 = vmatpush1.msra.mxu0 0.0
      %2657 = vmatprep.subr.mxu0 0.0
      %2658 = vmatpush1.msra.mxu0 0.0
      %2659 = vmatprep.subr.mxu0 0.0
      %2660 = vmatpush1.msra.mxu0 0.0
      %2661 = vmatprep.subr.mxu0 0.0
      %2662 = vmatpush1.msra.mxu0 0.0
      %2663 = vmatprep.subr.mxu0 0.0
      %2664 = vmatpush1.msra.mxu0 0.0
      %2665 = vmatprep.subr.mxu0 0.0
      %2666 = vmatpush1.msra.mxu0 0.0
      %2667 = vmatprep.subr.mxu0 0.0
      %2668 = vmatpush1.msra.mxu0 0.0
      %2669 = vmatprep.subr.mxu0 0.0
      %2670 = vmatpush1.msra.mxu0 0.0
      %2671 = vmatprep.subr.mxu0 0.0
      %2672 = vmatpush1.msra.mxu0 0.0
      %2673 = vmatprep.subr.mxu0 0.0
      %2674 = vmatpush1.msra.mxu0 0.0
      %2675 = vmatprep.subr.mxu0 0.0
      %2676 = vmatpush1.msra.mxu0 0.0
      %2677 = vmatprep.subr.mxu0 0.0
      %2678 = vmatpush1.msra.mxu0 0.0
      %2679 = vmatprep.subr.mxu0 0.0
      %2680 = vmatpush1.msra.mxu0 0.0
      %2681 = vmatprep.subr.mxu0 0.0
      %2682 = vmatpush1.msra.mxu0 0.0
      %2683 = vmatprep.mubr.f32.mxu0 0.0
      %2684 = vmatmul.mubr.f32.gmra.mrb[0].mxu0 %v2617
      %v2685 = vpop.f32.mrb[0].mxu0
      %v2686 = vadd.f32 0.0, %v2685
      %v2687 = vpop.f32.mrb[0].mxu0
      %2688 = vdwg.mxu0
      %v2690 = vsel %vm505, %v2686, 0
      %2692 = vmatprep.subr.mxu0 0.0
      %2693 = vmatpush1.msra.mxu0 %v847
      %2694 = vmatprep.subr.mxu0 0.0
      %2695 = vmatpush1.msra.mxu0 %v848
      %2696 = vmatprep.subr.mxu0 0.0
      %2697 = vmatpush1.msra.mxu0 %v849
      %2698 = vmatprep.subr.mxu0 0.0
      %2699 = vmatpush1.msra.mxu0 %v850
      %2700 = vmatprep.subr.mxu0 0.0
      %2701 = vmatpush1.msra.mxu0 0.0
      %2702 = vmatprep.subr.mxu0 0.0
      %2703 = vmatpush1.msra.mxu0 0.0
      %2704 = vmatprep.subr.mxu0 0.0
      %2705 = vmatpush1.msra.mxu0 0.0
      %2706 = vmatprep.subr.mxu0 0.0
      %2707 = vmatpush1.msra.mxu0 0.0
      %2708 = vmatprep.subr.mxu0 0.0
      %2709 = vmatpush1.msra.mxu0 0.0
      %2710 = vmatprep.subr.mxu0 0.0
      %2711 = vmatpush1.msra.mxu0 0.0
      %2712 = vmatprep.subr.mxu0 0.0
      %2713 = vmatpush1.msra.mxu0 0.0
      %2714 = vmatprep.subr.mxu0 0.0
      %2715 = vmatpush1.msra.mxu0 0.0
      %2716 = vmatprep.subr.mxu0 0.0
      %2717 = vmatpush1.msra.mxu0 0.0
      %2718 = vmatprep.subr.mxu0 0.0
      %2719 = vmatpush1.msra.mxu0 0.0
      %2720 = vmatprep.subr.mxu0 0.0
      %2721 = vmatpush1.msra.mxu0 0.0
      %2722 = vmatprep.subr.mxu0 0.0
      %2723 = vmatpush1.msra.mxu0 0.0
      %2724 = vmatprep.subr.mxu0 0.0
      %2725 = vmatpush1.msra.mxu0 0.0
      %2726 = vmatprep.subr.mxu0 0.0
      %2727 = vmatpush1.msra.mxu0 0.0
      %2728 = vmatprep.subr.mxu0 0.0
      %2729 = vmatpush1.msra.mxu0 0.0
      %2730 = vmatprep.subr.mxu0 0.0
      %2731 = vmatpush1.msra.mxu0 0.0
      %2732 = vmatprep.subr.mxu0 0.0
      %2733 = vmatpush1.msra.mxu0 0.0
      %2734 = vmatprep.subr.mxu0 0.0
      %2735 = vmatpush1.msra.mxu0 0.0
      %2736 = vmatprep.subr.mxu0 0.0
      %2737 = vmatpush1.msra.mxu0 0.0
      %2738 = vmatprep.subr.mxu0 0.0
      %2739 = vmatpush1.msra.mxu0 0.0
      %2740 = vmatprep.subr.mxu0 0.0
      %2741 = vmatpush1.msra.mxu0 0.0
      %2742 = vmatprep.subr.mxu0 0.0
      %2743 = vmatpush1.msra.mxu0 0.0
      %2744 = vmatprep.subr.mxu0 0.0
      %2745 = vmatpush1.msra.mxu0 0.0
      %2746 = vmatprep.subr.mxu0 0.0
      %2747 = vmatpush1.msra.mxu0 0.0
      %2748 = vmatprep.subr.mxu0 0.0
      %2749 = vmatpush1.msra.mxu0 0.0
      %2750 = vmatprep.subr.mxu0 0.0
      %2751 = vmatpush1.msra.mxu0 0.0
      %2752 = vmatprep.subr.mxu0 0.0
      %2753 = vmatpush1.msra.mxu0 0.0
      %2754 = vmatprep.subr.mxu0 0.0
      %2755 = vmatpush1.msra.mxu0 0.0
      %2756 = vmatprep.mubr.f32.mxu0 0.0
      %2757 = vmatmul.mubr.f32.gmra.mrb[0].mxu0 %v2690
      %v2758 = vpop.f32.mrb[0].mxu0
      %v2759 = vadd.f32 0.0, %v2758
      %v2760 = vpop.f32.mrb[0].mxu0
      %2761 = vdwg.mxu0
      %v2762 = vadd.f32 %v2522, %v2759
      %v2763 = vadd.f32 %v2762, %v491
      %v2764 = vsel %vm505, %v2763, 0.0
      %2765 = vadd.xlane.f32.xlu0 %v2764
      %v2766 = vpop.xlane.xlu0 %2765
      %v2767 = vrcp.pop 32.0
      %v2768 = vmul.f32 %v2766, %v2767
      %v2769 = vsub.f32 %v2763, %v2768
      %v2770 = vmul.f32 %v2769, %v2769
      %v2771 = vsel %vm505, %v2770, 0.0
      %2772 = vadd.xlane.f32.xlu0 %v2771
      %v2773 = vpop.xlane.xlu0 %2772
      %v2774 = vmul.f32 %v2773, %v2767
      %v2775 = vadd.f32 %v2774, 1e-05
      %v2776 = vrsqrt.pop %v2775
      %v2777 = vmul.f32 %v2769, %v2776
      %v2778 = vld [vmem:[%s6] sm:$0x1]
      %v2780 = vlaneseq
      %v2781 = vshrl.u32 %v2780, 7
      %v2782 = vsub.s32 0, %v2781
      %v2783 = vrot.slane %v2778, %v2782
      %v2785 = vmul.f32 %v2777, %v2783
      %v2786 = vld [vmem:[%s7] sm:$0x1]
      %v2788 = vlaneseq
      %v2789 = vshrl.u32 %v2788, 7
      %v2790 = vsub.s32 0, %v2789
      %v2791 = vrot.slane %v2786, %v2790
      %v2793 = vadd.f32 %v2785, %v2791
      %v2794 = vld [vmem:[%s8] sm:$0xff]
      %v2795 = vld [vmem:[%s8 + $0x8] sm:$0xff]
      %v2796 = vld [vmem:[%s8 + $0x10] sm:$0xff]
      %v2797 = vld [vmem:[%s8 + $0x18] sm:$0xff]
      %v2798 = vld [vmem:[%s9] sm:$0x1]
      %v2800 = vlaneseq
      %v2801 = vshrl.u32 %v2800, 7
      %v2802 = vsub.s32 0, %v2801
      %v2803 = vrot.slane %v2798, %v2802
      %v2806 = vsel %vm505, %v2793, 0
      %2808 = vmatprep.subr.mxu0 0.0
      %2809 = vmatpush1.msra.mxu0 %v2794
      %2810 = vmatprep.subr.mxu0 0.0
      %2811 = vmatpush1.msra.mxu0 %v2795
      %2812 = vmatprep.subr.mxu0 0.0
      %2813 = vmatpush1.msra.mxu0 %v2796
      %2814 = vmatprep.subr.mxu0 0.0
      %2815 = vmatpush1.msra.mxu0 %v2797
      %2816 = vmatprep.subr.mxu0 0.0
      %2817 = vmatpush1.msra.mxu0 0.0
      %2818 = vmatprep.subr.mxu0 0.0
      %2819 = vmatpush1.msra.mxu0 0.0
      %2820 = vmatprep.subr.mxu0 0.0
      %2821 = vmatpush1.msra.mxu0 0.0
      %2822 = vmatprep.subr.mxu0 0.0
      %2823 = vmatpush1.msra.mxu0 0.0
      %2824 = vmatprep.subr.mxu0 0.0
      %2825 = vmatpush1.msra.mxu0 0.0
      %2826 = vmatprep.subr.mxu0 0.0
      %2827 = vmatpush1.msra.mxu0 0.0
      %2828 = vmatprep.subr.mxu0 0.0
      %2829 = vmatpush1.msra.mxu0 0.0
      %2830 = vmatprep.subr.mxu0 0.0
      %2831 = vmatpush1.msra.mxu0 0.0
      %2832 = vmatprep.subr.mxu0 0.0
      %2833 = vmatpush1.msra.mxu0 0.0
      %2834 = vmatprep.subr.mxu0 0.0
      %2835 = vmatpush1.msra.mxu0 0.0
      %2836 = vmatprep.subr.mxu0 0.0
      %2837 = vmatpush1.msra.mxu0 0.0
      %2838 = vmatprep.subr.mxu0 0.0
      %2839 = vmatpush1.msra.mxu0 0.0
      %2840 = vmatprep.subr.mxu0 0.0
      %2841 = vmatpush1.msra.mxu0 0.0
      %2842 = vmatprep.subr.mxu0 0.0
      %2843 = vmatpush1.msra.mxu0 0.0
      %2844 = vmatprep.subr.mxu0 0.0
      %2845 = vmatpush1.msra.mxu0 0.0
      %2846 = vmatprep.subr.mxu0 0.0
      %2847 = vmatpush1.msra.mxu0 0.0
      %2848 = vmatprep.subr.mxu0 0.0
      %2849 = vmatpush1.msra.mxu0 0.0
      %2850 = vmatprep.subr.mxu0 0.0
      %2851 = vmatpush1.msra.mxu0 0.0
      %2852 = vmatprep.subr.mxu0 0.0
      %2853 = vmatpush1.msra.mxu0 0.0
      %2854 = vmatprep.subr.mxu0 0.0
      %2855 = vmatpush1.msra.mxu0 0.0
      %2856 = vmatprep.subr.mxu0 0.0
      %2857 = vmatpush1.msra.mxu0 0.0
      %2858 = vmatprep.subr.mxu0 0.0
      %2859 = vmatpush1.msra.mxu0 0.0
      %2860 = vmatprep.subr.mxu0 0.0
      %2861 = vmatpush1.msra.mxu0 0.0
      %2862 = vmatprep.subr.mxu0 0.0
      %2863 = vmatpush1.msra.mxu0 0.0
      %2864 = vmatprep.subr.mxu0 0.0
      %2865 = vmatpush1.msra.mxu0 0.0
      %2866 = vmatprep.subr.mxu0 0.0
      %2867 = vmatpush1.msra.mxu0 0.0
      %2868 = vmatprep.subr.mxu0 0.0
      %2869 = vmatpush1.msra.mxu0 0.0
      %2870 = vmatprep.subr.mxu0 0.0
      %2871 = vmatpush1.msra.mxu0 0.0
      %2872 = vmatprep.mubr.f32.mxu0 0.0
      %2873 = vmatmul.mubr.f32.gmra.mrb[0].mxu0 %v2806
      %v2874 = vpop.f32.mrb[0].mxu0
      %v2875 = vadd.f32 %v2803, %v2874
      %v2876 = vpop.f32.mrb[0].mxu0
      %2877 = vdwg.mxu0
      %2878 = vst [vmem:[%s482] sm:$0xff] %v2875
      %2879 = vst [vmem:[%s486] sm:$0xff] %v657
      %v2880 = vlaneseq
      %v2881 = vand.u32 %v2880, 127
      %v2882 = vld [vmem:[%s478] sm:$0xff]
      %vm2883 = vcmp.lt.s32.totalorder %v2881, 5
      %v2884 = vsel %vm2883, %v657, -1e+30
      %2885 = vmax.xlane.f32.xlu0 %v2884
      %v2886 = vpop.xlane.xlu0 %2885
      %v2887 = vsub.f32 %v2884, %v2886
      %v2888 = vmul.f32 %v2887, 1.442695
      %v2889 = vpow.pop %v2888
      %2890 = vadd.xlane.f32.xlu0 %v2889
      %v2891 = vpop.xlane.xlu0 %2890
      %v2892 = vlog2.pop %v2891
      %v2893 = vmul.f32 %v2892, 0.6931472
      %v2894 = vadd.f32 %v2893, %v2886
      %vm2895 = vcmp.eq.s32.totalorder %v2881, %v2882
      %v2896 = vsel %vm2895, %v657, 0.0
      %2897 = vadd.xlane.f32.xlu0 %v2896
      %v2898 = vpop.xlane.xlu0 %2897
      %vm2899 = vcmp.ne.s32.totalorder %v2882, 4294967196
      %v2900 = vsel %vm2899, 1, 0
      %v2901 = vcvt.s32.f32 %v2900
      %v2902 = vsub.f32 %v2894, %v2898
      %v2903 = vmul.f32 %v2902, %v2901
      %v2904 = vsel %vm505, %v491, -inf
      %2905 = vmax.xlane.f32.xlu0 %v2904
      %v2906 = vpop.xlane.xlu0 %2905
      %v2907 = vsub.f32 %v491, %v2906
      %v2908 = vmul.f32 %v2907, 1.442695
      %v2909 = vpow.pop %v2908
      %v2910 = vsel %vm505, %v2909, 0.0
      %2911 = vadd.xlane.f32.xlu0 %v2910
      %v2912 = vpop.xlane.xlu0 %2911
      %v2913 = vrcp.pop %v2912
      %v2914 = vmul.f32 %v2909, %v2913
      %v2915 = vsel %vm505, %v492, -inf
      %2916 = vmax.xlane.f32.xlu0 %v2915
      %v2917 = vpop.xlane.xlu0 %2916
      %v2918 = vsub.f32 %v492, %v2917
      %v2919 = vmul.f32 %v2918, 1.442695
      %v2920 = vpow.pop %v2919
      %v2921 = vsel %vm505, %v2920, 0.0
      %2922 = vadd.xlane.f32.xlu0 %v2921
      %v2923 = vpop.xlane.xlu0 %2922
      %v2924 = vrcp.pop %v2923
      %v2925 = vmul.f32 %v2920, %v2924
      %v2926 = vsel %vm505, %v2914, -inf
      %2927 = vmax.xlane.f32.xlu0 %v2926
      %v2928 = vpop.xlane.xlu0 %2927
      %v2929 = vsub.f32 %v2914, %v2928
      %v2930 = vmul.f32 %v2929, 1.442695
      %v2931 = vpow.pop %v2930
      %v2932 = vsel %vm505, %v2931, 0.0
      %2933 = vadd.xlane.f32.xlu0 %v2932
      %v2934 = vpop.xlane.xlu0 %2933
      %v2935 = vlog2.pop %v2934
      %v2936 = vmul.f32 %v2935, 0.6931472
      %v2937 = vsub.f32 %v2929, %v2936
      %v2938 = vsel %vm505, %v2925, -inf
      %2939 = vmax.xlane.f32.xlu0 %v2938
      %v2940 = vpop.xlane.xlu0 %2939
      %v2941 = vsub.f32 %v2925, %v2940
      %v2942 = vmul.f32 %v2941, 1.442695
      %v2943 = vpow.pop %v2942
      %v2944 = vsel %vm505, %v2943, 0.0
      %2945 = vadd.xlane.f32.xlu0 %v2944
      %v2946 = vpop.xlane.xlu0 %2945
      %v2947 = vrcp.pop %v2946
      %v2948 = vmul.f32 %v2943, %v2947
      %v2949 = vlog2.pop %v2948
      %v2950 = vmul.f32 %v2949, 0.6931472
      %v2951 = vsub.f32 %v2950, %v2937
      %v2952 = vmul.f32 %v2948, %v2951
      %v2953 = vsel %vm505, %v2952, 0.0
      %2954 = vadd.xlane.f32.xlu0 %v2953
      %v2955 = vpop.xlane.xlu0 %2954
      %vm2956 = vcmp.eq.s32.totalorder %v2881, 0
      %2958 = vset.pattern.permute.xlu0 0
      %2959 = vperm.xlu0 %2958, %v2903
      %v2960 = vpop.permute.xlu0 %2959
      %v2962 = vsel %vm2956, %v2960, 0.0
      %vm2963 = vcmp.eq.s32.totalorder %v2881, 1
      %2965 = vset.pattern.permute.xlu0 0
      %2966 = vperm.xlu0 %2965, %v2901
      %v2967 = vpop.permute.xlu0 %2966
      %v2969 = vsel %vm2963, %v2967, 0.0
      %v2970 = vadd.f32 %v2962, %v2969
      %vm2971 = vcmp.eq.s32.totalorder %v2881, 2
      %v2972 = vsel %vm2971, %v2955, 0.0
      %v2973 = vadd.f32 %v2970, %v2972
      %2974 = vst [vmem:[%s490] sm:$0xff] %v2973
      %p2975 = scmp.lt.s32.totalorder %s25, 1
      %s2976 = scalar_select %p2975, %s25, 1
      %s2977 = smul.addr %s2976, 8
      %s2978 = scalar_lea.vmem %s11, %s2977
      %p2979 = scmp.lt.s32.totalorder %s25, 1
      %s2980 = scalar_select %p2979, %s25, 1
      %s2981 = smul.addr %s2980, 8
      %s2982 = scalar_lea.vmem %s12, %s2981
      %p2983 = scmp.lt.s32.totalorder %s25, 1
      %s2984 = scalar_select %p2983, %s25, 1
      %s2985 = smul.addr %s2984, 8
      %s2986 = scalar_lea.vmem %s13, %s2985
      // Predicated region
      $region65: #{dtca_forward.1} parent=63 // pred_check
        %p2987 = pneg %p289
      $region66: #{dtca_forward.1} parent=63 // pred_check_branch
        %2989 = sbr.rel (%p2987) target = $region68
      $region67: #{dtca_forward.1} parent=63 // pred_region
        _
      $region68: #{dtca_forward.1} parent=63 // pred_fallthru
        _
      // Predicated region
      $region69: #{dtca_forward.1} parent=63 // pred_check
        %p2990 = pneg %p315
      $region70: #{dtca_forward.1} parent=63 // pred_check_branch
        %2992 = sbr.rel (%p2990) target = $region72
      $region71: #{dtca_forward.1} parent=63 // pred_region
        _
      $region72: #{dtca_forward.1} parent=63 // pred_fallthru
        _
      // Predicated region
      $region73: #{dtca_forward.1} parent=63 // pred_check
        %p2993 = pneg %p341
      $region74: #{dtca_forward.1} parent=63 // pred_check_branch
        %2995 = sbr.rel (%p2993) target = $region76
      $region75: #{dtca_forward.1} parent=63 // pred_region
        _
      $region76: #{dtca_forward.1} parent=63 // pred_fallthru
        _
    $region64: #{dtca_forward.1} parent=5 // pred_fallthru
      _
    %p2996 = scmp.le.s32.totalorder 2, %s20
    // Predicated region
    $region77: #{dtca_forward.1} parent=5 // pred_check
      %p2997 = pneg %p2996
    $region78: #{dtca_forward.1} parent=5 // pred_check_branch
      %2999 = sbr.rel (%p2997) target = $region80
    $region79: #{dtca_forward.1} parent=5 // pred_region
      %s3000 = ssub.s32 %s20, 2
      // Predicated region
      $region81: #{dtca_forward.1} parent=79 // pred_check
        %p3001 = pneg %p295
      $region82: #{dtca_forward.1} parent=79 // pred_check_branch
        %3003 = sbr.rel (%p3001) target = $region84
      $region83: #{dtca_forward.1} parent=79 // pred_region
        %p3004 = scmp.lt.s32.totalorder %s26, 1
        %s3005 = scalar_select %p3004, %s26, 1
        %s3006 = smul.addr %s3005, 8
        %s3007 = scalar_lea.vmem %s11, %s3006
      $region84: #{dtca_forward.1} parent=79 // pred_fallthru
        _
      // Predicated region
      $region85: #{dtca_forward.1} parent=79 // pred_check
        %p3008 = pneg %p321
      $region86: #{dtca_forward.1} parent=79 // pred_check_branch
        %3010 = sbr.rel (%p3008) target = $region88
      $region87: #{dtca_forward.1} parent=79 // pred_region
        %p3011 = scmp.lt.s32.totalorder %s26, 1
        %s3012 = scalar_select %p3011, %s26, 1
        %s3013 = smul.addr %s3012, 8
        %s3014 = scalar_lea.vmem %s12, %s3013
      $region88: #{dtca_forward.1} parent=79 // pred_fallthru
        _
      // Predicated region
      $region89: #{dtca_forward.1} parent=79 // pred_check
        %p3015 = pneg %p347
      $region90: #{dtca_forward.1} parent=79 // pred_check_branch
        %3017 = sbr.rel (%p3015) target = $region92
      $region91: #{dtca_forward.1} parent=79 // pred_region
        %p3018 = scmp.lt.s32.totalorder %s26, 1
        %s3019 = scalar_select %p3018, %s26, 1
        %s3020 = smul.addr %s3019, 8
        %s3021 = scalar_lea.vmem %s13, %s3020
      $region92: #{dtca_forward.1} parent=79 // pred_fallthru
        _
    $region80: #{dtca_forward.1} parent=5 // pred_fallthru
      _
  $region6: #{dtca_forward.1} parent=0 // loop_footer
    %s24 = sadd.s32 1, %s20
  $region7: #{dtca_forward.1} parent=0 // loop_footer_branch
    %19 = sbr.rel target = $region3
  $region8: #{dtca_forward.1} parent=0 // loop_exit
    _

</llo_original>
